<compile_context>
chip_gen: v6e
topology: v6e:2x2x1
jax: 0.10.0
libtpu: 0.0.40
codegen_flags: <defaults>
</compile_context>

<pallas_src>
import functools

import jax
import jax.numpy as jnp
from jax import lax
from jax.experimental import pallas as pl
from jax.experimental.pallas import tpu as pltpu

ATTN_NEG_SLOPE = 0.2   # DGL GATConv leaky_relu on attention logits
ACT_NEG_SLOPE = 0.01   # F.leaky_relu default, used as GATConv activation


def _fused_mgat_kernel(h0_ref, adj_ref, *rest, layer_specs):
    """One grid step = one etype: full GAT stack + per-etype slice of the final Linear."""
    n_layers = len(layer_specs)
    param_refs = rest[:4 * n_layers]
    lin_w_ref = rest[4 * n_layers]
    out_ref = rest[4 * n_layers + 1]

    h = h0_ref[0]                                    # [N, F0]
    adj = adj_ref[0]                                 # [N, N]   adj[dst, src]
    neg = jnp.float32(-1e30)

    for li, (heads, fout, apply_act) in enumerate(layer_specs):
        w = param_refs[4 * li][0]                    # [Fin, heads*fout]
        al_t = param_refs[4 * li + 1][0]             # [heads, heads*fout]  block-diag(attn_l)^T
        ar_bd = param_refs[4 * li + 2][0]            # [heads*fout, heads]  block-diag(attn_r)
        b = param_refs[4 * li + 3][0]                # [1, heads*fout]

        z = jnp.dot(h, w, preferred_element_type=jnp.float32)          # [N, heads*fout]
        # src-side term for all heads, directly in [heads, N] (lane) orientation: MXU A@B^T.
        elt = lax.dot_general(al_t, z, (((1,), (1,)), ((), ())),
                              preferred_element_type=jnp.float32)       # [heads, N]
        # dst-side term for all heads at once (MXU).
        er = jnp.dot(z, ar_bd, preferred_element_type=jnp.float32)      # [N, heads]

        head_outs = []
        for hd in range(heads):                       # static unroll (<= 3 heads)
            e = er[:, hd:hd + 1] + elt[hd:hd + 1, :]                    # [N, N] e[dst, src]
            e = jnp.where(e >= 0, e, ATTN_NEG_SLOPE * e)                # leaky_relu(0.2)
            e = jnp.where(adj > 0, e, neg)                              # mask non-edges
            m = jnp.max(e, axis=-1, keepdims=True)
            p = jnp.exp(e - m) * adj
            denom = jnp.sum(p, axis=-1, keepdims=True)
            inv = jnp.where(denom > 0, pl.reciprocal(denom, approx=True), 0.0)
            alpha = p * inv                                             # edge softmax per dst
            zh = z[:, hd * fout:(hd + 1) * fout]                        # [N, fout]
            head_outs.append(jnp.dot(alpha, zh,
                                     preferred_element_type=jnp.float32))
        rst = head_outs[0] if heads == 1 else jnp.concatenate(head_outs, axis=-1)
        rst = rst + b                                                   # single bias broadcast
        if apply_act:
            rst = jnp.where(rst >= 0, rst, ACT_NEG_SLOPE * rst)
        h = rst                                                         # stays in VMEM/vregs

    # Per-etype partial of the final Linear: concat-over-etypes @ W == sum_e h_e @ W_e.
    out_ref[0] = jnp.dot(h, lin_w_ref[0], preferred_element_type=jnp.float32)


def _attn_block_diag(a):
    """[heads, fout] -> [heads*fout, heads] block-diagonal (column h carries attn vec h)."""
    heads, fout = a.shape
    eye = jnp.eye(heads, dtype=a.dtype)
    return (a[:, :, None] * eye[:, None, :]).reshape(heads * fout, heads)


def m_gat_forward(inputs, adjs, params, *, etypes, num_heads, gnn_dims, output_dim):
    emb0, emb1, emb2 = params["emb"]
    num_e = len(etypes)

    # Embedding lookups (gather) stay in plain JAX; stack per-etype features / graphs.
    h0_list, adj_list = [], []
    for e in etypes:
        feat = inputs[e]                              # [N, F_raw] f32
        idx0 = feat[:, 0].astype(jnp.int32)
        idx1 = feat[:, 1].astype(jnp.int32)
        idx2 = feat[:, 2].astype(jnp.int32)
        h0_list.append(jnp.concatenate(
            [emb0[idx0], emb1[idx1], emb2[idx2], feat[:, 3:]], axis=1))  # [N, gnn_dims[0]]
        adj_list.append(adjs[e])
    h0 = jnp.stack(h0_list, axis=0)                   # [E, N, F0]
    adj = jnp.stack(adj_list, axis=0)                 # [E, N, N]
    n = h0.shape[1]

    # (heads, fout, apply_activation) for every layer in the stack, output layer last.
    layer_specs = tuple((num_heads, gnn_dims[i + 1], True)
                        for i in range(len(gnn_dims) - 1)) + ((1, output_dim, False),)

    def etype_spec(shape):
        return pl.BlockSpec((1,) + tuple(shape[1:]), lambda e: (e, 0, 0))

    flat_inputs = [h0, adj]
    in_specs = [etype_spec(h0.shape), etype_spec(adj.shape)]

    for li, _ in enumerate(layer_specs):
        ws, alts, ars, bs = [], [], [], []
        for e in etypes:
            if li < len(layer_specs) - 1:
                w, al, ar, b = params["gnn"][e][li]
            else:
                w, al, ar, b = params["out"][e]
            ws.append(w)
            alts.append(_attn_block_diag(al).T)       # [heads, heads*fout]
            ars.append(_attn_block_diag(ar))          # [heads*fout, heads]
            bs.append(b)
        for arr in (jnp.stack(ws, 0), jnp.stack(alts, 0),
                    jnp.stack(ars, 0), jnp.stack(bs, 0)):
            flat_inputs.append(arr)
            in_specs.append(etype_spec(arr.shape))

    # Per-etype slice of the final Linear weight.
    lin_w = params["lin_w"]                           # [output_dim * E, output_dim]
    lin_w_s = jnp.stack([lin_w[j * output_dim:(j + 1) * output_dim, :]
                         for j in range(num_e)], axis=0)
    flat_inputs.append(lin_w_s)
    in_specs.append(etype_spec(lin_w_s.shape))

    kernel = functools.partial(_fused_mgat_kernel, layer_specs=layer_specs)
    partials = pl.pallas_call(
        kernel,
        out_shape=jax.ShapeDtypeStruct((num_e, n, output_dim), jnp.float32),
        grid=(num_e,),
        in_specs=in_specs,
        out_specs=pl.BlockSpec((1, n, output_dim), lambda e: (e, 0, 0)),
        compiler_params=pltpu.CompilerParams(dimension_semantics=("parallel",)),
    )(*flat_inputs)

    # Tiny cross-etype reduction + bias: leave to XLA (no standalone Linear pallas_call).
    return jnp.sum(partials, axis=0) + params["lin_b"]


def init_gat_params(key, fin, fout, heads):
    k1, k2, k3 = jax.random.split(key, 3)
    w = jax.random.normal(k1, (fin, heads * fout), jnp.float32) * 0.1
    al = jax.random.normal(k2, (heads, fout), jnp.float32) * 0.1
    ar = jax.random.normal(k3, (heads, fout), jnp.float32) * 0.1
    b = jnp.zeros((1, heads * fout), jnp.float32)
    return (w, al, ar, b)


if __name__ == "__main__":
    key = jax.random.PRNGKey(0)

    etypes = ["e0", "e1"]
    N = 16                       # nodes of ntype 'conn' (shared across etypes)
    F_RAW = 5                    # 3 categorical columns + 2 continuous columns
    num_heads = 3
    # after embedding: 8 + 3 + 6 + (F_RAW - 3) = 19
    gnn_dims = [19, 8, 8]
    output_dim = 6

    # ---- parameters (deterministic, synthetic) ----
    keys = jax.random.split(key, 16)
    params = {
        "emb": (
            jax.random.normal(keys[0], (14, 8), jnp.float32) * 0.1,
            jax.random.normal(keys[1], (5, 3), jnp.float32) * 0.1,
            jax.random.normal(keys[2], (10, 6), jnp.float32) * 0.1,
        ),
        "gnn": {},
        "out": {},
        "lin_w": jax.random.normal(keys[3], (output_dim * len(etypes), output_dim),
                                   jnp.float32) * 0.1,
        "lin_b": jnp.zeros((1, output_dim), jnp.float32),
    }
    kidx = 4
    for e in etypes:
        layers = []
        # first GAT layer: in = gnn_dims[0]; subsequent: in = gnn_dims[i-1]*num_heads
        layers.append(init_gat_params(keys[kidx], gnn_dims[0], gnn_dims[1], num_heads)); kidx += 1
        for i in range(2, len(gnn_dims)):
            layers.append(init_gat_params(keys[kidx],
                                          gnn_dims[i - 1] * num_heads, gnn_dims[i],
                                          num_heads)); kidx += 1
        params["gnn"][e] = layers
        params["out"][e] = init_gat_params(keys[kidx],
                                           gnn_dims[-1] * num_heads, output_dim, 1); kidx += 1

    # ---- example inputs (deterministic) ----
    inputs, adjs = {}, {}
    dkeys = jax.random.split(jax.random.PRNGKey(1), 8)
    for j, e in enumerate(etypes):
        k0, k1, k2, k3, k4 = jax.random.split(dkeys[j], 5)
        c0 = jax.random.randint(k0, (N, 1), 0, 14).astype(jnp.float32)
        c1 = jax.random.randint(k1, (N, 1), 0, 5).astype(jnp.float32)
        c2 = jax.random.randint(k2, (N, 1), 0, 10).astype(jnp.float32)
        cont = jax.random.normal(k3, (N, F_RAW - 3), jnp.float32)
        inputs[e] = jnp.concatenate([c0, c1, c2, cont], axis=1)
        adjs[e] = (jax.random.uniform(k4, (N, N)) < 0.3).astype(jnp.float32)

    out = m_gat_forward(inputs, adjs, params,
                        etypes=etypes, num_heads=num_heads,
                        gnn_dims=gnn_dims, output_dim=output_dim)
    out = jax.block_until_ready(out)
    assert out.shape == (N, output_dim)
    print("KERNEL_OK")
</pallas_src>

<mosaic_0001>
module attributes {stable_mosaic.version = 11 : i64} {
  func.func @_fused_mgat_kernel(%arg0: i32, %arg1: memref<1x16x19xf32, #tpu.memory_space<vmem>>, %arg2: memref<1x16x16xf32, #tpu.memory_space<vmem>>, %arg3: memref<1x19x24xf32, #tpu.memory_space<vmem>>, %arg4: memref<1x3x24xf32, #tpu.memory_space<vmem>>, %arg5: memref<1x24x3xf32, #tpu.memory_space<vmem>>, %arg6: memref<1x1x24xf32, #tpu.memory_space<vmem>>, %arg7: memref<1x24x24xf32, #tpu.memory_space<vmem>>, %arg8: memref<1x3x24xf32, #tpu.memory_space<vmem>>, %arg9: memref<1x24x3xf32, #tpu.memory_space<vmem>>, %arg10: memref<1x1x24xf32, #tpu.memory_space<vmem>>, %arg11: memref<1x24x6xf32, #tpu.memory_space<vmem>>, %arg12: memref<1x1x6xf32, #tpu.memory_space<vmem>>, %arg13: memref<1x6x1xf32, #tpu.memory_space<vmem>>, %arg14: memref<1x1x6xf32, #tpu.memory_space<vmem>>, %arg15: memref<1x6x6xf32, #tpu.memory_space<vmem>>, %arg16: memref<1x16x6xf32, #tpu.memory_space<vmem>>) attributes {dimension_semantics = [#tpu.dimension_semantics<parallel>], iteration_bounds = array<i64: 2>, scalar_prefetch = 0 : i64, scratch_operands = 0 : i64, tpu.core_type = #tpu.core_type<tc>, window_params = [{transform_indices = @transform_0, window_bounds = array<i64: 1, 16, 19>}, {transform_indices = @transform_1, window_bounds = array<i64: 1, 16, 16>}, {transform_indices = @transform_2, window_bounds = array<i64: 1, 19, 24>}, {transform_indices = @transform_3, window_bounds = array<i64: 1, 3, 24>}, {transform_indices = @transform_4, window_bounds = array<i64: 1, 24, 3>}, {transform_indices = @transform_5, window_bounds = array<i64: 1, 1, 24>}, {transform_indices = @transform_6, window_bounds = array<i64: 1, 24, 24>}, {transform_indices = @transform_7, window_bounds = array<i64: 1, 3, 24>}, {transform_indices = @transform_8, window_bounds = array<i64: 1, 24, 3>}, {transform_indices = @transform_9, window_bounds = array<i64: 1, 1, 24>}, {transform_indices = @transform_10, window_bounds = array<i64: 1, 24, 6>}, {transform_indices = @transform_11, window_bounds = array<i64: 1, 1, 6>}, {transform_indices = @transform_12, window_bounds = array<i64: 1, 6, 1>}, {transform_indices = @transform_13, window_bounds = array<i64: 1, 1, 6>}, {transform_indices = @transform_14, window_bounds = array<i64: 1, 6, 6>}, {transform_indices = @transform_15, window_bounds = array<i64: 1, 16, 6>}]} {
    %c0 = arith.constant 0 : index
    %c0_0 = arith.constant 0 : index
    %c0_1 = arith.constant 0 : index
    %0 = vector.load %arg1[%c0, %c0_0, %c0_1] : memref<1x16x19xf32, #tpu.memory_space<vmem>>, vector<1x16x19xf32>
    %1 = vector.shape_cast %0 : vector<1x16x19xf32> to vector<16x19xf32>
    %c0_2 = arith.constant 0 : index
    %c0_3 = arith.constant 0 : index
    %c0_4 = arith.constant 0 : index
    %2 = vector.load %arg2[%c0_2, %c0_3, %c0_4] : memref<1x16x16xf32, #tpu.memory_space<vmem>>, vector<1x16x16xf32>
    %3 = vector.shape_cast %2 : vector<1x16x16xf32> to vector<16x16xf32>
    %c0_5 = arith.constant 0 : index
    %c0_6 = arith.constant 0 : index
    %c0_7 = arith.constant 0 : index
    %4 = vector.load %arg3[%c0_5, %c0_6, %c0_7] : memref<1x19x24xf32, #tpu.memory_space<vmem>>, vector<1x19x24xf32>
    %5 = vector.shape_cast %4 : vector<1x19x24xf32> to vector<19x24xf32>
    %c0_8 = arith.constant 0 : index
    %c0_9 = arith.constant 0 : index
    %c0_10 = arith.constant 0 : index
    %6 = vector.load %arg4[%c0_8, %c0_9, %c0_10] : memref<1x3x24xf32, #tpu.memory_space<vmem>>, vector<1x3x24xf32>
    %7 = vector.shape_cast %6 : vector<1x3x24xf32> to vector<3x24xf32>
    %c0_11 = arith.constant 0 : index
    %c0_12 = arith.constant 0 : index
    %c0_13 = arith.constant 0 : index
    %8 = vector.load %arg5[%c0_11, %c0_12, %c0_13] : memref<1x24x3xf32, #tpu.memory_space<vmem>>, vector<1x24x3xf32>
    %9 = vector.shape_cast %8 : vector<1x24x3xf32> to vector<24x3xf32>
    %c0_14 = arith.constant 0 : index
    %c0_15 = arith.constant 0 : index
    %c0_16 = arith.constant 0 : index
    %10 = vector.load %arg6[%c0_14, %c0_15, %c0_16] : memref<1x1x24xf32, #tpu.memory_space<vmem>>, vector<1x1x24xf32>
    %11 = vector.shape_cast %10 : vector<1x1x24xf32> to vector<1x24xf32>
    %cst = arith.constant dense<0.000000e+00> : vector<16x24xf32>
    %12 = tpu.matmul %1, %5, %cst {dimension_numbers = #tpu.dot_dimension_numbers<[1], [0], [0], [1], [0, 0, 1, 1], [], []>} : vector<16x19xf32>, vector<19x24xf32>, vector<16x24xf32> -> vector<16x24xf32>
    %cst_17 = arith.constant dense<0.000000e+00> : vector<3x16xf32>
    %13 = tpu.matmul %7, %12, %cst_17 {dimension_numbers = #tpu.dot_dimension_numbers<[1], [1], [0], [0], [0, 0, 1, 0], [], []>} : vector<3x24xf32>, vector<16x24xf32>, vector<3x16xf32> -> vector<3x16xf32>
    %cst_18 = arith.constant dense<0.000000e+00> : vector<16x3xf32>
    %14 = tpu.matmul %12, %9, %cst_18 {dimension_numbers = #tpu.dot_dimension_numbers<[1], [0], [0], [1], [0, 0, 1, 1], [], []>} : vector<16x24xf32>, vector<24x3xf32>, vector<16x3xf32> -> vector<16x3xf32>
    %15 = vector.extract_strided_slice %14 {offsets = [0, 0], sizes = [16, 1], strides = [1, 1]} : vector<16x3xf32> to vector<16x1xf32>
    %16 = vector.extract_strided_slice %13 {offsets = [0, 0], sizes = [1, 16], strides = [1, 1]} : vector<3x16xf32> to vector<1x16xf32>
    %17 = vector.broadcast %15 : vector<16x1xf32> to vector<16x16xf32>
    %18 = vector.broadcast %16 : vector<1x16xf32> to vector<16x16xf32>
    %19 = arith.addf %17, %18 : vector<16x16xf32>
    %cst_19 = arith.constant 0.000000e+00 : f32
    %20 = vector.broadcast %cst_19 : f32 to vector<16x16xf32>
    %21 = arith.cmpf oge, %19, %20 : vector<16x16xf32>
    %cst_20 = arith.constant 2.000000e-01 : f32
    %22 = vector.broadcast %cst_20 : f32 to vector<16x16xf32>
    %23 = arith.mulf %22, %19 : vector<16x16xf32>
    %24 = arith.select %21, %19, %23 : vector<16x16xi1>, vector<16x16xf32>
    %cst_21 = arith.constant 0.000000e+00 : f32
    %25 = vector.broadcast %cst_21 : f32 to vector<16x16xf32>
    %26 = arith.cmpf ogt, %3, %25 : vector<16x16xf32>
    %cst_22 = arith.constant -1.000000e+30 : f32
    %27 = vector.broadcast %cst_22 : f32 to vector<16x16xf32>
    %28 = arith.select %26, %24, %27 : vector<16x16xi1>, vector<16x16xf32>
    %cst_23 = arith.constant dense<0xFF800000> : vector<16xf32>
    %29 = vector.multi_reduction <maximumf>, %28, %cst_23 [1] : vector<16x16xf32> to vector<16xf32>
    %30 = vector.shape_cast %29 : vector<16xf32> to vector<16x1xf32>
    %31 = vector.broadcast %30 : vector<16x1xf32> to vector<16x16xf32>
    %32 = arith.subf %28, %31 : vector<16x16xf32>
    %33 = math.exp %32 : vector<16x16xf32>
    %34 = arith.mulf %33, %3 : vector<16x16xf32>
    %cst_24 = arith.constant dense<0.000000e+00> : vector<16xf32>
    %35 = vector.multi_reduction <add>, %34, %cst_24 [1] : vector<16x16xf32> to vector<16xf32>
    %36 = vector.shape_cast %35 : vector<16xf32> to vector<16x1xf32>
    %cst_25 = arith.constant 0.000000e+00 : f32
    %37 = vector.broadcast %cst_25 : f32 to vector<16x1xf32>
    %38 = arith.cmpf ogt, %36, %37 : vector<16x1xf32>
    %39 = tpu.reciprocal %36 {approx = true} : vector<16x1xf32> -> vector<16x1xf32>
    %cst_26 = arith.constant 0.000000e+00 : f32
    %40 = vector.broadcast %cst_26 : f32 to vector<16x1xf32>
    %41 = arith.select %38, %39, %40 : vector<16x1xi1>, vector<16x1xf32>
    %42 = vector.broadcast %41 : vector<16x1xf32> to vector<16x16xf32>
    %43 = arith.mulf %34, %42 : vector<16x16xf32>
    %44 = vector.extract_strided_slice %12 {offsets = [0, 0], sizes = [16, 8], strides = [1, 1]} : vector<16x24xf32> to vector<16x8xf32>
    %cst_27 = arith.constant dense<0.000000e+00> : vector<16x8xf32>
    %45 = tpu.matmul %43, %44, %cst_27 {dimension_numbers = #tpu.dot_dimension_numbers<[1], [0], [0], [1], [0, 0, 1, 1], [], []>} : vector<16x16xf32>, vector<16x8xf32>, vector<16x8xf32> -> vector<16x8xf32>
    %46 = vector.extract_strided_slice %14 {offsets = [0, 1], sizes = [16, 1], strides = [1, 1]} : vector<16x3xf32> to vector<16x1xf32>
    %47 = vector.extract_strided_slice %13 {offsets = [1, 0], sizes = [1, 16], strides = [1, 1]} : vector<3x16xf32> to vector<1x16xf32>
    %48 = vector.broadcast %46 : vector<16x1xf32> to vector<16x16xf32>
    %49 = vector.broadcast %47 : vector<1x16xf32> to vector<16x16xf32>
    %50 = arith.addf %48, %49 : vector<16x16xf32>
    %cst_28 = arith.constant 0.000000e+00 : f32
    %51 = vector.broadcast %cst_28 : f32 to vector<16x16xf32>
    %52 = arith.cmpf oge, %50, %51 : vector<16x16xf32>
    %cst_29 = arith.constant 2.000000e-01 : f32
    %53 = vector.broadcast %cst_29 : f32 to vector<16x16xf32>
    %54 = arith.mulf %53, %50 : vector<16x16xf32>
    %55 = arith.select %52, %50, %54 : vector<16x16xi1>, vector<16x16xf32>
    %cst_30 = arith.constant 0.000000e+00 : f32
    %56 = vector.broadcast %cst_30 : f32 to vector<16x16xf32>
    %57 = arith.cmpf ogt, %3, %56 : vector<16x16xf32>
    %cst_31 = arith.constant -1.000000e+30 : f32
    %58 = vector.broadcast %cst_31 : f32 to vector<16x16xf32>
    %59 = arith.select %57, %55, %58 : vector<16x16xi1>, vector<16x16xf32>
    %cst_32 = arith.constant dense<0xFF800000> : vector<16xf32>
    %60 = vector.multi_reduction <maximumf>, %59, %cst_32 [1] : vector<16x16xf32> to vector<16xf32>
    %61 = vector.shape_cast %60 : vector<16xf32> to vector<16x1xf32>
    %62 = vector.broadcast %61 : vector<16x1xf32> to vector<16x16xf32>
    %63 = arith.subf %59, %62 : vector<16x16xf32>
    %64 = math.exp %63 : vector<16x16xf32>
    %65 = arith.mulf %64, %3 : vector<16x16xf32>
    %cst_33 = arith.constant dense<0.000000e+00> : vector<16xf32>
    %66 = vector.multi_reduction <add>, %65, %cst_33 [1] : vector<16x16xf32> to vector<16xf32>
    %67 = vector.shape_cast %66 : vector<16xf32> to vector<16x1xf32>
    %cst_34 = arith.constant 0.000000e+00 : f32
    %68 = vector.broadcast %cst_34 : f32 to vector<16x1xf32>
    %69 = arith.cmpf ogt, %67, %68 : vector<16x1xf32>
    %70 = tpu.reciprocal %67 {approx = true} : vector<16x1xf32> -> vector<16x1xf32>
    %cst_35 = arith.constant 0.000000e+00 : f32
    %71 = vector.broadcast %cst_35 : f32 to vector<16x1xf32>
    %72 = arith.select %69, %70, %71 : vector<16x1xi1>, vector<16x1xf32>
    %73 = vector.broadcast %72 : vector<16x1xf32> to vector<16x16xf32>
    %74 = arith.mulf %65, %73 : vector<16x16xf32>
    %75 = vector.extract_strided_slice %12 {offsets = [0, 8], sizes = [16, 8], strides = [1, 1]} : vector<16x24xf32> to vector<16x8xf32>
    %cst_36 = arith.constant dense<0.000000e+00> : vector<16x8xf32>
    %76 = tpu.matmul %74, %75, %cst_36 {dimension_numbers = #tpu.dot_dimension_numbers<[1], [0], [0], [1], [0, 0, 1, 1], [], []>} : vector<16x16xf32>, vector<16x8xf32>, vector<16x8xf32> -> vector<16x8xf32>
    %77 = vector.extract_strided_slice %14 {offsets = [0, 2], sizes = [16, 1], strides = [1, 1]} : vector<16x3xf32> to vector<16x1xf32>
    %78 = vector.extract_strided_slice %13 {offsets = [2, 0], sizes = [1, 16], strides = [1, 1]} : vector<3x16xf32> to vector<1x16xf32>
    %79 = vector.broadcast %77 : vector<16x1xf32> to vector<16x16xf32>
    %80 = vector.broadcast %78 : vector<1x16xf32> to vector<16x16xf32>
    %81 = arith.addf %79, %80 : vector<16x16xf32>
    %cst_37 = arith.constant 0.000000e+00 : f32
    %82 = vector.broadcast %cst_37 : f32 to vector<16x16xf32>
    %83 = arith.cmpf oge, %81, %82 : vector<16x16xf32>
    %cst_38 = arith.constant 2.000000e-01 : f32
    %84 = vector.broadcast %cst_38 : f32 to vector<16x16xf32>
    %85 = arith.mulf %84, %81 : vector<16x16xf32>
    %86 = arith.select %83, %81, %85 : vector<16x16xi1>, vector<16x16xf32>
    %cst_39 = arith.constant 0.000000e+00 : f32
    %87 = vector.broadcast %cst_39 : f32 to vector<16x16xf32>
    %88 = arith.cmpf ogt, %3, %87 : vector<16x16xf32>
    %cst_40 = arith.constant -1.000000e+30 : f32
    %89 = vector.broadcast %cst_40 : f32 to vector<16x16xf32>
    %90 = arith.select %88, %86, %89 : vector<16x16xi1>, vector<16x16xf32>
    %cst_41 = arith.constant dense<0xFF800000> : vector<16xf32>
    %91 = vector.multi_reduction <maximumf>, %90, %cst_41 [1] : vector<16x16xf32> to vector<16xf32>
    %92 = vector.shape_cast %91 : vector<16xf32> to vector<16x1xf32>
    %93 = vector.broadcast %92 : vector<16x1xf32> to vector<16x16xf32>
    %94 = arith.subf %90, %93 : vector<16x16xf32>
    %95 = math.exp %94 : vector<16x16xf32>
    %96 = arith.mulf %95, %3 : vector<16x16xf32>
    %cst_42 = arith.constant dense<0.000000e+00> : vector<16xf32>
    %97 = vector.multi_reduction <add>, %96, %cst_42 [1] : vector<16x16xf32> to vector<16xf32>
    %98 = vector.shape_cast %97 : vector<16xf32> to vector<16x1xf32>
    %cst_43 = arith.constant 0.000000e+00 : f32
    %99 = vector.broadcast %cst_43 : f32 to vector<16x1xf32>
    %100 = arith.cmpf ogt, %98, %99 : vector<16x1xf32>
    %101 = tpu.reciprocal %98 {approx = true} : vector<16x1xf32> -> vector<16x1xf32>
    %cst_44 = arith.constant 0.000000e+00 : f32
    %102 = vector.broadcast %cst_44 : f32 to vector<16x1xf32>
    %103 = arith.select %100, %101, %102 : vector<16x1xi1>, vector<16x1xf32>
    %104 = vector.broadcast %103 : vector<16x1xf32> to vector<16x16xf32>
    %105 = arith.mulf %96, %104 : vector<16x16xf32>
    %106 = vector.extract_strided_slice %12 {offsets = [0, 16], sizes = [16, 8], strides = [1, 1]} : vector<16x24xf32> to vector<16x8xf32>
    %cst_45 = arith.constant dense<0.000000e+00> : vector<16x8xf32>
    %107 = tpu.matmul %105, %106, %cst_45 {dimension_numbers = #tpu.dot_dimension_numbers<[1], [0], [0], [1], [0, 0, 1, 1], [], []>} : vector<16x16xf32>, vector<16x8xf32>, vector<16x8xf32> -> vector<16x8xf32>
    %108 = tpu.concatenate %45, %76, %107 in 1 : vector<16x8xf32>, vector<16x8xf32>, vector<16x8xf32> -> vector<16x24xf32>
    %109 = vector.broadcast %11 : vector<1x24xf32> to vector<16x24xf32>
    %110 = arith.addf %108, %109 : vector<16x24xf32>
    %cst_46 = arith.constant 0.000000e+00 : f32
    %111 = vector.broadcast %cst_46 : f32 to vector<16x24xf32>
    %112 = arith.cmpf oge, %110, %111 : vector<16x24xf32>
    %cst_47 = arith.constant 0.00999999977 : f32
    %113 = vector.broadcast %cst_47 : f32 to vector<16x24xf32>
    %114 = arith.mulf %113, %110 : vector<16x24xf32>
    %115 = arith.select %112, %110, %114 : vector<16x24xi1>, vector<16x24xf32>
    %c0_48 = arith.constant 0 : index
    %c0_49 = arith.constant 0 : index
    %c0_50 = arith.constant 0 : index
    %116 = vector.load %arg7[%c0_48, %c0_49, %c0_50] : memref<1x24x24xf32, #tpu.memory_space<vmem>>, vector<1x24x24xf32>
    %117 = vector.shape_cast %116 : vector<1x24x24xf32> to vector<24x24xf32>
    %c0_51 = arith.constant 0 : index
    %c0_52 = arith.constant 0 : index
    %c0_53 = arith.constant 0 : index
    %118 = vector.load %arg8[%c0_51, %c0_52, %c0_53] : memref<1x3x24xf32, #tpu.memory_space<vmem>>, vector<1x3x24xf32>
    %119 = vector.shape_cast %118 : vector<1x3x24xf32> to vector<3x24xf32>
    %c0_54 = arith.constant 0 : index
    %c0_55 = arith.constant 0 : index
    %c0_56 = arith.constant 0 : index
    %120 = vector.load %arg9[%c0_54, %c0_55, %c0_56] : memref<1x24x3xf32, #tpu.memory_space<vmem>>, vector<1x24x3xf32>
    %121 = vector.shape_cast %120 : vector<1x24x3xf32> to vector<24x3xf32>
    %c0_57 = arith.constant 0 : index
    %c0_58 = arith.constant 0 : index
    %c0_59 = arith.constant 0 : index
    %122 = vector.load %arg10[%c0_57, %c0_58, %c0_59] : memref<1x1x24xf32, #tpu.memory_space<vmem>>, vector<1x1x24xf32>
    %123 = vector.shape_cast %122 : vector<1x1x24xf32> to vector<1x24xf32>
    %cst_60 = arith.constant dense<0.000000e+00> : vector<16x24xf32>
    %124 = tpu.matmul %115, %117, %cst_60 {dimension_numbers = #tpu.dot_dimension_numbers<[1], [0], [0], [1], [0, 0, 1, 1], [], []>} : vector<16x24xf32>, vector<24x24xf32>, vector<16x24xf32> -> vector<16x24xf32>
    %cst_61 = arith.constant dense<0.000000e+00> : vector<3x16xf32>
    %125 = tpu.matmul %119, %124, %cst_61 {dimension_numbers = #tpu.dot_dimension_numbers<[1], [1], [0], [0], [0, 0, 1, 0], [], []>} : vector<3x24xf32>, vector<16x24xf32>, vector<3x16xf32> -> vector<3x16xf32>
    %cst_62 = arith.constant dense<0.000000e+00> : vector<16x3xf32>
    %126 = tpu.matmul %124, %121, %cst_62 {dimension_numbers = #tpu.dot_dimension_numbers<[1], [0], [0], [1], [0, 0, 1, 1], [], []>} : vector<16x24xf32>, vector<24x3xf32>, vector<16x3xf32> -> vector<16x3xf32>
    %127 = vector.extract_strided_slice %126 {offsets = [0, 0], sizes = [16, 1], strides = [1, 1]} : vector<16x3xf32> to vector<16x1xf32>
    %128 = vector.extract_strided_slice %125 {offsets = [0, 0], sizes = [1, 16], strides = [1, 1]} : vector<3x16xf32> to vector<1x16xf32>
    %129 = vector.broadcast %127 : vector<16x1xf32> to vector<16x16xf32>
    %130 = vector.broadcast %128 : vector<1x16xf32> to vector<16x16xf32>
    %131 = arith.addf %129, %130 : vector<16x16xf32>
    %cst_63 = arith.constant 0.000000e+00 : f32
    %132 = vector.broadcast %cst_63 : f32 to vector<16x16xf32>
    %133 = arith.cmpf oge, %131, %132 : vector<16x16xf32>
    %cst_64 = arith.constant 2.000000e-01 : f32
    %134 = vector.broadcast %cst_64 : f32 to vector<16x16xf32>
    %135 = arith.mulf %134, %131 : vector<16x16xf32>
    %136 = arith.select %133, %131, %135 : vector<16x16xi1>, vector<16x16xf32>
    %cst_65 = arith.constant 0.000000e+00 : f32
    %137 = vector.broadcast %cst_65 : f32 to vector<16x16xf32>
    %138 = arith.cmpf ogt, %3, %137 : vector<16x16xf32>
    %cst_66 = arith.constant -1.000000e+30 : f32
    %139 = vector.broadcast %cst_66 : f32 to vector<16x16xf32>
    %140 = arith.select %138, %136, %139 : vector<16x16xi1>, vector<16x16xf32>
    %cst_67 = arith.constant dense<0xFF800000> : vector<16xf32>
    %141 = vector.multi_reduction <maximumf>, %140, %cst_67 [1] : vector<16x16xf32> to vector<16xf32>
    %142 = vector.shape_cast %141 : vector<16xf32> to vector<16x1xf32>
    %143 = vector.broadcast %142 : vector<16x1xf32> to vector<16x16xf32>
    %144 = arith.subf %140, %143 : vector<16x16xf32>
    %145 = math.exp %144 : vector<16x16xf32>
    %146 = arith.mulf %145, %3 : vector<16x16xf32>
    %cst_68 = arith.constant dense<0.000000e+00> : vector<16xf32>
    %147 = vector.multi_reduction <add>, %146, %cst_68 [1] : vector<16x16xf32> to vector<16xf32>
    %148 = vector.shape_cast %147 : vector<16xf32> to vector<16x1xf32>
    %cst_69 = arith.constant 0.000000e+00 : f32
    %149 = vector.broadcast %cst_69 : f32 to vector<16x1xf32>
    %150 = arith.cmpf ogt, %148, %149 : vector<16x1xf32>
    %151 = tpu.reciprocal %148 {approx = true} : vector<16x1xf32> -> vector<16x1xf32>
    %cst_70 = arith.constant 0.000000e+00 : f32
    %152 = vector.broadcast %cst_70 : f32 to vector<16x1xf32>
    %153 = arith.select %150, %151, %152 : vector<16x1xi1>, vector<16x1xf32>
    %154 = vector.broadcast %153 : vector<16x1xf32> to vector<16x16xf32>
    %155 = arith.mulf %146, %154 : vector<16x16xf32>
    %156 = vector.extract_strided_slice %124 {offsets = [0, 0], sizes = [16, 8], strides = [1, 1]} : vector<16x24xf32> to vector<16x8xf32>
    %cst_71 = arith.constant dense<0.000000e+00> : vector<16x8xf32>
    %157 = tpu.matmul %155, %156, %cst_71 {dimension_numbers = #tpu.dot_dimension_numbers<[1], [0], [0], [1], [0, 0, 1, 1], [], []>} : vector<16x16xf32>, vector<16x8xf32>, vector<16x8xf32> -> vector<16x8xf32>
    %158 = vector.extract_strided_slice %126 {offsets = [0, 1], sizes = [16, 1], strides = [1, 1]} : vector<16x3xf32> to vector<16x1xf32>
    %159 = vector.extract_strided_slice %125 {offsets = [1, 0], sizes = [1, 16], strides = [1, 1]} : vector<3x16xf32> to vector<1x16xf32>
    %160 = vector.broadcast %158 : vector<16x1xf32> to vector<16x16xf32>
    %161 = vector.broadcast %159 : vector<1x16xf32> to vector<16x16xf32>
    %162 = arith.addf %160, %161 : vector<16x16xf32>
    %cst_72 = arith.constant 0.000000e+00 : f32
    %163 = vector.broadcast %cst_72 : f32 to vector<16x16xf32>
    %164 = arith.cmpf oge, %162, %163 : vector<16x16xf32>
    %cst_73 = arith.constant 2.000000e-01 : f32
    %165 = vector.broadcast %cst_73 : f32 to vector<16x16xf32>
    %166 = arith.mulf %165, %162 : vector<16x16xf32>
    %167 = arith.select %164, %162, %166 : vector<16x16xi1>, vector<16x16xf32>
    %cst_74 = arith.constant 0.000000e+00 : f32
    %168 = vector.broadcast %cst_74 : f32 to vector<16x16xf32>
    %169 = arith.cmpf ogt, %3, %168 : vector<16x16xf32>
    %cst_75 = arith.constant -1.000000e+30 : f32
    %170 = vector.broadcast %cst_75 : f32 to vector<16x16xf32>
    %171 = arith.select %169, %167, %170 : vector<16x16xi1>, vector<16x16xf32>
    %cst_76 = arith.constant dense<0xFF800000> : vector<16xf32>
    %172 = vector.multi_reduction <maximumf>, %171, %cst_76 [1] : vector<16x16xf32> to vector<16xf32>
    %173 = vector.shape_cast %172 : vector<16xf32> to vector<16x1xf32>
    %174 = vector.broadcast %173 : vector<16x1xf32> to vector<16x16xf32>
    %175 = arith.subf %171, %174 : vector<16x16xf32>
    %176 = math.exp %175 : vector<16x16xf32>
    %177 = arith.mulf %176, %3 : vector<16x16xf32>
    %cst_77 = arith.constant dense<0.000000e+00> : vector<16xf32>
    %178 = vector.multi_reduction <add>, %177, %cst_77 [1] : vector<16x16xf32> to vector<16xf32>
    %179 = vector.shape_cast %178 : vector<16xf32> to vector<16x1xf32>
    %cst_78 = arith.constant 0.000000e+00 : f32
    %180 = vector.broadcast %cst_78 : f32 to vector<16x1xf32>
    %181 = arith.cmpf ogt, %179, %180 : vector<16x1xf32>
    %182 = tpu.reciprocal %179 {approx = true} : vector<16x1xf32> -> vector<16x1xf32>
    %cst_79 = arith.constant 0.000000e+00 : f32
    %183 = vector.broadcast %cst_79 : f32 to vector<16x1xf32>
    %184 = arith.select %181, %182, %183 : vector<16x1xi1>, vector<16x1xf32>
    %185 = vector.broadcast %184 : vector<16x1xf32> to vector<16x16xf32>
    %186 = arith.mulf %177, %185 : vector<16x16xf32>
    %187 = vector.extract_strided_slice %124 {offsets = [0, 8], sizes = [16, 8], strides = [1, 1]} : vector<16x24xf32> to vector<16x8xf32>
    %cst_80 = arith.constant dense<0.000000e+00> : vector<16x8xf32>
    %188 = tpu.matmul %186, %187, %cst_80 {dimension_numbers = #tpu.dot_dimension_numbers<[1], [0], [0], [1], [0, 0, 1, 1], [], []>} : vector<16x16xf32>, vector<16x8xf32>, vector<16x8xf32> -> vector<16x8xf32>
    %189 = vector.extract_strided_slice %126 {offsets = [0, 2], sizes = [16, 1], strides = [1, 1]} : vector<16x3xf32> to vector<16x1xf32>
    %190 = vector.extract_strided_slice %125 {offsets = [2, 0], sizes = [1, 16], strides = [1, 1]} : vector<3x16xf32> to vector<1x16xf32>
    %191 = vector.broadcast %189 : vector<16x1xf32> to vector<16x16xf32>
    %192 = vector.broadcast %190 : vector<1x16xf32> to vector<16x16xf32>
    %193 = arith.addf %191, %192 : vector<16x16xf32>
    %cst_81 = arith.constant 0.000000e+00 : f32
    %194 = vector.broadcast %cst_81 : f32 to vector<16x16xf32>
    %195 = arith.cmpf oge, %193, %194 : vector<16x16xf32>
    %cst_82 = arith.constant 2.000000e-01 : f32
    %196 = vector.broadcast %cst_82 : f32 to vector<16x16xf32>
    %197 = arith.mulf %196, %193 : vector<16x16xf32>
    %198 = arith.select %195, %193, %197 : vector<16x16xi1>, vector<16x16xf32>
    %cst_83 = arith.constant 0.000000e+00 : f32
    %199 = vector.broadcast %cst_83 : f32 to vector<16x16xf32>
    %200 = arith.cmpf ogt, %3, %199 : vector<16x16xf32>
    %cst_84 = arith.constant -1.000000e+30 : f32
    %201 = vector.broadcast %cst_84 : f32 to vector<16x16xf32>
    %202 = arith.select %200, %198, %201 : vector<16x16xi1>, vector<16x16xf32>
    %cst_85 = arith.constant dense<0xFF800000> : vector<16xf32>
    %203 = vector.multi_reduction <maximumf>, %202, %cst_85 [1] : vector<16x16xf32> to vector<16xf32>
    %204 = vector.shape_cast %203 : vector<16xf32> to vector<16x1xf32>
    %205 = vector.broadcast %204 : vector<16x1xf32> to vector<16x16xf32>
    %206 = arith.subf %202, %205 : vector<16x16xf32>
    %207 = math.exp %206 : vector<16x16xf32>
    %208 = arith.mulf %207, %3 : vector<16x16xf32>
    %cst_86 = arith.constant dense<0.000000e+00> : vector<16xf32>
    %209 = vector.multi_reduction <add>, %208, %cst_86 [1] : vector<16x16xf32> to vector<16xf32>
    %210 = vector.shape_cast %209 : vector<16xf32> to vector<16x1xf32>
    %cst_87 = arith.constant 0.000000e+00 : f32
    %211 = vector.broadcast %cst_87 : f32 to vector<16x1xf32>
    %212 = arith.cmpf ogt, %210, %211 : vector<16x1xf32>
    %213 = tpu.reciprocal %210 {approx = true} : vector<16x1xf32> -> vector<16x1xf32>
    %cst_88 = arith.constant 0.000000e+00 : f32
    %214 = vector.broadcast %cst_88 : f32 to vector<16x1xf32>
    %215 = arith.select %212, %213, %214 : vector<16x1xi1>, vector<16x1xf32>
    %216 = vector.broadcast %215 : vector<16x1xf32> to vector<16x16xf32>
    %217 = arith.mulf %208, %216 : vector<16x16xf32>
    %218 = vector.extract_strided_slice %124 {offsets = [0, 16], sizes = [16, 8], strides = [1, 1]} : vector<16x24xf32> to vector<16x8xf32>
    %cst_89 = arith.constant dense<0.000000e+00> : vector<16x8xf32>
    %219 = tpu.matmul %217, %218, %cst_89 {dimension_numbers = #tpu.dot_dimension_numbers<[1], [0], [0], [1], [0, 0, 1, 1], [], []>} : vector<16x16xf32>, vector<16x8xf32>, vector<16x8xf32> -> vector<16x8xf32>
    %220 = tpu.concatenate %157, %188, %219 in 1 : vector<16x8xf32>, vector<16x8xf32>, vector<16x8xf32> -> vector<16x24xf32>
    %221 = vector.broadcast %123 : vector<1x24xf32> to vector<16x24xf32>
    %222 = arith.addf %220, %221 : vector<16x24xf32>
    %cst_90 = arith.constant 0.000000e+00 : f32
    %223 = vector.broadcast %cst_90 : f32 to vector<16x24xf32>
    %224 = arith.cmpf oge, %222, %223 : vector<16x24xf32>
    %cst_91 = arith.constant 0.00999999977 : f32
    %225 = vector.broadcast %cst_91 : f32 to vector<16x24xf32>
    %226 = arith.mulf %225, %222 : vector<16x24xf32>
    %227 = arith.select %224, %222, %226 : vector<16x24xi1>, vector<16x24xf32>
    %c0_92 = arith.constant 0 : index
    %c0_93 = arith.constant 0 : index
    %c0_94 = arith.constant 0 : index
    %228 = vector.load %arg11[%c0_92, %c0_93, %c0_94] : memref<1x24x6xf32, #tpu.memory_space<vmem>>, vector<1x24x6xf32>
    %229 = vector.shape_cast %228 : vector<1x24x6xf32> to vector<24x6xf32>
    %c0_95 = arith.constant 0 : index
    %c0_96 = arith.constant 0 : index
    %c0_97 = arith.constant 0 : index
    %230 = vector.load %arg12[%c0_95, %c0_96, %c0_97] : memref<1x1x6xf32, #tpu.memory_space<vmem>>, vector<1x1x6xf32>
    %231 = vector.shape_cast %230 : vector<1x1x6xf32> to vector<1x6xf32>
    %c0_98 = arith.constant 0 : index
    %c0_99 = arith.constant 0 : index
    %c0_100 = arith.constant 0 : index
    %232 = vector.load %arg13[%c0_98, %c0_99, %c0_100] : memref<1x6x1xf32, #tpu.memory_space<vmem>>, vector<1x6x1xf32>
    %233 = vector.shape_cast %232 : vector<1x6x1xf32> to vector<6x1xf32>
    %c0_101 = arith.constant 0 : index
    %c0_102 = arith.constant 0 : index
    %c0_103 = arith.constant 0 : index
    %234 = vector.load %arg14[%c0_101, %c0_102, %c0_103] : memref<1x1x6xf32, #tpu.memory_space<vmem>>, vector<1x1x6xf32>
    %235 = vector.shape_cast %234 : vector<1x1x6xf32> to vector<1x6xf32>
    %cst_104 = arith.constant dense<0.000000e+00> : vector<16x6xf32>
    %236 = tpu.matmul %227, %229, %cst_104 {dimension_numbers = #tpu.dot_dimension_numbers<[1], [0], [0], [1], [0, 0, 1, 1], [], []>} : vector<16x24xf32>, vector<24x6xf32>, vector<16x6xf32> -> vector<16x6xf32>
    %cst_105 = arith.constant dense<0.000000e+00> : vector<1x16xf32>
    %237 = tpu.matmul %231, %236, %cst_105 {dimension_numbers = #tpu.dot_dimension_numbers<[1], [1], [0], [0], [0, 0, 1, 0], [], []>} : vector<1x6xf32>, vector<16x6xf32>, vector<1x16xf32> -> vector<1x16xf32>
    %cst_106 = arith.constant dense<0.000000e+00> : vector<16x1xf32>
    %238 = tpu.matmul %236, %233, %cst_106 {dimension_numbers = #tpu.dot_dimension_numbers<[1], [0], [0], [1], [0, 0, 1, 1], [], []>} : vector<16x6xf32>, vector<6x1xf32>, vector<16x1xf32> -> vector<16x1xf32>
    %239 = vector.broadcast %238 : vector<16x1xf32> to vector<16x16xf32>
    %240 = vector.broadcast %237 : vector<1x16xf32> to vector<16x16xf32>
    %241 = arith.addf %239, %240 : vector<16x16xf32>
    %cst_107 = arith.constant 0.000000e+00 : f32
    %242 = vector.broadcast %cst_107 : f32 to vector<16x16xf32>
    %243 = arith.cmpf oge, %241, %242 : vector<16x16xf32>
    %cst_108 = arith.constant 2.000000e-01 : f32
    %244 = vector.broadcast %cst_108 : f32 to vector<16x16xf32>
    %245 = arith.mulf %244, %241 : vector<16x16xf32>
    %246 = arith.select %243, %241, %245 : vector<16x16xi1>, vector<16x16xf32>
    %cst_109 = arith.constant 0.000000e+00 : f32
    %247 = vector.broadcast %cst_109 : f32 to vector<16x16xf32>
    %248 = arith.cmpf ogt, %3, %247 : vector<16x16xf32>
    %cst_110 = arith.constant -1.000000e+30 : f32
    %249 = vector.broadcast %cst_110 : f32 to vector<16x16xf32>
    %250 = arith.select %248, %246, %249 : vector<16x16xi1>, vector<16x16xf32>
    %cst_111 = arith.constant dense<0xFF800000> : vector<16xf32>
    %251 = vector.multi_reduction <maximumf>, %250, %cst_111 [1] : vector<16x16xf32> to vector<16xf32>
    %252 = vector.shape_cast %251 : vector<16xf32> to vector<16x1xf32>
    %253 = vector.broadcast %252 : vector<16x1xf32> to vector<16x16xf32>
    %254 = arith.subf %250, %253 : vector<16x16xf32>
    %255 = math.exp %254 : vector<16x16xf32>
    %256 = arith.mulf %255, %3 : vector<16x16xf32>
    %cst_112 = arith.constant dense<0.000000e+00> : vector<16xf32>
    %257 = vector.multi_reduction <add>, %256, %cst_112 [1] : vector<16x16xf32> to vector<16xf32>
    %258 = vector.shape_cast %257 : vector<16xf32> to vector<16x1xf32>
    %cst_113 = arith.constant 0.000000e+00 : f32
    %259 = vector.broadcast %cst_113 : f32 to vector<16x1xf32>
    %260 = arith.cmpf ogt, %258, %259 : vector<16x1xf32>
    %261 = tpu.reciprocal %258 {approx = true} : vector<16x1xf32> -> vector<16x1xf32>
    %cst_114 = arith.constant 0.000000e+00 : f32
    %262 = vector.broadcast %cst_114 : f32 to vector<16x1xf32>
    %263 = arith.select %260, %261, %262 : vector<16x1xi1>, vector<16x1xf32>
    %264 = vector.broadcast %263 : vector<16x1xf32> to vector<16x16xf32>
    %265 = arith.mulf %256, %264 : vector<16x16xf32>
    %cst_115 = arith.constant dense<0.000000e+00> : vector<16x6xf32>
    %266 = tpu.matmul %265, %236, %cst_115 {dimension_numbers = #tpu.dot_dimension_numbers<[1], [0], [0], [1], [0, 0, 1, 1], [], []>} : vector<16x16xf32>, vector<16x6xf32>, vector<16x6xf32> -> vector<16x6xf32>
    %267 = vector.broadcast %235 : vector<1x6xf32> to vector<16x6xf32>
    %268 = arith.addf %266, %267 : vector<16x6xf32>
    %c0_116 = arith.constant 0 : index
    %c0_117 = arith.constant 0 : index
    %c0_118 = arith.constant 0 : index
    %269 = vector.load %arg15[%c0_116, %c0_117, %c0_118] : memref<1x6x6xf32, #tpu.memory_space<vmem>>, vector<1x6x6xf32>
    %270 = vector.shape_cast %269 : vector<1x6x6xf32> to vector<6x6xf32>
    %cst_119 = arith.constant dense<0.000000e+00> : vector<16x6xf32>
    %271 = tpu.matmul %268, %270, %cst_119 {dimension_numbers = #tpu.dot_dimension_numbers<[1], [0], [0], [1], [0, 0, 1, 1], [], []>} : vector<16x6xf32>, vector<6x6xf32>, vector<16x6xf32> -> vector<16x6xf32>
    %c0_120 = arith.constant 0 : index
    %c0_121 = arith.constant 0 : index
    %c0_122 = arith.constant 0 : index
    %272 = vector.load %arg16[%c0_120, %c0_121, %c0_122] : memref<1x16x6xf32, #tpu.memory_space<vmem>>, vector<1x16x6xf32>
    %273 = vector.shape_cast %272 : vector<1x16x6xf32> to vector<16x6xf32>
    %274 = vector.shape_cast %271 : vector<16x6xf32> to vector<1x16x6xf32>
    tpu.vector_store %arg16[%c0_120, %c0_121, %c0_122], %274 {strides = array<i32>} : memref<1x16x6xf32, #tpu.memory_space<vmem>>, vector<1x16x6xf32>,
    return
  }
  func.func @transform_0(%arg0: i32) -> (i32, i32, i32) {
    %c0_i32 = arith.constant 0 : i32
    %c0_i32_0 = arith.constant 0 : i32
    %c0_i32_1 = arith.constant 0 : i32
    return %arg0, %c0_i32, %c0_i32_0 : i32, i32, i32
  }
  func.func @transform_1(%arg0: i32) -> (i32, i32, i32) {
    %c0_i32 = arith.constant 0 : i32
    %c0_i32_0 = arith.constant 0 : i32
    %c0_i32_1 = arith.constant 0 : i32
    return %arg0, %c0_i32, %c0_i32_0 : i32, i32, i32
  }
  func.func @transform_2(%arg0: i32) -> (i32, i32, i32) {
    %c0_i32 = arith.constant 0 : i32
    %c0_i32_0 = arith.constant 0 : i32
    %c0_i32_1 = arith.constant 0 : i32
    return %arg0, %c0_i32, %c0_i32_0 : i32, i32, i32
  }
  func.func @transform_3(%arg0: i32) -> (i32, i32, i32) {
    %c0_i32 = arith.constant 0 : i32
    %c0_i32_0 = arith.constant 0 : i32
    %c0_i32_1 = arith.constant 0 : i32
    return %arg0, %c0_i32, %c0_i32_0 : i32, i32, i32
  }
  func.func @transform_4(%arg0: i32) -> (i32, i32, i32) {
    %c0_i32 = arith.constant 0 : i32
    %c0_i32_0 = arith.constant 0 : i32
    %c0_i32_1 = arith.constant 0 : i32
    return %arg0, %c0_i32, %c0_i32_0 : i32, i32, i32
  }
  func.func @transform_5(%arg0: i32) -> (i32, i32, i32) {
    %c0_i32 = arith.constant 0 : i32
    %c0_i32_0 = arith.constant 0 : i32
    %c0_i32_1 = arith.constant 0 : i32
    return %arg0, %c0_i32, %c0_i32_0 : i32, i32, i32
  }
  func.func @transform_6(%arg0: i32) -> (i32, i32, i32) {
    %c0_i32 = arith.constant 0 : i32
    %c0_i32_0 = arith.constant 0 : i32
    %c0_i32_1 = arith.constant 0 : i32
    return %arg0, %c0_i32, %c0_i32_0 : i32, i32, i32
  }
  func.func @transform_7(%arg0: i32) -> (i32, i32, i32) {
    %c0_i32 = arith.constant 0 : i32
    %c0_i32_0 = arith.constant 0 : i32
    %c0_i32_1 = arith.constant 0 : i32
    return %arg0, %c0_i32, %c0_i32_0 : i32, i32, i32
  }
  func.func @transform_8(%arg0: i32) -> (i32, i32, i32) {
    %c0_i32 = arith.constant 0 : i32
    %c0_i32_0 = arith.constant 0 : i32
    %c0_i32_1 = arith.constant 0 : i32
    return %arg0, %c0_i32, %c0_i32_0 : i32, i32, i32
  }
  func.func @transform_9(%arg0: i32) -> (i32, i32, i32) {
    %c0_i32 = arith.constant 0 : i32
    %c0_i32_0 = arith.constant 0 : i32
    %c0_i32_1 = arith.constant 0 : i32
    return %arg0, %c0_i32, %c0_i32_0 : i32, i32, i32
  }
  func.func @transform_10(%arg0: i32) -> (i32, i32, i32) {
    %c0_i32 = arith.constant 0 : i32
    %c0_i32_0 = arith.constant 0 : i32
    %c0_i32_1 = arith.constant 0 : i32
    return %arg0, %c0_i32, %c0_i32_0 : i32, i32, i32
  }
  func.func @transform_11(%arg0: i32) -> (i32, i32, i32) {
    %c0_i32 = arith.constant 0 : i32
    %c0_i32_0 = arith.constant 0 : i32
    %c0_i32_1 = arith.constant 0 : i32
    return %arg0, %c0_i32, %c0_i32_0 : i32, i32, i32
  }
  func.func @transform_12(%arg0: i32) -> (i32, i32, i32) {
    %c0_i32 = arith.constant 0 : i32
    %c0_i32_0 = arith.constant 0 : i32
    %c0_i32_1 = arith.constant 0 : i32
    return %arg0, %c0_i32, %c0_i32_0 : i32, i32, i32
  }
  func.func @transform_13(%arg0: i32) -> (i32, i32, i32) {
    %c0_i32 = arith.constant 0 : i32
    %c0_i32_0 = arith.constant 0 : i32
    %c0_i32_1 = arith.constant 0 : i32
    return %arg0, %c0_i32, %c0_i32_0 : i32, i32, i32
  }
  func.func @transform_14(%arg0: i32) -> (i32, i32, i32) {
    %c0_i32 = arith.constant 0 : i32
    %c0_i32_0 = arith.constant 0 : i32
    %c0_i32_1 = arith.constant 0 : i32
    return %arg0, %c0_i32, %c0_i32_0 : i32, i32, i32
  }
  func.func @transform_15(%arg0: i32) -> (i32, i32, i32) {
    %c0_i32 = arith.constant 0 : i32
    %c0_i32_0 = arith.constant 0 : i32
    %c0_i32_1 = arith.constant 0 : i32
    return %arg0, %c0_i32, %c0_i32_0 : i32, i32, i32
  }
}

</mosaic_0001>

<llo_original>
// kernel: tpu_custom_call.1
$region0: #{tpu_custom_call.1}
  #allocation0 [shape = 'u32[]', space=smem, size = 0x4, offset = 0x4, fixed_abs, tag = 'smem constant byte address 0x4 - core index']
  #allocation1 [shape = 'u32[144,128]{1,0:T(1,128)}', space=vmem, size = 0x12000, scoped, tag = 'internal scratch']
  %s0 = inlined_call_operand.vmem [shape: f32[2,16,19], index: 0, kind: input, shape index: {}]
  %s1 = inlined_call_operand.vmem [shape: f32[2,16,16], index: 1, kind: input, shape index: {}]
  %s2 = inlined_call_operand.vmem [shape: f32[2,19,24], index: 2, kind: input, shape index: {}]
  %s3 = inlined_call_operand.vmem [shape: f32[2,3,24], index: 3, kind: input, shape index: {}]
  %s4 = inlined_call_operand.vmem [shape: f32[2,24,3], index: 4, kind: input, shape index: {}]
  %s5 = inlined_call_operand.vmem [shape: f32[2,1,24], index: 5, kind: input, shape index: {}]
  %s6 = inlined_call_operand.vmem [shape: f32[2,24,24], index: 6, kind: input, shape index: {}]
  %s7 = inlined_call_operand.vmem [shape: f32[2,3,24], index: 7, kind: input, shape index: {}]
  %s8 = inlined_call_operand.vmem [shape: f32[2,24,3], index: 8, kind: input, shape index: {}]
  %s9 = inlined_call_operand.vmem [shape: f32[2,1,24], index: 9, kind: input, shape index: {}]
  %s10 = inlined_call_operand.vmem [shape: f32[2,24,6], index: 10, kind: input, shape index: {}]
  %s11 = inlined_call_operand.vmem [shape: f32[2,1,6], index: 11, kind: input, shape index: {}]
  %s12 = inlined_call_operand.vmem [shape: f32[2,6,1], index: 12, kind: input, shape index: {}]
  %s13 = inlined_call_operand.vmem [shape: f32[2,1,6], index: 13, kind: input, shape index: {}]
  %s14 = inlined_call_operand.vmem [shape: f32[2,6,6], index: 14, kind: input, shape index: {}]
  %s15 = inlined_call_operand.vmem [shape: f32[2,16,6], index: 15, kind: output, shape index: {}]
  %s16 = sld [smem:[#allocation0]]
  $region93: #{tpu_custom_call.1} parent=0
    _
  %s18 = ssub.s32 1, %s16
  %s19 = scalar_select 0, %s18, %s16
  loop: start=0, step=1, limit=4
  $region2: #{tpu_custom_call.1} parent=0 // loop_pre_header
    _
  $region3: #{tpu_custom_call.1} parent=0 // loop_header
    %s21 = sphi 0, %s25
    %p22 = scmp.ge.s32.totalorder %s21, 4
    %s31 = sphi 0, %s33
    %s34 = sphi 0, %s31
    %s35 = sphi 0, %s34
    %s51 = sphi 0, %s35
    %s57 = sphi 0, %s59
    %s60 = sphi 0, %s57
    %s61 = sphi 0, %s60
    %s77 = sphi 0, %s61
    %s83 = sphi 0, %s85
    %s86 = sphi 0, %s83
    %s87 = sphi 0, %s86
    %s103 = sphi 0, %s87
    %s109 = sphi 0, %s111
    %s112 = sphi 0, %s109
    %s113 = sphi 0, %s112
    %s129 = sphi 0, %s113
    %s135 = sphi 0, %s137
    %s138 = sphi 0, %s135
    %s139 = sphi 0, %s138
    %s155 = sphi 0, %s139
    %s161 = sphi 0, %s163
    %s164 = sphi 0, %s161
    %s165 = sphi 0, %s164
    %s181 = sphi 0, %s165
    %s187 = sphi 0, %s189
    %s190 = sphi 0, %s187
    %s191 = sphi 0, %s190
    %s207 = sphi 0, %s191
    %s213 = sphi 0, %s215
    %s216 = sphi 0, %s213
    %s217 = sphi 0, %s216
    %s233 = sphi 0, %s217
    %s239 = sphi 0, %s241
    %s242 = sphi 0, %s239
    %s243 = sphi 0, %s242
    %s259 = sphi 0, %s243
    %s265 = sphi 0, %s267
    %s268 = sphi 0, %s265
    %s269 = sphi 0, %s268
    %s285 = sphi 0, %s269
    %s291 = sphi 0, %s293
    %s294 = sphi 0, %s291
    %s295 = sphi 0, %s294
    %s311 = sphi 0, %s295
    %s317 = sphi 0, %s319
    %s320 = sphi 0, %s317
    %s321 = sphi 0, %s320
    %s337 = sphi 0, %s321
    %s343 = sphi 0, %s345
    %s346 = sphi 0, %s343
    %s347 = sphi 0, %s346
    %s363 = sphi 0, %s347
    %s369 = sphi 0, %s371
    %s372 = sphi 0, %s369
    %s373 = sphi 0, %s372
    %s389 = sphi 0, %s373
    %s395 = sphi 0, %s397
    %s398 = sphi 0, %s395
    %s399 = sphi 0, %s398
    %s415 = sphi 0, %s399
    %s421 = sphi 0, %s423
    %s424 = sphi 0, %s421
    %s425 = sphi 0, %s424
    %s441 = sphi 0, %s425
  $region4: #{tpu_custom_call.1} parent=0 // loop_header_branch
    %24 = sbr.rel (%p22) target = $region8
  $region5: #{tpu_custom_call.1} parent=0 // loop_body
    %s26 = ssub.s32 %s21, 1
    %s27 = ssub.s32 %s21, 2
    %s28 = sadd.s32 %s21, 1
    %s29 = ssub.s32 %s21, %s28
    %p30 = scmp.eq.s32.totalorder %s29, 0
    %s32 = sadd.s32 %s31, 1
    %s33 = scalar_select %p30, %s31, %s32
    %p36 = pneg %p30
    %p37 = scmp.eq.s32.totalorder %s21, 1
    %p38 = por %p36, %p37
    %p39 = scmp.ne.s32.totalorder %s31, %s34
    %p40 = scmp.eq.s32.totalorder %s21, 0
    %p41 = por %p39, %p40
    %p42 = scmp.ne.s32.totalorder %s31, %s34
    %p43 = scmp.eq.s32.totalorder %s26, 1
    %p44 = por %p42, %p43
    %p45 = scmp.ne.s32.totalorder %s34, %s35
    %p46 = scmp.eq.s32.totalorder %s26, 0
    %p47 = por %p45, %p46
    %p48 = scmp.ne.s32.totalorder %s34, %s35
    %p49 = scmp.eq.s32.totalorder %s27, 1
    %p50 = por %p48, %p49
    %p52 = scmp.ne.s32.totalorder %s35, %s51
    %p53 = scmp.eq.s32.totalorder %s27, 0
    %p54 = por %p52, %p53
    %s55 = ssub.s32 %s21, %s28
    %p56 = scmp.eq.s32.totalorder %s55, 0
    %s58 = sadd.s32 %s57, 1
    %s59 = scalar_select %p56, %s57, %s58
    %p62 = pneg %p56
    %p63 = scmp.eq.s32.totalorder %s21, 1
    %p64 = por %p62, %p63
    %p65 = scmp.ne.s32.totalorder %s57, %s60
    %p66 = scmp.eq.s32.totalorder %s21, 0
    %p67 = por %p65, %p66
    %p68 = scmp.ne.s32.totalorder %s57, %s60
    %p69 = scmp.eq.s32.totalorder %s26, 1
    %p70 = por %p68, %p69
    %p71 = scmp.ne.s32.totalorder %s60, %s61
    %p72 = scmp.eq.s32.totalorder %s26, 0
    %p73 = por %p71, %p72
    %p74 = scmp.ne.s32.totalorder %s60, %s61
    %p75 = scmp.eq.s32.totalorder %s27, 1
    %p76 = por %p74, %p75
    %p78 = scmp.ne.s32.totalorder %s61, %s77
    %p79 = scmp.eq.s32.totalorder %s27, 0
    %p80 = por %p78, %p79
    %s81 = ssub.s32 %s21, %s28
    %p82 = scmp.eq.s32.totalorder %s81, 0
    %s84 = sadd.s32 %s83, 1
    %s85 = scalar_select %p82, %s83, %s84
    %p88 = pneg %p82
    %p89 = scmp.eq.s32.totalorder %s21, 1
    %p90 = por %p88, %p89
    %p91 = scmp.ne.s32.totalorder %s83, %s86
    %p92 = scmp.eq.s32.totalorder %s21, 0
    %p93 = por %p91, %p92
    %p94 = scmp.ne.s32.totalorder %s83, %s86
    %p95 = scmp.eq.s32.totalorder %s26, 1
    %p96 = por %p94, %p95
    %p97 = scmp.ne.s32.totalorder %s86, %s87
    %p98 = scmp.eq.s32.totalorder %s26, 0
    %p99 = por %p97, %p98
    %p100 = scmp.ne.s32.totalorder %s86, %s87
    %p101 = scmp.eq.s32.totalorder %s27, 1
    %p102 = por %p100, %p101
    %p104 = scmp.ne.s32.totalorder %s87, %s103
    %p105 = scmp.eq.s32.totalorder %s27, 0
    %p106 = por %p104, %p105
    %s107 = ssub.s32 %s21, %s28
    %p108 = scmp.eq.s32.totalorder %s107, 0
    %s110 = sadd.s32 %s109, 1
    %s111 = scalar_select %p108, %s109, %s110
    %p114 = pneg %p108
    %p115 = scmp.eq.s32.totalorder %s21, 1
    %p116 = por %p114, %p115
    %p117 = scmp.ne.s32.totalorder %s109, %s112
    %p118 = scmp.eq.s32.totalorder %s21, 0
    %p119 = por %p117, %p118
    %p120 = scmp.ne.s32.totalorder %s109, %s112
    %p121 = scmp.eq.s32.totalorder %s26, 1
    %p122 = por %p120, %p121
    %p123 = scmp.ne.s32.totalorder %s112, %s113
    %p124 = scmp.eq.s32.totalorder %s26, 0
    %p125 = por %p123, %p124
    %p126 = scmp.ne.s32.totalorder %s112, %s113
    %p127 = scmp.eq.s32.totalorder %s27, 1
    %p128 = por %p126, %p127
    %p130 = scmp.ne.s32.totalorder %s113, %s129
    %p131 = scmp.eq.s32.totalorder %s27, 0
    %p132 = por %p130, %p131
    %s133 = ssub.s32 %s21, %s28
    %p134 = scmp.eq.s32.totalorder %s133, 0
    %s136 = sadd.s32 %s135, 1
    %s137 = scalar_select %p134, %s135, %s136
    %p140 = pneg %p134
    %p141 = scmp.eq.s32.totalorder %s21, 1
    %p142 = por %p140, %p141
    %p143 = scmp.ne.s32.totalorder %s135, %s138
    %p144 = scmp.eq.s32.totalorder %s21, 0
    %p145 = por %p143, %p144
    %p146 = scmp.ne.s32.totalorder %s135, %s138
    %p147 = scmp.eq.s32.totalorder %s26, 1
    %p148 = por %p146, %p147
    %p149 = scmp.ne.s32.totalorder %s138, %s139
    %p150 = scmp.eq.s32.totalorder %s26, 0
    %p151 = por %p149, %p150
    %p152 = scmp.ne.s32.totalorder %s138, %s139
    %p153 = scmp.eq.s32.totalorder %s27, 1
    %p154 = por %p152, %p153
    %p156 = scmp.ne.s32.totalorder %s139, %s155
    %p157 = scmp.eq.s32.totalorder %s27, 0
    %p158 = por %p156, %p157
    %s159 = ssub.s32 %s21, %s28
    %p160 = scmp.eq.s32.totalorder %s159, 0
    %s162 = sadd.s32 %s161, 1
    %s163 = scalar_select %p160, %s161, %s162
    %p166 = pneg %p160
    %p167 = scmp.eq.s32.totalorder %s21, 1
    %p168 = por %p166, %p167
    %p169 = scmp.ne.s32.totalorder %s161, %s164
    %p170 = scmp.eq.s32.totalorder %s21, 0
    %p171 = por %p169, %p170
    %p172 = scmp.ne.s32.totalorder %s161, %s164
    %p173 = scmp.eq.s32.totalorder %s26, 1
    %p174 = por %p172, %p173
    %p175 = scmp.ne.s32.totalorder %s164, %s165
    %p176 = scmp.eq.s32.totalorder %s26, 0
    %p177 = por %p175, %p176
    %p178 = scmp.ne.s32.totalorder %s164, %s165
    %p179 = scmp.eq.s32.totalorder %s27, 1
    %p180 = por %p178, %p179
    %p182 = scmp.ne.s32.totalorder %s165, %s181
    %p183 = scmp.eq.s32.totalorder %s27, 0
    %p184 = por %p182, %p183
    %s185 = ssub.s32 %s21, %s28
    %p186 = scmp.eq.s32.totalorder %s185, 0
    %s188 = sadd.s32 %s187, 1
    %s189 = scalar_select %p186, %s187, %s188
    %p192 = pneg %p186
    %p193 = scmp.eq.s32.totalorder %s21, 1
    %p194 = por %p192, %p193
    %p195 = scmp.ne.s32.totalorder %s187, %s190
    %p196 = scmp.eq.s32.totalorder %s21, 0
    %p197 = por %p195, %p196
    %p198 = scmp.ne.s32.totalorder %s187, %s190
    %p199 = scmp.eq.s32.totalorder %s26, 1
    %p200 = por %p198, %p199
    %p201 = scmp.ne.s32.totalorder %s190, %s191
    %p202 = scmp.eq.s32.totalorder %s26, 0
    %p203 = por %p201, %p202
    %p204 = scmp.ne.s32.totalorder %s190, %s191
    %p205 = scmp.eq.s32.totalorder %s27, 1
    %p206 = por %p204, %p205
    %p208 = scmp.ne.s32.totalorder %s191, %s207
    %p209 = scmp.eq.s32.totalorder %s27, 0
    %p210 = por %p208, %p209
    %s211 = ssub.s32 %s21, %s28
    %p212 = scmp.eq.s32.totalorder %s211, 0
    %s214 = sadd.s32 %s213, 1
    %s215 = scalar_select %p212, %s213, %s214
    %p218 = pneg %p212
    %p219 = scmp.eq.s32.totalorder %s21, 1
    %p220 = por %p218, %p219
    %p221 = scmp.ne.s32.totalorder %s213, %s216
    %p222 = scmp.eq.s32.totalorder %s21, 0
    %p223 = por %p221, %p222
    %p224 = scmp.ne.s32.totalorder %s213, %s216
    %p225 = scmp.eq.s32.totalorder %s26, 1
    %p226 = por %p224, %p225
    %p227 = scmp.ne.s32.totalorder %s216, %s217
    %p228 = scmp.eq.s32.totalorder %s26, 0
    %p229 = por %p227, %p228
    %p230 = scmp.ne.s32.totalorder %s216, %s217
    %p231 = scmp.eq.s32.totalorder %s27, 1
    %p232 = por %p230, %p231
    %p234 = scmp.ne.s32.totalorder %s217, %s233
    %p235 = scmp.eq.s32.totalorder %s27, 0
    %p236 = por %p234, %p235
    %s237 = ssub.s32 %s21, %s28
    %p238 = scmp.eq.s32.totalorder %s237, 0
    %s240 = sadd.s32 %s239, 1
    %s241 = scalar_select %p238, %s239, %s240
    %p244 = pneg %p238
    %p245 = scmp.eq.s32.totalorder %s21, 1
    %p246 = por %p244, %p245
    %p247 = scmp.ne.s32.totalorder %s239, %s242
    %p248 = scmp.eq.s32.totalorder %s21, 0
    %p249 = por %p247, %p248
    %p250 = scmp.ne.s32.totalorder %s239, %s242
    %p251 = scmp.eq.s32.totalorder %s26, 1
    %p252 = por %p250, %p251
    %p253 = scmp.ne.s32.totalorder %s242, %s243
    %p254 = scmp.eq.s32.totalorder %s26, 0
    %p255 = por %p253, %p254
    %p256 = scmp.ne.s32.totalorder %s242, %s243
    %p257 = scmp.eq.s32.totalorder %s27, 1
    %p258 = por %p256, %p257
    %p260 = scmp.ne.s32.totalorder %s243, %s259
    %p261 = scmp.eq.s32.totalorder %s27, 0
    %p262 = por %p260, %p261
    %s263 = ssub.s32 %s21, %s28
    %p264 = scmp.eq.s32.totalorder %s263, 0
    %s266 = sadd.s32 %s265, 1
    %s267 = scalar_select %p264, %s265, %s266
    %p270 = pneg %p264
    %p271 = scmp.eq.s32.totalorder %s21, 1
    %p272 = por %p270, %p271
    %p273 = scmp.ne.s32.totalorder %s265, %s268
    %p274 = scmp.eq.s32.totalorder %s21, 0
    %p275 = por %p273, %p274
    %p276 = scmp.ne.s32.totalorder %s265, %s268
    %p277 = scmp.eq.s32.totalorder %s26, 1
    %p278 = por %p276, %p277
    %p279 = scmp.ne.s32.totalorder %s268, %s269
    %p280 = scmp.eq.s32.totalorder %s26, 0
    %p281 = por %p279, %p280
    %p282 = scmp.ne.s32.totalorder %s268, %s269
    %p283 = scmp.eq.s32.totalorder %s27, 1
    %p284 = por %p282, %p283
    %p286 = scmp.ne.s32.totalorder %s269, %s285
    %p287 = scmp.eq.s32.totalorder %s27, 0
    %p288 = por %p286, %p287
    %s289 = ssub.s32 %s21, %s28
    %p290 = scmp.eq.s32.totalorder %s289, 0
    %s292 = sadd.s32 %s291, 1
    %s293 = scalar_select %p290, %s291, %s292
    %p296 = pneg %p290
    %p297 = scmp.eq.s32.totalorder %s21, 1
    %p298 = por %p296, %p297
    %p299 = scmp.ne.s32.totalorder %s291, %s294
    %p300 = scmp.eq.s32.totalorder %s21, 0
    %p301 = por %p299, %p300
    %p302 = scmp.ne.s32.totalorder %s291, %s294
    %p303 = scmp.eq.s32.totalorder %s26, 1
    %p304 = por %p302, %p303
    %p305 = scmp.ne.s32.totalorder %s294, %s295
    %p306 = scmp.eq.s32.totalorder %s26, 0
    %p307 = por %p305, %p306
    %p308 = scmp.ne.s32.totalorder %s294, %s295
    %p309 = scmp.eq.s32.totalorder %s27, 1
    %p310 = por %p308, %p309
    %p312 = scmp.ne.s32.totalorder %s295, %s311
    %p313 = scmp.eq.s32.totalorder %s27, 0
    %p314 = por %p312, %p313
    %s315 = ssub.s32 %s21, %s28
    %p316 = scmp.eq.s32.totalorder %s315, 0
    %s318 = sadd.s32 %s317, 1
    %s319 = scalar_select %p316, %s317, %s318
    %p322 = pneg %p316
    %p323 = scmp.eq.s32.totalorder %s21, 1
    %p324 = por %p322, %p323
    %p325 = scmp.ne.s32.totalorder %s317, %s320
    %p326 = scmp.eq.s32.totalorder %s21, 0
    %p327 = por %p325, %p326
    %p328 = scmp.ne.s32.totalorder %s317, %s320
    %p329 = scmp.eq.s32.totalorder %s26, 1
    %p330 = por %p328, %p329
    %p331 = scmp.ne.s32.totalorder %s320, %s321
    %p332 = scmp.eq.s32.totalorder %s26, 0
    %p333 = por %p331, %p332
    %p334 = scmp.ne.s32.totalorder %s320, %s321
    %p335 = scmp.eq.s32.totalorder %s27, 1
    %p336 = por %p334, %p335
    %p338 = scmp.ne.s32.totalorder %s321, %s337
    %p339 = scmp.eq.s32.totalorder %s27, 0
    %p340 = por %p338, %p339
    %s341 = ssub.s32 %s21, %s28
    %p342 = scmp.eq.s32.totalorder %s341, 0
    %s344 = sadd.s32 %s343, 1
    %s345 = scalar_select %p342, %s343, %s344
    %p348 = pneg %p342
    %p349 = scmp.eq.s32.totalorder %s21, 1
    %p350 = por %p348, %p349
    %p351 = scmp.ne.s32.totalorder %s343, %s346
    %p352 = scmp.eq.s32.totalorder %s21, 0
    %p353 = por %p351, %p352
    %p354 = scmp.ne.s32.totalorder %s343, %s346
    %p355 = scmp.eq.s32.totalorder %s26, 1
    %p356 = por %p354, %p355
    %p357 = scmp.ne.s32.totalorder %s346, %s347
    %p358 = scmp.eq.s32.totalorder %s26, 0
    %p359 = por %p357, %p358
    %p360 = scmp.ne.s32.totalorder %s346, %s347
    %p361 = scmp.eq.s32.totalorder %s27, 1
    %p362 = por %p360, %p361
    %p364 = scmp.ne.s32.totalorder %s347, %s363
    %p365 = scmp.eq.s32.totalorder %s27, 0
    %p366 = por %p364, %p365
    %s367 = ssub.s32 %s21, %s28
    %p368 = scmp.eq.s32.totalorder %s367, 0
    %s370 = sadd.s32 %s369, 1
    %s371 = scalar_select %p368, %s369, %s370
    %p374 = pneg %p368
    %p375 = scmp.eq.s32.totalorder %s21, 1
    %p376 = por %p374, %p375
    %p377 = scmp.ne.s32.totalorder %s369, %s372
    %p378 = scmp.eq.s32.totalorder %s21, 0
    %p379 = por %p377, %p378
    %p380 = scmp.ne.s32.totalorder %s369, %s372
    %p381 = scmp.eq.s32.totalorder %s26, 1
    %p382 = por %p380, %p381
    %p383 = scmp.ne.s32.totalorder %s372, %s373
    %p384 = scmp.eq.s32.totalorder %s26, 0
    %p385 = por %p383, %p384
    %p386 = scmp.ne.s32.totalorder %s372, %s373
    %p387 = scmp.eq.s32.totalorder %s27, 1
    %p388 = por %p386, %p387
    %p390 = scmp.ne.s32.totalorder %s373, %s389
    %p391 = scmp.eq.s32.totalorder %s27, 0
    %p392 = por %p390, %p391
    %s393 = ssub.s32 %s21, %s28
    %p394 = scmp.eq.s32.totalorder %s393, 0
    %s396 = sadd.s32 %s395, 1
    %s397 = scalar_select %p394, %s395, %s396
    %p400 = pneg %p394
    %p401 = scmp.eq.s32.totalorder %s21, 1
    %p402 = por %p400, %p401
    %p403 = scmp.ne.s32.totalorder %s395, %s398
    %p404 = scmp.eq.s32.totalorder %s21, 0
    %p405 = por %p403, %p404
    %p406 = scmp.ne.s32.totalorder %s395, %s398
    %p407 = scmp.eq.s32.totalorder %s26, 1
    %p408 = por %p406, %p407
    %p409 = scmp.ne.s32.totalorder %s398, %s399
    %p410 = scmp.eq.s32.totalorder %s26, 0
    %p411 = por %p409, %p410
    %p412 = scmp.ne.s32.totalorder %s398, %s399
    %p413 = scmp.eq.s32.totalorder %s27, 1
    %p414 = por %p412, %p413
    %p416 = scmp.ne.s32.totalorder %s399, %s415
    %p417 = scmp.eq.s32.totalorder %s27, 0
    %p418 = por %p416, %p417
    %s419 = ssub.s32 %s21, %s28
    %p420 = scmp.eq.s32.totalorder %s419, 0
    %s422 = sadd.s32 %s421, 1
    %s423 = scalar_select %p420, %s421, %s422
    %p426 = pneg %p420
    %p427 = scmp.eq.s32.totalorder %s21, 1
    %p428 = por %p426, %p427
    %p429 = scmp.ne.s32.totalorder %s421, %s424
    %p430 = scmp.eq.s32.totalorder %s21, 0
    %p431 = por %p429, %p430
    %p432 = scmp.ne.s32.totalorder %s421, %s424
    %p433 = scmp.eq.s32.totalorder %s26, 1
    %p434 = por %p432, %p433
    %p435 = scmp.ne.s32.totalorder %s424, %s425
    %p436 = scmp.eq.s32.totalorder %s26, 0
    %p437 = por %p435, %p436
    %p438 = scmp.ne.s32.totalorder %s424, %s425
    %p439 = scmp.eq.s32.totalorder %s27, 1
    %p440 = por %p438, %p439
    %p442 = scmp.ne.s32.totalorder %s425, %s441
    %p443 = scmp.eq.s32.totalorder %s27, 0
    %p444 = por %p442, %p443
    %p445 = scmp.le.s32.totalorder 1, %s21
    %p446 = scmp.lt.s32.totalorder %s21, 3
    %p447 = pnand %p445, %p446
    %p448 = pneg %p447
    // Predicated region
    $region9: #{tpu_custom_call.1} parent=5 // pred_check
      _
    $region10: #{tpu_custom_call.1} parent=5 // pred_check_branch
      %450 = sbr.rel (%p447) target = $region12
    $region11: #{tpu_custom_call.1} parent=5 // pred_region
      %s451 = ssub.s32 %s21, 1
    $region12: #{tpu_custom_call.1} parent=5 // pred_fallthru
      _
    %p452 = scmp.lt.s32.totalorder %s21, 2
    // Predicated region
    $region13: #{tpu_custom_call.1} parent=5 // pred_check
      %p453 = pneg %p452
    $region14: #{tpu_custom_call.1} parent=5 // pred_check_branch
      %455 = sbr.rel (%p453) target = $region16
    $region15: #{tpu_custom_call.1} parent=5 // pred_region
      // Predicated region
      $region17: #{tpu_custom_call.1} parent=15 // pred_check
        %p456 = pneg %p41
      $region18: #{tpu_custom_call.1} parent=15 // pred_check_branch
        %458 = sbr.rel (%p456) target = $region20
      $region19: #{tpu_custom_call.1} parent=15 // pred_region
        %p459 = scmp.lt.s32.totalorder %s21, 1
        %s460 = scalar_select %p459, %s21, 1
        %s461 = smul.addr %s460, 2
        %s462 = smul.addr %s461, 8
        %s463 = scalar_lea.vmem %s0, %s462
      $region20: #{tpu_custom_call.1} parent=15 // pred_fallthru
        _
      // Predicated region
      $region21: #{tpu_custom_call.1} parent=15 // pred_check
        %p464 = pneg %p67
      $region22: #{tpu_custom_call.1} parent=15 // pred_check_branch
        %466 = sbr.rel (%p464) target = $region24
      $region23: #{tpu_custom_call.1} parent=15 // pred_region
        %p467 = scmp.lt.s32.totalorder %s21, 1
        %s468 = scalar_select %p467, %s21, 1
        %s469 = smul.addr %s468, 2
        %s470 = smul.addr %s469, 8
        %s471 = scalar_lea.vmem %s1, %s470
      $region24: #{tpu_custom_call.1} parent=15 // pred_fallthru
        _
      // Predicated region
      $region25: #{tpu_custom_call.1} parent=15 // pred_check
        %p472 = pneg %p93
      $region26: #{tpu_custom_call.1} parent=15 // pred_check_branch
        %474 = sbr.rel (%p472) target = $region28
      $region27: #{tpu_custom_call.1} parent=15 // pred_region
        %p475 = scmp.lt.s32.totalorder %s21, 1
        %s476 = scalar_select %p475, %s21, 1
        %s477 = smul.addr %s476, 3
        %s478 = smul.addr %s477, 8
        %s479 = scalar_lea.vmem %s2, %s478
      $region28: #{tpu_custom_call.1} parent=15 // pred_fallthru
        _
      // Predicated region
      $region29: #{tpu_custom_call.1} parent=15 // pred_check
        %p480 = pneg %p119
      $region30: #{tpu_custom_call.1} parent=15 // pred_check_branch
        %482 = sbr.rel (%p480) target = $region32
      $region31: #{tpu_custom_call.1} parent=15 // pred_region
        %p483 = scmp.lt.s32.totalorder %s21, 1
        %s484 = scalar_select %p483, %s21, 1
        %s485 = smul.addr %s484, 4
        %s486 = scalar_lea.vmem %s3, %s485
      $region32: #{tpu_custom_call.1} parent=15 // pred_fallthru
        _
      // Predicated region
      $region33: #{tpu_custom_call.1} parent=15 // pred_check
        %p487 = pneg %p145
      $region34: #{tpu_custom_call.1} parent=15 // pred_check_branch
        %489 = sbr.rel (%p487) target = $region36
      $region35: #{tpu_custom_call.1} parent=15 // pred_region
        %p490 = scmp.lt.s32.totalorder %s21, 1
        %s491 = scalar_select %p490, %s21, 1
        %s492 = smul.addr %s491, 3
        %s493 = smul.addr %s492, 8
        %s494 = scalar_lea.vmem %s4, %s493
      $region36: #{tpu_custom_call.1} parent=15 // pred_fallthru
        _
      // Predicated region
      $region37: #{tpu_custom_call.1} parent=15 // pred_check
        %p495 = pneg %p171
      $region38: #{tpu_custom_call.1} parent=15 // pred_check_branch
        %497 = sbr.rel (%p495) target = $region40
      $region39: #{tpu_custom_call.1} parent=15 // pred_region
        %p498 = scmp.lt.s32.totalorder %s21, 1
        %s499 = scalar_select %p498, %s21, 1
        %s500 = scalar_lea.vmem %s5, %s499
      $region40: #{tpu_custom_call.1} parent=15 // pred_fallthru
        _
      // Predicated region
      $region41: #{tpu_custom_call.1} parent=15 // pred_check
        %p501 = pneg %p197
      $region42: #{tpu_custom_call.1} parent=15 // pred_check_branch
        %503 = sbr.rel (%p501) target = $region44
      $region43: #{tpu_custom_call.1} parent=15 // pred_region
        %p504 = scmp.lt.s32.totalorder %s21, 1
        %s505 = scalar_select %p504, %s21, 1
        %s506 = smul.addr %s505, 3
        %s507 = smul.addr %s506, 8
        %s508 = scalar_lea.vmem %s6, %s507
      $region44: #{tpu_custom_call.1} parent=15 // pred_fallthru
        _
      // Predicated region
      $region45: #{tpu_custom_call.1} parent=15 // pred_check
        %p509 = pneg %p223
      $region46: #{tpu_custom_call.1} parent=15 // pred_check_branch
        %511 = sbr.rel (%p509) target = $region48
      $region47: #{tpu_custom_call.1} parent=15 // pred_region
        %p512 = scmp.lt.s32.totalorder %s21, 1
        %s513 = scalar_select %p512, %s21, 1
        %s514 = smul.addr %s513, 4
        %s515 = scalar_lea.vmem %s7, %s514
      $region48: #{tpu_custom_call.1} parent=15 // pred_fallthru
        _
      // Predicated region
      $region49: #{tpu_custom_call.1} parent=15 // pred_check
        %p516 = pneg %p249
      $region50: #{tpu_custom_call.1} parent=15 // pred_check_branch
        %518 = sbr.rel (%p516) target = $region52
      $region51: #{tpu_custom_call.1} parent=15 // pred_region
        %p519 = scmp.lt.s32.totalorder %s21, 1
        %s520 = scalar_select %p519, %s21, 1
        %s521 = smul.addr %s520, 3
        %s522 = smul.addr %s521, 8
        %s523 = scalar_lea.vmem %s8, %s522
      $region52: #{tpu_custom_call.1} parent=15 // pred_fallthru
        _
      // Predicated region
      $region53: #{tpu_custom_call.1} parent=15 // pred_check
        %p524 = pneg %p275
      $region54: #{tpu_custom_call.1} parent=15 // pred_check_branch
        %526 = sbr.rel (%p524) target = $region56
      $region55: #{tpu_custom_call.1} parent=15 // pred_region
        %p527 = scmp.lt.s32.totalorder %s21, 1
        %s528 = scalar_select %p527, %s21, 1
        %s529 = scalar_lea.vmem %s9, %s528
      $region56: #{tpu_custom_call.1} parent=15 // pred_fallthru
        _
      // Predicated region
      $region57: #{tpu_custom_call.1} parent=15 // pred_check
        %p530 = pneg %p301
      $region58: #{tpu_custom_call.1} parent=15 // pred_check_branch
        %532 = sbr.rel (%p530) target = $region60
      $region59: #{tpu_custom_call.1} parent=15 // pred_region
        %p533 = scmp.lt.s32.totalorder %s21, 1
        %s534 = scalar_select %p533, %s21, 1
        %s535 = smul.addr %s534, 3
        %s536 = smul.addr %s535, 8
        %s537 = scalar_lea.vmem %s10, %s536
      $region60: #{tpu_custom_call.1} parent=15 // pred_fallthru
        _
      // Predicated region
      $region61: #{tpu_custom_call.1} parent=15 // pred_check
        %p538 = pneg %p327
      $region62: #{tpu_custom_call.1} parent=15 // pred_check_branch
        %540 = sbr.rel (%p538) target = $region64
      $region63: #{tpu_custom_call.1} parent=15 // pred_region
        %p541 = scmp.lt.s32.totalorder %s21, 1
        %s542 = scalar_select %p541, %s21, 1
        %s543 = scalar_lea.vmem %s11, %s542
      $region64: #{tpu_custom_call.1} parent=15 // pred_fallthru
        _
      // Predicated region
      $region65: #{tpu_custom_call.1} parent=15 // pred_check
        %p544 = pneg %p353
      $region66: #{tpu_custom_call.1} parent=15 // pred_check_branch
        %546 = sbr.rel (%p544) target = $region68
      $region67: #{tpu_custom_call.1} parent=15 // pred_region
        %p547 = scmp.lt.s32.totalorder %s21, 1
        %s548 = scalar_select %p547, %s21, 1
        %s549 = smul.addr %s548, 8
        %s550 = scalar_lea.vmem %s12, %s549
      $region68: #{tpu_custom_call.1} parent=15 // pred_fallthru
        _
      // Predicated region
      $region69: #{tpu_custom_call.1} parent=15 // pred_check
        %p551 = pneg %p379
      $region70: #{tpu_custom_call.1} parent=15 // pred_check_branch
        %553 = sbr.rel (%p551) target = $region72
      $region71: #{tpu_custom_call.1} parent=15 // pred_region
        %p554 = scmp.lt.s32.totalorder %s21, 1
        %s555 = scalar_select %p554, %s21, 1
        %s556 = scalar_lea.vmem %s13, %s555
      $region72: #{tpu_custom_call.1} parent=15 // pred_fallthru
        _
      // Predicated region
      $region73: #{tpu_custom_call.1} parent=15 // pred_check
        %p557 = pneg %p405
      $region74: #{tpu_custom_call.1} parent=15 // pred_check_branch
        %559 = sbr.rel (%p557) target = $region76
      $region75: #{tpu_custom_call.1} parent=15 // pred_region
        %p560 = scmp.lt.s32.totalorder %s21, 1
        %s561 = scalar_select %p560, %s21, 1
        %s562 = smul.addr %s561, 8
        %s563 = scalar_lea.vmem %s14, %s562
      $region76: #{tpu_custom_call.1} parent=15 // pred_fallthru
        _
    $region16: #{tpu_custom_call.1} parent=5 // pred_fallthru
      _
    %p564 = scmp.le.s32.totalorder 1, %s21
    %p565 = scmp.lt.s32.totalorder %s21, 3
    %p566 = pnand %p564, %p565
    %p567 = pneg %p566
    // Predicated region
    $region77: #{tpu_custom_call.1} parent=5 // pred_check
      _
    $region78: #{tpu_custom_call.1} parent=5 // pred_check_branch
      %569 = sbr.rel (%p566) target = $region80
    $region79: #{tpu_custom_call.1} parent=5 // pred_region
      %s570 = ssub.s32 %s21, 1
      %p571 = scmp.lt.s32.totalorder %s26, 1
      %s572 = scalar_select %p571, %s26, 1
      %s573 = smul.addr %s572, 2
      %s574 = smul.addr %s573, 8
      %s575 = scalar_lea.vmem %s0, %s574
      %p576 = pneg %p47
      %p577 = pneg %p44
      %p578 = scmp.lt.s32.totalorder %s26, 1
      %s579 = scalar_select %p578, %s26, 1
      %s580 = smul.addr %s579, 2
      %s581 = smul.addr %s580, 8
      %s582 = scalar_lea.vmem %s1, %s581
      %p583 = pneg %p73
      %p584 = pneg %p70
      %p585 = scmp.lt.s32.totalorder %s26, 1
      %s586 = scalar_select %p585, %s26, 1
      %s587 = smul.addr %s586, 3
      %s588 = smul.addr %s587, 8
      %s589 = scalar_lea.vmem %s2, %s588
      %p590 = pneg %p99
      %p591 = pneg %p96
      %p592 = scmp.lt.s32.totalorder %s26, 1
      %s593 = scalar_select %p592, %s26, 1
      %s594 = smul.addr %s593, 4
      %s595 = scalar_lea.vmem %s3, %s594
      %p596 = pneg %p125
      %p597 = pneg %p122
      %p598 = scmp.lt.s32.totalorder %s26, 1
      %s599 = scalar_select %p598, %s26, 1
      %s600 = smul.addr %s599, 3
      %s601 = smul.addr %s600, 8
      %s602 = scalar_lea.vmem %s4, %s601
      %p603 = pneg %p151
      %p604 = pneg %p148
      %p605 = scmp.lt.s32.totalorder %s26, 1
      %s606 = scalar_select %p605, %s26, 1
      %s607 = scalar_lea.vmem %s5, %s606
      %p608 = pneg %p177
      %p609 = pneg %p174
      %p610 = scmp.lt.s32.totalorder %s26, 1
      %s611 = scalar_select %p610, %s26, 1
      %s612 = smul.addr %s611, 3
      %s613 = smul.addr %s612, 8
      %s614 = scalar_lea.vmem %s6, %s613
      %p615 = pneg %p203
      %p616 = pneg %p200
      %p617 = scmp.lt.s32.totalorder %s26, 1
      %s618 = scalar_select %p617, %s26, 1
      %s619 = smul.addr %s618, 4
      %s620 = scalar_lea.vmem %s7, %s619
      %p621 = pneg %p229
      %p622 = pneg %p226
      %p623 = scmp.lt.s32.totalorder %s26, 1
      %s624 = scalar_select %p623, %s26, 1
      %s625 = smul.addr %s624, 3
      %s626 = smul.addr %s625, 8
      %s627 = scalar_lea.vmem %s8, %s626
      %p628 = pneg %p255
      %p629 = pneg %p252
      %p630 = scmp.lt.s32.totalorder %s26, 1
      %s631 = scalar_select %p630, %s26, 1
      %s632 = scalar_lea.vmem %s9, %s631
      %p633 = pneg %p281
      %p634 = pneg %p278
      %p635 = scmp.lt.s32.totalorder %s26, 1
      %s636 = scalar_select %p635, %s26, 1
      %s637 = smul.addr %s636, 3
      %s638 = smul.addr %s637, 8
      %s639 = scalar_lea.vmem %s10, %s638
      %p640 = pneg %p307
      %p641 = pneg %p304
      %p642 = scmp.lt.s32.totalorder %s26, 1
      %s643 = scalar_select %p642, %s26, 1
      %s644 = scalar_lea.vmem %s11, %s643
      %p645 = pneg %p333
      %p646 = pneg %p330
      %p647 = scmp.lt.s32.totalorder %s26, 1
      %s648 = scalar_select %p647, %s26, 1
      %s649 = smul.addr %s648, 8
      %s650 = scalar_lea.vmem %s12, %s649
      %p651 = pneg %p359
      %p652 = pneg %p356
      %p653 = scmp.lt.s32.totalorder %s26, 1
      %s654 = scalar_select %p653, %s26, 1
      %s655 = scalar_lea.vmem %s13, %s654
      %p656 = pneg %p385
      %p657 = pneg %p382
      %p658 = scmp.lt.s32.totalorder %s26, 1
      %s659 = scalar_select %p658, %s26, 1
      %s660 = smul.addr %s659, 8
      %s661 = scalar_lea.vmem %s14, %s660
      %p662 = pneg %p411
      %p663 = pneg %p408
      %p664 = pneg %p437
      %p665 = pneg %p434
      %p666 = scmp.lt.s32.totalorder %s26, 1
      %s667 = scalar_select %p666, %s26, 1
      %s668 = smul.addr %s667, 2
      %s669 = smul.addr %s668, 8
      %s670 = scalar_lea.vmem %s15, %s669
      %p671 = scmp.lt.s32.totalorder %s26, 1
      %s672 = scalar_select %p671, %s26, 1
      %s673 = smul.addr %s672, 2
      %s674 = smul.addr %s673, 8
      %s675 = scalar_lea.vmem %s0, %s674
      %p676 = scmp.lt.s32.totalorder %s26, 1
      %s677 = scalar_select %p676, %s26, 1
      %s678 = smul.addr %s677, 2
      %s679 = smul.addr %s678, 8
      %s680 = scalar_lea.vmem %s1, %s679
      %p681 = scmp.lt.s32.totalorder %s26, 1
      %s682 = scalar_select %p681, %s26, 1
      %s683 = smul.addr %s682, 3
      %s684 = smul.addr %s683, 8
      %s685 = scalar_lea.vmem %s2, %s684
      %p686 = scmp.lt.s32.totalorder %s26, 1
      %s687 = scalar_select %p686, %s26, 1
      %s688 = smul.addr %s687, 4
      %s689 = scalar_lea.vmem %s3, %s688
      %p690 = scmp.lt.s32.totalorder %s26, 1
      %s691 = scalar_select %p690, %s26, 1
      %s692 = smul.addr %s691, 3
      %s693 = smul.addr %s692, 8
      %s694 = scalar_lea.vmem %s4, %s693
      %p695 = scmp.lt.s32.totalorder %s26, 1
      %s696 = scalar_select %p695, %s26, 1
      %s697 = scalar_lea.vmem %s5, %s696
      %p698 = scmp.lt.s32.totalorder %s26, 1
      %s699 = scalar_select %p698, %s26, 1
      %s700 = smul.addr %s699, 3
      %s701 = smul.addr %s700, 8
      %s702 = scalar_lea.vmem %s6, %s701
      %p703 = scmp.lt.s32.totalorder %s26, 1
      %s704 = scalar_select %p703, %s26, 1
      %s705 = smul.addr %s704, 4
      %s706 = scalar_lea.vmem %s7, %s705
      %p707 = scmp.lt.s32.totalorder %s26, 1
      %s708 = scalar_select %p707, %s26, 1
      %s709 = smul.addr %s708, 3
      %s710 = smul.addr %s709, 8
      %s711 = scalar_lea.vmem %s8, %s710
      %p712 = scmp.lt.s32.totalorder %s26, 1
      %s713 = scalar_select %p712, %s26, 1
      %s714 = scalar_lea.vmem %s9, %s713
      %p715 = scmp.lt.s32.totalorder %s26, 1
      %s716 = scalar_select %p715, %s26, 1
      %s717 = smul.addr %s716, 3
      %s718 = smul.addr %s717, 8
      %s719 = scalar_lea.vmem %s10, %s718
      %p720 = scmp.lt.s32.totalorder %s26, 1
      %s721 = scalar_select %p720, %s26, 1
      %s722 = scalar_lea.vmem %s11, %s721
      %p723 = scmp.lt.s32.totalorder %s26, 1
      %s724 = scalar_select %p723, %s26, 1
      %s725 = smul.addr %s724, 8
      %s726 = scalar_lea.vmem %s12, %s725
      %p727 = scmp.lt.s32.totalorder %s26, 1
      %s728 = scalar_select %p727, %s26, 1
      %s729 = scalar_lea.vmem %s13, %s728
      %p730 = scmp.lt.s32.totalorder %s26, 1
      %s731 = scalar_select %p730, %s26, 1
      %s732 = smul.addr %s731, 8
      %s733 = scalar_lea.vmem %s14, %s732
      %p734 = scmp.lt.s32.totalorder %s26, 1
      %s735 = scalar_select %p734, %s26, 1
      %s736 = smul.addr %s735, 2
      %s737 = smul.addr %s736, 8
      %s738 = scalar_lea.vmem %s15, %s737
      %v739 = vld [vmem:[%s675] sm:$0xff]
      %v740 = vld [vmem:[%s675 + $0x8] sm:$0xff]
      %v741 = vld [vmem:[%s680] sm:$0xff]
      %v742 = vld [vmem:[%s680 + $0x8] sm:$0xff]
      %v743 = vld [vmem:[%s685] sm:$0xff]
      %v744 = vld [vmem:[%s685 + $0x8] sm:$0xff]
      %v745 = vld [vmem:[%s685 + $0x10] sm:$0x7]
      %v746 = vld [vmem:[%s689] sm:$0x7]
      %v747 = vld [vmem:[%s694] sm:$0xff]
      %v748 = vld [vmem:[%s694 + $0x8] sm:$0xff]
      %v749 = vld [vmem:[%s694 + $0x10] sm:$0xff]
      %v750 = vld [vmem:[%s697] sm:$0x1]
      %vm751 = vcmask 154624
      %v753 = vsel %vm751, %v739, 0
      %v756 = vsel %vm751, %v740, 0
      %vm758 = vcmask 1042432
      %v760 = vsel %vm758, %v745, 0
      %762 = vmatprep.subr.mxu0 0.0
      %763 = vmatpush1.msra.mxu0 0.0
      %764 = vmatprep.subr.mxu0 0.0
      %765 = vmatpush1.msra.mxu0 0.0
      %766 = vmatprep.subr.mxu0 0.0
      %767 = vmatpush1.msra.mxu0 0.0
      %768 = vmatprep.subr.mxu0 0.0
      %769 = vmatpush1.msra.mxu0 0.0
      %770 = vmatprep.subr.mxu0 0.0
      %771 = vmatpush1.msra.mxu0 0.0
      %772 = vmatprep.subr.mxu0 0.0
      %773 = vmatpush1.msra.mxu0 0.0
      %774 = vmatprep.subr.mxu0 0.0
      %775 = vmatpush1.msra.mxu0 0.0
      %776 = vmatprep.subr.mxu0 0.0
      %777 = vmatpush1.msra.mxu0 0.0
      %778 = vmatprep.subr.mxu0 0.0
      %779 = vmatpush1.msra.mxu0 0.0
      %780 = vmatprep.subr.mxu0 0.0
      %781 = vmatpush1.msra.mxu0 0.0
      %782 = vmatprep.subr.mxu0 0.0
      %783 = vmatpush1.msra.mxu0 0.0
      %784 = vmatprep.subr.mxu0 0.0
      %785 = vmatpush1.msra.mxu0 0.0
      %786 = vmatprep.subr.mxu0 0.0
      %787 = vmatpush1.msra.mxu0 0.0
      %788 = vmatprep.subr.mxu0 0.0
      %789 = vmatpush1.msra.mxu0 %v760
      %790 = vmatprep.subr.mxu0 0.0
      %791 = vmatpush1.msra.mxu0 %v744
      %792 = vmatprep.subr.mxu0 0.0
      %793 = vmatpush1.msra.mxu0 %v743
      %794 = vmatprep.subr.mxu0 0.0
      %795 = vmatpush2.msra.mxu0 0.0
      %796 = vmatprep.subr.mxu0 0.0
      %797 = vmatpush2.msra.mxu0 0.0
      %798 = vmatprep.subr.mxu0 0.0
      %799 = vmatpush2.msra.mxu0 0.0
      %800 = vmatprep.subr.mxu0 0.0
      %801 = vmatpush2.msra.mxu0 0.0
      %802 = vmatprep.subr.mxu0 0.0
      %803 = vmatpush2.msra.mxu0 0.0
      %804 = vmatprep.subr.mxu0 0.0
      %805 = vmatpush2.msra.mxu0 0.0
      %806 = vmatprep.subr.mxu0 0.0
      %807 = vmatpush2.msra.mxu0 0.0
      %808 = vmatprep.subr.mxu0 0.0
      %809 = vmatpush2.msra.mxu0 0.0
      %810 = vmatprep.subr.mxu0 0.0
      %811 = vmatpush2.msra.mxu0 0.0
      %812 = vmatprep.subr.mxu0 0.0
      %813 = vmatpush2.msra.mxu0 0.0
      %814 = vmatprep.subr.mxu0 0.0
      %815 = vmatpush2.msra.mxu0 0.0
      %816 = vmatprep.subr.mxu0 0.0
      %817 = vmatpush2.msra.mxu0 0.0
      %818 = vmatprep.subr.mxu0 0.0
      %819 = vmatpush2.msra.mxu0 0.0
      %820 = vmatprep.subr.mxu0 0.0
      %821 = vmatpush2.msra.mxu0 0.0
      %822 = vmatprep.subr.mxu0 0.0
      %823 = vmatpush2.msra.mxu0 0.0
      %824 = vmatprep.subr.mxu0 0.0
      %825 = vmatpush2.msra.mxu0 0.0
      %826 = vmatprep.mubr.f32.mxu0 0.0
      %827 = vmatmul.mubr.f32.gmra.mxu0 %v753
      %v828 = vpop.f32.mrf.mxu0
      %v829 = vadd.f32 0.0, %v828
      %v830 = vpop.f32.mrf.mxu0
      %831 = vmatprep.mubr.f32.mxu0 0.0
      %832 = vmatmul.mubr.f32.gmra.mxu0 %v756
      %v833 = vpop.f32.mrf.mxu0
      %v834 = vadd.f32 0.0, %v833
      %v835 = vpop.f32.mrf.mxu0
      %836 = vdwg.mxu0
      %vm837 = vcmask 195584
      %v839 = vsel %vm837, %v746, 0
      %v842 = vsel %vm837, %v829, 0
      %v845 = vsel %vm837, %v834, 0
      %847 = vmatprep.subr.mxu0 0.0
      %848 = vmatpush1.xpose.msra.mxu0 0.0
      %849 = vmatprep.subr.mxu0 0.0
      %850 = vmatpush1.xpose.msra.mxu0 0.0
      %851 = vmatprep.subr.mxu0 0.0
      %852 = vmatpush1.xpose.msra.mxu0 0.0
      %853 = vmatprep.subr.mxu0 0.0
      %854 = vmatpush1.xpose.msra.mxu0 0.0
      %855 = vmatprep.subr.mxu0 0.0
      %856 = vmatpush1.xpose.msra.mxu0 0.0
      %857 = vmatprep.subr.mxu0 0.0
      %858 = vmatpush1.xpose.msra.mxu0 0.0
      %859 = vmatprep.subr.mxu0 0.0
      %860 = vmatpush1.xpose.msra.mxu0 0.0
      %861 = vmatprep.subr.mxu0 0.0
      %862 = vmatpush1.xpose.msra.mxu0 0.0
      %863 = vmatprep.subr.mxu0 0.0
      %864 = vmatpush1.xpose.msra.mxu0 0.0
      %865 = vmatprep.subr.mxu0 0.0
      %866 = vmatpush1.xpose.msra.mxu0 0.0
      %867 = vmatprep.subr.mxu0 0.0
      %868 = vmatpush1.xpose.msra.mxu0 0.0
      %869 = vmatprep.subr.mxu0 0.0
      %870 = vmatpush1.xpose.msra.mxu0 0.0
      %871 = vmatprep.subr.mxu0 0.0
      %872 = vmatpush1.xpose.msra.mxu0 0.0
      %873 = vmatprep.subr.mxu0 0.0
      %874 = vmatpush1.xpose.msra.mxu0 0.0
      %875 = vmatprep.subr.mxu0 0.0
      %876 = vmatpush1.xpose.msra.mxu0 %v845
      %877 = vmatprep.subr.mxu0 0.0
      %878 = vmatpush1.xpose.msra.mxu0 %v842
      %879 = vmatprep.subr.mxu0 0.0
      %880 = vmatpush2.xpose.msra.mxu0 0.0
      %881 = vmatprep.subr.mxu0 0.0
      %882 = vmatpush2.xpose.msra.mxu0 0.0
      %883 = vmatprep.subr.mxu0 0.0
      %884 = vmatpush2.xpose.msra.mxu0 0.0
      %885 = vmatprep.subr.mxu0 0.0
      %886 = vmatpush2.xpose.msra.mxu0 0.0
      %887 = vmatprep.subr.mxu0 0.0
      %888 = vmatpush2.xpose.msra.mxu0 0.0
      %889 = vmatprep.subr.mxu0 0.0
      %890 = vmatpush2.xpose.msra.mxu0 0.0
      %891 = vmatprep.subr.mxu0 0.0
      %892 = vmatpush2.xpose.msra.mxu0 0.0
      %893 = vmatprep.subr.mxu0 0.0
      %894 = vmatpush2.xpose.msra.mxu0 0.0
      %895 = vmatprep.subr.mxu0 0.0
      %896 = vmatpush2.xpose.msra.mxu0 0.0
      %897 = vmatprep.subr.mxu0 0.0
      %898 = vmatpush2.xpose.msra.mxu0 0.0
      %899 = vmatprep.subr.mxu0 0.0
      %900 = vmatpush2.xpose.msra.mxu0 0.0
      %901 = vmatprep.subr.mxu0 0.0
      %902 = vmatpush2.xpose.msra.mxu0 0.0
      %903 = vmatprep.subr.mxu0 0.0
      %904 = vmatpush2.xpose.msra.mxu0 0.0
      %905 = vmatprep.subr.mxu0 0.0
      %906 = vmatpush2.xpose.msra.mxu0 0.0
      %907 = vmatprep.subr.mxu0 0.0
      %908 = vmatpush2.xpose.msra.mxu0 0.0
      %909 = vmatprep.subr.mxu0 0.0
      %910 = vmatpush2.xpose.msra.mxu0 0.0
      %911 = vmatprep.mubr.f32.mxu0 0.0
      %912 = vmatmul.mubr.f32.gmra.mxu0 %v839
      %v913 = vpop.f32.mrf.mxu0
      %v914 = vadd.f32 0.0, %v913
      %v915 = vpop.f32.mrf.mxu0
      %916 = vdwg.mxu0
      %917 = vmatprep.subr.mxu0 0.0
      %918 = vmatpush1.msra.mxu0 0.0
      %919 = vmatprep.subr.mxu0 0.0
      %920 = vmatpush1.msra.mxu0 0.0
      %921 = vmatprep.subr.mxu0 0.0
      %922 = vmatpush1.msra.mxu0 0.0
      %923 = vmatprep.subr.mxu0 0.0
      %924 = vmatpush1.msra.mxu0 0.0
      %925 = vmatprep.subr.mxu0 0.0
      %926 = vmatpush1.msra.mxu0 0.0
      %927 = vmatprep.subr.mxu0 0.0
      %928 = vmatpush1.msra.mxu0 0.0
      %929 = vmatprep.subr.mxu0 0.0
      %930 = vmatpush1.msra.mxu0 0.0
      %931 = vmatprep.subr.mxu0 0.0
      %932 = vmatpush1.msra.mxu0 0.0
      %933 = vmatprep.subr.mxu0 0.0
      %934 = vmatpush1.msra.mxu0 0.0
      %935 = vmatprep.subr.mxu0 0.0
      %936 = vmatpush1.msra.mxu0 0.0
      %937 = vmatprep.subr.mxu0 0.0
      %938 = vmatpush1.msra.mxu0 0.0
      %939 = vmatprep.subr.mxu0 0.0
      %940 = vmatpush1.msra.mxu0 0.0
      %941 = vmatprep.subr.mxu0 0.0
      %942 = vmatpush1.msra.mxu0 0.0
      %943 = vmatprep.subr.mxu0 0.0
      %944 = vmatpush1.msra.mxu0 %v749
      %945 = vmatprep.subr.mxu0 0.0
      %946 = vmatpush1.msra.mxu0 %v748
      %947 = vmatprep.subr.mxu0 0.0
      %948 = vmatpush1.msra.mxu0 %v747
      %949 = vmatprep.subr.mxu0 0.0
      %950 = vmatpush2.msra.mxu0 0.0
      %951 = vmatprep.subr.mxu0 0.0
      %952 = vmatpush2.msra.mxu0 0.0
      %953 = vmatprep.subr.mxu0 0.0
      %954 = vmatpush2.msra.mxu0 0.0
      %955 = vmatprep.subr.mxu0 0.0
      %956 = vmatpush2.msra.mxu0 0.0
      %957 = vmatprep.subr.mxu0 0.0
      %958 = vmatpush2.msra.mxu0 0.0
      %959 = vmatprep.subr.mxu0 0.0
      %960 = vmatpush2.msra.mxu0 0.0
      %961 = vmatprep.subr.mxu0 0.0
      %962 = vmatpush2.msra.mxu0 0.0
      %963 = vmatprep.subr.mxu0 0.0
      %964 = vmatpush2.msra.mxu0 0.0
      %965 = vmatprep.subr.mxu0 0.0
      %966 = vmatpush2.msra.mxu0 0.0
      %967 = vmatprep.subr.mxu0 0.0
      %968 = vmatpush2.msra.mxu0 0.0
      %969 = vmatprep.subr.mxu0 0.0
      %970 = vmatpush2.msra.mxu0 0.0
      %971 = vmatprep.subr.mxu0 0.0
      %972 = vmatpush2.msra.mxu0 0.0
      %973 = vmatprep.subr.mxu0 0.0
      %974 = vmatpush2.msra.mxu0 0.0
      %975 = vmatprep.subr.mxu0 0.0
      %976 = vmatpush2.msra.mxu0 0.0
      %977 = vmatprep.subr.mxu0 0.0
      %978 = vmatpush2.msra.mxu0 0.0
      %979 = vmatprep.subr.mxu0 0.0
      %980 = vmatpush2.msra.mxu0 0.0
      %981 = vmatprep.mubr.f32.mxu0 0.0
      %982 = vmatmul.mubr.f32.gmra.mxu0 %v842
      %v983 = vpop.f32.mrf.mxu0
      %v984 = vadd.f32 0.0, %v983
      %v985 = vpop.f32.mrf.mxu0
      %986 = vmatprep.mubr.f32.mxu0 0.0
      %987 = vmatmul.mubr.f32.gmra.mxu0 %v845
      %v988 = vpop.f32.mrf.mxu0
      %v989 = vadd.f32 0.0, %v988
      %v990 = vpop.f32.mrf.mxu0
      %991 = vdwg.mxu0
      %993 = vset.pattern.permute.xlu0 0
      %994 = vperm.xlu0 %993, %v984
      %v995 = vpop.permute.xlu0 %994
      %998 = vset.pattern.permute.xlu0 0
      %999 = vperm.xlu0 %998, %v989
      %v1000 = vpop.permute.xlu0 %999
      %v1002 = vlaneseq
      %v1003 = vshrl.u32 %v1002, 7
      %v1004 = vsub.s32 0, %v1003
      %v1005 = vrot.slane %v914, %v1004
      %v1006 = vadd.f32 %v995, %v1005
      %v1007 = vadd.f32 %v1000, %v1005
      %vm1008 = vcmp.ge.f32.partialorder %v1006, 0.0
      %vm1009 = vcmp.ge.f32.partialorder %v1007, 0.0
      %v1010 = vmul.f32 %v1006, 0.2
      %v1011 = vmul.f32 %v1007, 0.2
      %v1012 = vsel %vm1008, %v1006, %v1010
      %v1013 = vsel %vm1009, %v1007, %v1011
      %vm1014 = vcmp.gt.f32.partialorder %v741, 0.0
      %vm1015 = vcmp.gt.f32.partialorder %v742, 0.0
      %v1016 = vsel %vm1014, %v1012, -1e+30
      %v1017 = vsel %vm1015, %v1013, -1e+30
      %vm1018 = vcmask 130048
      %v1019 = vsel %vm1018, %v1016, -inf
      %1020 = vmax.xlane.f32.xlu0 %v1019
      %v1021 = vpop.xlane.xlu0 %1020
      %v1022 = vsel %vm1018, %v1017, -inf
      %1023 = vmax.xlane.f32.xlu0 %v1022
      %v1024 = vpop.xlane.xlu0 %1023
      %v1025 = vsub.f32 %v1016, %v1021
      %v1026 = vsub.f32 %v1017, %v1024
      %v1027 = vmul.f32 %v1025, 1.442695
      %v1028 = vpow.pop %v1027
      %v1029 = vmul.f32 %v1026, 1.442695
      %v1030 = vpow.pop %v1029
      %v1031 = vmul.f32 %v1028, %v741
      %v1032 = vmul.f32 %v1030, %v742
      %v1033 = vsel %vm1018, %v1031, 0.0
      %1034 = vadd.xlane.f32.xlu0 %v1033
      %v1035 = vpop.xlane.xlu0 %1034
      %v1036 = vsel %vm1018, %v1032, 0.0
      %1037 = vadd.xlane.f32.xlu0 %v1036
      %v1038 = vpop.xlane.xlu0 %1037
      %vm1039 = vcmp.gt.f32.partialorder %v1035, 0.0
      %vm1040 = vcmp.gt.f32.partialorder %v1038, 0.0
      %v1041 = vrcp.pop %v1035
      %v1042 = vrcp.pop %v1038
      %v1043 = vsel %vm1039, %v1041, 0.0
      %v1044 = vsel %vm1040, %v1042, 0.0
      %v1045 = vmul.f32 %v1031, %v1043
      %v1046 = vmul.f32 %v1032, %v1044
      %v1048 = vsel %vm1018, %v1045, 0
      %v1051 = vsel %vm1018, %v1046, 0
      %1053 = vmatprep.subr.mxu0 0.0
      %1054 = vmatpush1.msra.mxu0 0.0
      %1055 = vmatprep.subr.mxu0 0.0
      %1056 = vmatpush1.msra.mxu0 0.0
      %1057 = vmatprep.subr.mxu0 0.0
      %1058 = vmatpush1.msra.mxu0 0.0
      %1059 = vmatprep.subr.mxu0 0.0
      %1060 = vmatpush1.msra.mxu0 0.0
      %1061 = vmatprep.subr.mxu0 0.0
      %1062 = vmatpush1.msra.mxu0 0.0
      %1063 = vmatprep.subr.mxu0 0.0
      %1064 = vmatpush1.msra.mxu0 0.0
      %1065 = vmatprep.subr.mxu0 0.0
      %1066 = vmatpush1.msra.mxu0 0.0
      %1067 = vmatprep.subr.mxu0 0.0
      %1068 = vmatpush1.msra.mxu0 0.0
      %1069 = vmatprep.subr.mxu0 0.0
      %1070 = vmatpush1.msra.mxu0 0.0
      %1071 = vmatprep.subr.mxu0 0.0
      %1072 = vmatpush1.msra.mxu0 0.0
      %1073 = vmatprep.subr.mxu0 0.0
      %1074 = vmatpush1.msra.mxu0 0.0
      %1075 = vmatprep.subr.mxu0 0.0
      %1076 = vmatpush1.msra.mxu0 0.0
      %1077 = vmatprep.subr.mxu0 0.0
      %1078 = vmatpush1.msra.mxu0 0.0
      %1079 = vmatprep.subr.mxu0 0.0
      %1080 = vmatpush1.msra.mxu0 0.0
      %1081 = vmatprep.subr.mxu0 0.0
      %1082 = vmatpush1.msra.mxu0 %v834
      %1083 = vmatprep.subr.mxu0 0.0
      %1084 = vmatpush1.msra.mxu0 %v829
      %1085 = vmatprep.subr.mxu0 0.0
      %1086 = vmatpush2.msra.mxu0 0.0
      %1087 = vmatprep.subr.mxu0 0.0
      %1088 = vmatpush2.msra.mxu0 0.0
      %1089 = vmatprep.subr.mxu0 0.0
      %1090 = vmatpush2.msra.mxu0 0.0
      %1091 = vmatprep.subr.mxu0 0.0
      %1092 = vmatpush2.msra.mxu0 0.0
      %1093 = vmatprep.subr.mxu0 0.0
      %1094 = vmatpush2.msra.mxu0 0.0
      %1095 = vmatprep.subr.mxu0 0.0
      %1096 = vmatpush2.msra.mxu0 0.0
      %1097 = vmatprep.subr.mxu0 0.0
      %1098 = vmatpush2.msra.mxu0 0.0
      %1099 = vmatprep.subr.mxu0 0.0
      %1100 = vmatpush2.msra.mxu0 0.0
      %1101 = vmatprep.subr.mxu0 0.0
      %1102 = vmatpush2.msra.mxu0 0.0
      %1103 = vmatprep.subr.mxu0 0.0
      %1104 = vmatpush2.msra.mxu0 0.0
      %1105 = vmatprep.subr.mxu0 0.0
      %1106 = vmatpush2.msra.mxu0 0.0
      %1107 = vmatprep.subr.mxu0 0.0
      %1108 = vmatpush2.msra.mxu0 0.0
      %1109 = vmatprep.subr.mxu0 0.0
      %1110 = vmatpush2.msra.mxu0 0.0
      %1111 = vmatprep.subr.mxu0 0.0
      %1112 = vmatpush2.msra.mxu0 0.0
      %1113 = vmatprep.subr.mxu0 0.0
      %1114 = vmatpush2.msra.mxu0 0.0
      %1115 = vmatprep.subr.mxu0 0.0
      %1116 = vmatpush2.msra.mxu0 0.0
      %1117 = vmatprep.mubr.f32.mxu0 0.0
      %1118 = vmatmul.mubr.f32.gmra.mxu0 %v1048
      %v1119 = vpop.f32.mrf.mxu0
      %v1120 = vadd.f32 0.0, %v1119
      %v1121 = vpop.f32.mrf.mxu0
      %1122 = vmatprep.mubr.f32.mxu0 0.0
      %1123 = vmatmul.mubr.f32.gmra.mxu0 %v1051
      %v1124 = vpop.f32.mrf.mxu0
      %v1125 = vadd.f32 0.0, %v1124
      %v1126 = vpop.f32.mrf.mxu0
      %1127 = vdwg.mxu0
      %1128 = vset.pattern.permute.xlu0 1
      %1129 = vperm.xlu0 %1128, %v984
      %v1130 = vpop.permute.xlu0 %1129
      %1132 = vset.pattern.permute.xlu0 1
      %1133 = vperm.xlu0 %1132, %v989
      %v1134 = vpop.permute.xlu0 %1133
      %v1136 = vlaneseq
      %v1137 = vshrl.u32 %v1136, 7
      %v1138 = vsub.s32 1, %v1137
      %v1139 = vrot.slane %v914, %v1138
      %v1140 = vadd.f32 %v1130, %v1139
      %v1141 = vadd.f32 %v1134, %v1139
      %vm1142 = vcmp.ge.f32.partialorder %v1140, 0.0
      %vm1143 = vcmp.ge.f32.partialorder %v1141, 0.0
      %v1144 = vmul.f32 %v1140, 0.2
      %v1145 = vmul.f32 %v1141, 0.2
      %v1146 = vsel %vm1142, %v1140, %v1144
      %v1147 = vsel %vm1143, %v1141, %v1145
      %v1148 = vsel %vm1014, %v1146, -1e+30
      %v1149 = vsel %vm1015, %v1147, -1e+30
      %v1150 = vsel %vm1018, %v1148, -inf
      %1151 = vmax.xlane.f32.xlu0 %v1150
      %v1152 = vpop.xlane.xlu0 %1151
      %v1153 = vsel %vm1018, %v1149, -inf
      %1154 = vmax.xlane.f32.xlu0 %v1153
      %v1155 = vpop.xlane.xlu0 %1154
      %v1156 = vsub.f32 %v1148, %v1152
      %v1157 = vsub.f32 %v1149, %v1155
      %v1158 = vmul.f32 %v1156, 1.442695
      %v1159 = vpow.pop %v1158
      %v1160 = vmul.f32 %v1157, 1.442695
      %v1161 = vpow.pop %v1160
      %v1162 = vmul.f32 %v1159, %v741
      %v1163 = vmul.f32 %v1161, %v742
      %v1164 = vsel %vm1018, %v1162, 0.0
      %1165 = vadd.xlane.f32.xlu0 %v1164
      %v1166 = vpop.xlane.xlu0 %1165
      %v1167 = vsel %vm1018, %v1163, 0.0
      %1168 = vadd.xlane.f32.xlu0 %v1167
      %v1169 = vpop.xlane.xlu0 %1168
      %vm1170 = vcmp.gt.f32.partialorder %v1166, 0.0
      %vm1171 = vcmp.gt.f32.partialorder %v1169, 0.0
      %v1172 = vrcp.pop %v1166
      %v1173 = vrcp.pop %v1169
      %v1174 = vsel %vm1170, %v1172, 0.0
      %v1175 = vsel %vm1171, %v1173, 0.0
      %v1176 = vmul.f32 %v1162, %v1174
      %v1177 = vmul.f32 %v1163, %v1175
      %1178 = vrot.lane.b32.xlu0 %v829, 120
      %v1179 = vpop.permute.xlu0 %1178
      %1180 = vrot.lane.b32.xlu0 %v834, 120
      %v1181 = vpop.permute.xlu0 %1180
      %v1185 = vsel %vm1018, %v1176, 0
      %v1188 = vsel %vm1018, %v1177, 0
      %1190 = vmatprep.subr.mxu0 0.0
      %1191 = vmatpush1.msra.mxu0 0.0
      %1192 = vmatprep.subr.mxu0 0.0
      %1193 = vmatpush1.msra.mxu0 0.0
      %1194 = vmatprep.subr.mxu0 0.0
      %1195 = vmatpush1.msra.mxu0 0.0
      %1196 = vmatprep.subr.mxu0 0.0
      %1197 = vmatpush1.msra.mxu0 0.0
      %1198 = vmatprep.subr.mxu0 0.0
      %1199 = vmatpush1.msra.mxu0 0.0
      %1200 = vmatprep.subr.mxu0 0.0
      %1201 = vmatpush1.msra.mxu0 0.0
      %1202 = vmatprep.subr.mxu0 0.0
      %1203 = vmatpush1.msra.mxu0 0.0
      %1204 = vmatprep.subr.mxu0 0.0
      %1205 = vmatpush1.msra.mxu0 0.0
      %1206 = vmatprep.subr.mxu0 0.0
      %1207 = vmatpush1.msra.mxu0 0.0
      %1208 = vmatprep.subr.mxu0 0.0
      %1209 = vmatpush1.msra.mxu0 0.0
      %1210 = vmatprep.subr.mxu0 0.0
      %1211 = vmatpush1.msra.mxu0 0.0
      %1212 = vmatprep.subr.mxu0 0.0
      %1213 = vmatpush1.msra.mxu0 0.0
      %1214 = vmatprep.subr.mxu0 0.0
      %1215 = vmatpush1.msra.mxu0 0.0
      %1216 = vmatprep.subr.mxu0 0.0
      %1217 = vmatpush1.msra.mxu0 0.0
      %1218 = vmatprep.subr.mxu0 0.0
      %1219 = vmatpush1.msra.mxu0 %v1181
      %1220 = vmatprep.subr.mxu0 0.0
      %1221 = vmatpush1.msra.mxu0 %v1179
      %1222 = vmatprep.subr.mxu0 0.0
      %1223 = vmatpush2.msra.mxu0 0.0
      %1224 = vmatprep.subr.mxu0 0.0
      %1225 = vmatpush2.msra.mxu0 0.0
      %1226 = vmatprep.subr.mxu0 0.0
      %1227 = vmatpush2.msra.mxu0 0.0
      %1228 = vmatprep.subr.mxu0 0.0
      %1229 = vmatpush2.msra.mxu0 0.0
      %1230 = vmatprep.subr.mxu0 0.0
      %1231 = vmatpush2.msra.mxu0 0.0
      %1232 = vmatprep.subr.mxu0 0.0
      %1233 = vmatpush2.msra.mxu0 0.0
      %1234 = vmatprep.subr.mxu0 0.0
      %1235 = vmatpush2.msra.mxu0 0.0
      %1236 = vmatprep.subr.mxu0 0.0
      %1237 = vmatpush2.msra.mxu0 0.0
      %1238 = vmatprep.subr.mxu0 0.0
      %1239 = vmatpush2.msra.mxu0 0.0
      %1240 = vmatprep.subr.mxu0 0.0
      %1241 = vmatpush2.msra.mxu0 0.0
      %1242 = vmatprep.subr.mxu0 0.0
      %1243 = vmatpush2.msra.mxu0 0.0
      %1244 = vmatprep.subr.mxu0 0.0
      %1245 = vmatpush2.msra.mxu0 0.0
      %1246 = vmatprep.subr.mxu0 0.0
      %1247 = vmatpush2.msra.mxu0 0.0
      %1248 = vmatprep.subr.mxu0 0.0
      %1249 = vmatpush2.msra.mxu0 0.0
      %1250 = vmatprep.subr.mxu0 0.0
      %1251 = vmatpush2.msra.mxu0 0.0
      %1252 = vmatprep.subr.mxu0 0.0
      %1253 = vmatpush2.msra.mxu0 0.0
      %1254 = vmatprep.mubr.f32.mxu0 0.0
      %1255 = vmatmul.mubr.f32.gmra.mxu0 %v1185
      %v1256 = vpop.f32.mrf.mxu0
      %v1257 = vadd.f32 0.0, %v1256
      %v1258 = vpop.f32.mrf.mxu0
      %1259 = vmatprep.mubr.f32.mxu0 0.0
      %1260 = vmatmul.mubr.f32.gmra.mxu0 %v1188
      %v1261 = vpop.f32.mrf.mxu0
      %v1262 = vadd.f32 0.0, %v1261
      %v1263 = vpop.f32.mrf.mxu0
      %1264 = vdwg.mxu0
      %1265 = vset.pattern.permute.xlu0 2
      %1266 = vperm.xlu0 %1265, %v984
      %v1267 = vpop.permute.xlu0 %1266
      %1269 = vset.pattern.permute.xlu0 2
      %1270 = vperm.xlu0 %1269, %v989
      %v1271 = vpop.permute.xlu0 %1270
      %v1273 = vlaneseq
      %v1274 = vshrl.u32 %v1273, 7
      %v1275 = vsub.s32 2, %v1274
      %v1276 = vrot.slane %v914, %v1275
      %v1277 = vadd.f32 %v1267, %v1276
      %v1278 = vadd.f32 %v1271, %v1276
      %vm1279 = vcmp.ge.f32.partialorder %v1277, 0.0
      %vm1280 = vcmp.ge.f32.partialorder %v1278, 0.0
      %v1281 = vmul.f32 %v1277, 0.2
      %v1282 = vmul.f32 %v1278, 0.2
      %v1283 = vsel %vm1279, %v1277, %v1281
      %v1284 = vsel %vm1280, %v1278, %v1282
      %v1285 = vsel %vm1014, %v1283, -1e+30
      %v1286 = vsel %vm1015, %v1284, -1e+30
      %v1287 = vsel %vm1018, %v1285, -inf
      %1288 = vmax.xlane.f32.xlu0 %v1287
      %v1289 = vpop.xlane.xlu0 %1288
      %v1290 = vsel %vm1018, %v1286, -inf
      %1291 = vmax.xlane.f32.xlu0 %v1290
      %v1292 = vpop.xlane.xlu0 %1291
      %v1293 = vsub.f32 %v1285, %v1289
      %v1294 = vsub.f32 %v1286, %v1292
      %v1295 = vmul.f32 %v1293, 1.442695
      %v1296 = vpow.pop %v1295
      %v1297 = vmul.f32 %v1294, 1.442695
      %v1298 = vpow.pop %v1297
      %v1299 = vmul.f32 %v1296, %v741
      %v1300 = vmul.f32 %v1298, %v742
      %v1301 = vsel %vm1018, %v1299, 0.0
      %1302 = vadd.xlane.f32.xlu0 %v1301
      %v1303 = vpop.xlane.xlu0 %1302
      %v1304 = vsel %vm1018, %v1300, 0.0
      %1305 = vadd.xlane.f32.xlu0 %v1304
      %v1306 = vpop.xlane.xlu0 %1305
      %vm1307 = vcmp.gt.f32.partialorder %v1303, 0.0
      %vm1308 = vcmp.gt.f32.partialorder %v1306, 0.0
      %v1309 = vrcp.pop %v1303
      %v1310 = vrcp.pop %v1306
      %v1311 = vsel %vm1307, %v1309, 0.0
      %v1312 = vsel %vm1308, %v1310, 0.0
      %v1313 = vmul.f32 %v1299, %v1311
      %v1314 = vmul.f32 %v1300, %v1312
      %1315 = vrot.lane.b32.xlu0 %v829, 112
      %v1316 = vpop.permute.xlu0 %1315
      %1317 = vrot.lane.b32.xlu0 %v834, 112
      %v1318 = vpop.permute.xlu0 %1317
      %v1322 = vsel %vm1018, %v1313, 0
      %v1325 = vsel %vm1018, %v1314, 0
      %1327 = vmatprep.subr.mxu0 0.0
      %1328 = vmatpush1.msra.mxu0 0.0
      %1329 = vmatprep.subr.mxu0 0.0
      %1330 = vmatpush1.msra.mxu0 0.0
      %1331 = vmatprep.subr.mxu0 0.0
      %1332 = vmatpush1.msra.mxu0 0.0
      %1333 = vmatprep.subr.mxu0 0.0
      %1334 = vmatpush1.msra.mxu0 0.0
      %1335 = vmatprep.subr.mxu0 0.0
      %1336 = vmatpush1.msra.mxu0 0.0
      %1337 = vmatprep.subr.mxu0 0.0
      %1338 = vmatpush1.msra.mxu0 0.0
      %1339 = vmatprep.subr.mxu0 0.0
      %1340 = vmatpush1.msra.mxu0 0.0
      %1341 = vmatprep.subr.mxu0 0.0
      %1342 = vmatpush1.msra.mxu0 0.0
      %1343 = vmatprep.subr.mxu0 0.0
      %1344 = vmatpush1.msra.mxu0 0.0
      %1345 = vmatprep.subr.mxu0 0.0
      %1346 = vmatpush1.msra.mxu0 0.0
      %1347 = vmatprep.subr.mxu0 0.0
      %1348 = vmatpush1.msra.mxu0 0.0
      %1349 = vmatprep.subr.mxu0 0.0
      %1350 = vmatpush1.msra.mxu0 0.0
      %1351 = vmatprep.subr.mxu0 0.0
      %1352 = vmatpush1.msra.mxu0 0.0
      %1353 = vmatprep.subr.mxu0 0.0
      %1354 = vmatpush1.msra.mxu0 0.0
      %1355 = vmatprep.subr.mxu0 0.0
      %1356 = vmatpush1.msra.mxu0 %v1318
      %1357 = vmatprep.subr.mxu0 0.0
      %1358 = vmatpush1.msra.mxu0 %v1316
      %1359 = vmatprep.subr.mxu0 0.0
      %1360 = vmatpush2.msra.mxu0 0.0
      %1361 = vmatprep.subr.mxu0 0.0
      %1362 = vmatpush2.msra.mxu0 0.0
      %1363 = vmatprep.subr.mxu0 0.0
      %1364 = vmatpush2.msra.mxu0 0.0
      %1365 = vmatprep.subr.mxu0 0.0
      %1366 = vmatpush2.msra.mxu0 0.0
      %1367 = vmatprep.subr.mxu0 0.0
      %1368 = vmatpush2.msra.mxu0 0.0
      %1369 = vmatprep.subr.mxu0 0.0
      %1370 = vmatpush2.msra.mxu0 0.0
      %1371 = vmatprep.subr.mxu0 0.0
      %1372 = vmatpush2.msra.mxu0 0.0
      %1373 = vmatprep.subr.mxu0 0.0
      %1374 = vmatpush2.msra.mxu0 0.0
      %1375 = vmatprep.subr.mxu0 0.0
      %1376 = vmatpush2.msra.mxu0 0.0
      %1377 = vmatprep.subr.mxu0 0.0
      %1378 = vmatpush2.msra.mxu0 0.0
      %1379 = vmatprep.subr.mxu0 0.0
      %1380 = vmatpush2.msra.mxu0 0.0
      %1381 = vmatprep.subr.mxu0 0.0
      %1382 = vmatpush2.msra.mxu0 0.0
      %1383 = vmatprep.subr.mxu0 0.0
      %1384 = vmatpush2.msra.mxu0 0.0
      %1385 = vmatprep.subr.mxu0 0.0
      %1386 = vmatpush2.msra.mxu0 0.0
      %1387 = vmatprep.subr.mxu0 0.0
      %1388 = vmatpush2.msra.mxu0 0.0
      %1389 = vmatprep.subr.mxu0 0.0
      %1390 = vmatpush2.msra.mxu0 0.0
      %1391 = vmatprep.mubr.f32.mxu0 0.0
      %1392 = vmatmul.mubr.f32.gmra.mxu0 %v1322
      %v1393 = vpop.f32.mrf.mxu0
      %v1394 = vadd.f32 0.0, %v1393
      %v1395 = vpop.f32.mrf.mxu0
      %1396 = vmatprep.mubr.f32.mxu0 0.0
      %1397 = vmatmul.mubr.f32.gmra.mxu0 %v1325
      %v1398 = vpop.f32.mrf.mxu0
      %v1399 = vadd.f32 0.0, %v1398
      %v1400 = vpop.f32.mrf.mxu0
      %1401 = vdwg.mxu0
      %1404 = vrot.lane.b32.xlu0 %v1257, 8
      %v1405 = vpop.permute.xlu0 %1404
      %1406 = vrot.lane.b32.xlu0 %v1262, 8
      %v1407 = vpop.permute.xlu0 %1406
      %1412 = vrot.lane.b32.xlu0 %v1394, 16
      %v1413 = vpop.permute.xlu0 %1412
      %1414 = vrot.lane.b32.xlu0 %v1399, 16
      %v1415 = vpop.permute.xlu0 %1414
      %vm1418 = vcmask 64512
      %v1419 = vsel %vm1418, %v1120, %v1405
      %v1420 = vsel %vm1418, %v1125, %v1407
      %v1421 = vsel %vm1018, %v1419, %v1413
      %v1422 = vsel %vm1018, %v1420, %v1415
      %v1424 = vlaneseq
      %v1425 = vshrl.u32 %v1424, 7
      %v1426 = vsub.s32 0, %v1425
      %v1427 = vrot.slane %v750, %v1426
      %v1429 = vadd.f32 %v1421, %v1427
      %v1430 = vadd.f32 %v1422, %v1427
      %vm1431 = vcmp.ge.f32.partialorder %v1429, 0.0
      %vm1432 = vcmp.ge.f32.partialorder %v1430, 0.0
      %v1433 = vmul.f32 %v1429, 0.01
      %v1434 = vmul.f32 %v1430, 0.01
      %v1435 = vsel %vm1431, %v1429, %v1433
      %v1436 = vsel %vm1432, %v1430, %v1434
      %v1437 = vld [vmem:[%s702] sm:$0xff]
      %v1438 = vld [vmem:[%s702 + $0x8] sm:$0xff]
      %v1439 = vld [vmem:[%s702 + $0x10] sm:$0xff]
      %v1440 = vld [vmem:[%s706] sm:$0x7]
      %v1441 = vld [vmem:[%s711] sm:$0xff]
      %v1442 = vld [vmem:[%s711 + $0x8] sm:$0xff]
      %v1443 = vld [vmem:[%s711 + $0x10] sm:$0xff]
      %v1444 = vld [vmem:[%s714] sm:$0x1]
      %v1446 = vsel %vm837, %v1435, 0
      %v1449 = vsel %vm837, %v1436, 0
      %1451 = vmatprep.subr.mxu0 0.0
      %1452 = vmatpush1.msra.mxu0 0.0
      %1453 = vmatprep.subr.mxu0 0.0
      %1454 = vmatpush1.msra.mxu0 0.0
      %1455 = vmatprep.subr.mxu0 0.0
      %1456 = vmatpush1.msra.mxu0 0.0
      %1457 = vmatprep.subr.mxu0 0.0
      %1458 = vmatpush1.msra.mxu0 0.0
      %1459 = vmatprep.subr.mxu0 0.0
      %1460 = vmatpush1.msra.mxu0 0.0
      %1461 = vmatprep.subr.mxu0 0.0
      %1462 = vmatpush1.msra.mxu0 0.0
      %1463 = vmatprep.subr.mxu0 0.0
      %1464 = vmatpush1.msra.mxu0 0.0
      %1465 = vmatprep.subr.mxu0 0.0
      %1466 = vmatpush1.msra.mxu0 0.0
      %1467 = vmatprep.subr.mxu0 0.0
      %1468 = vmatpush1.msra.mxu0 0.0
      %1469 = vmatprep.subr.mxu0 0.0
      %1470 = vmatpush1.msra.mxu0 0.0
      %1471 = vmatprep.subr.mxu0 0.0
      %1472 = vmatpush1.msra.mxu0 0.0
      %1473 = vmatprep.subr.mxu0 0.0
      %1474 = vmatpush1.msra.mxu0 0.0
      %1475 = vmatprep.subr.mxu0 0.0
      %1476 = vmatpush1.msra.mxu0 0.0
      %1477 = vmatprep.subr.mxu0 0.0
      %1478 = vmatpush1.msra.mxu0 %v1439
      %1479 = vmatprep.subr.mxu0 0.0
      %1480 = vmatpush1.msra.mxu0 %v1438
      %1481 = vmatprep.subr.mxu0 0.0
      %1482 = vmatpush1.msra.mxu0 %v1437
      %1483 = vmatprep.subr.mxu0 0.0
      %1484 = vmatpush2.msra.mxu0 0.0
      %1485 = vmatprep.subr.mxu0 0.0
      %1486 = vmatpush2.msra.mxu0 0.0
      %1487 = vmatprep.subr.mxu0 0.0
      %1488 = vmatpush2.msra.mxu0 0.0
      %1489 = vmatprep.subr.mxu0 0.0
      %1490 = vmatpush2.msra.mxu0 0.0
      %1491 = vmatprep.subr.mxu0 0.0
      %1492 = vmatpush2.msra.mxu0 0.0
      %1493 = vmatprep.subr.mxu0 0.0
      %1494 = vmatpush2.msra.mxu0 0.0
      %1495 = vmatprep.subr.mxu0 0.0
      %1496 = vmatpush2.msra.mxu0 0.0
      %1497 = vmatprep.subr.mxu0 0.0
      %1498 = vmatpush2.msra.mxu0 0.0
      %1499 = vmatprep.subr.mxu0 0.0
      %1500 = vmatpush2.msra.mxu0 0.0
      %1501 = vmatprep.subr.mxu0 0.0
      %1502 = vmatpush2.msra.mxu0 0.0
      %1503 = vmatprep.subr.mxu0 0.0
      %1504 = vmatpush2.msra.mxu0 0.0
      %1505 = vmatprep.subr.mxu0 0.0
      %1506 = vmatpush2.msra.mxu0 0.0
      %1507 = vmatprep.subr.mxu0 0.0
      %1508 = vmatpush2.msra.mxu0 0.0
      %1509 = vmatprep.subr.mxu0 0.0
      %1510 = vmatpush2.msra.mxu0 0.0
      %1511 = vmatprep.subr.mxu0 0.0
      %1512 = vmatpush2.msra.mxu0 0.0
      %1513 = vmatprep.subr.mxu0 0.0
      %1514 = vmatpush2.msra.mxu0 0.0
      %1515 = vmatprep.mubr.f32.mxu0 0.0
      %1516 = vmatmul.mubr.f32.gmra.mxu0 %v1446
      %v1517 = vpop.f32.mrf.mxu0
      %v1518 = vadd.f32 0.0, %v1517
      %v1519 = vpop.f32.mrf.mxu0
      %1520 = vmatprep.mubr.f32.mxu0 0.0
      %1521 = vmatmul.mubr.f32.gmra.mxu0 %v1449
      %v1522 = vpop.f32.mrf.mxu0
      %v1523 = vadd.f32 0.0, %v1522
      %v1524 = vpop.f32.mrf.mxu0
      %1525 = vdwg.mxu0
      %v1527 = vsel %vm837, %v1440, 0
      %v1530 = vsel %vm837, %v1518, 0
      %v1533 = vsel %vm837, %v1523, 0
      %1535 = vmatprep.subr.mxu0 0.0
      %1536 = vmatpush1.xpose.msra.mxu0 0.0
      %1537 = vmatprep.subr.mxu0 0.0
      %1538 = vmatpush1.xpose.msra.mxu0 0.0
      %1539 = vmatprep.subr.mxu0 0.0
      %1540 = vmatpush1.xpose.msra.mxu0 0.0
      %1541 = vmatprep.subr.mxu0 0.0
      %1542 = vmatpush1.xpose.msra.mxu0 0.0
      %1543 = vmatprep.subr.mxu0 0.0
      %1544 = vmatpush1.xpose.msra.mxu0 0.0
      %1545 = vmatprep.subr.mxu0 0.0
      %1546 = vmatpush1.xpose.msra.mxu0 0.0
      %1547 = vmatprep.subr.mxu0 0.0
      %1548 = vmatpush1.xpose.msra.mxu0 0.0
      %1549 = vmatprep.subr.mxu0 0.0
      %1550 = vmatpush1.xpose.msra.mxu0 0.0
      %1551 = vmatprep.subr.mxu0 0.0
      %1552 = vmatpush1.xpose.msra.mxu0 0.0
      %1553 = vmatprep.subr.mxu0 0.0
      %1554 = vmatpush1.xpose.msra.mxu0 0.0
      %1555 = vmatprep.subr.mxu0 0.0
      %1556 = vmatpush1.xpose.msra.mxu0 0.0
      %1557 = vmatprep.subr.mxu0 0.0
      %1558 = vmatpush1.xpose.msra.mxu0 0.0
      %1559 = vmatprep.subr.mxu0 0.0
      %1560 = vmatpush1.xpose.msra.mxu0 0.0
      %1561 = vmatprep.subr.mxu0 0.0
      %1562 = vmatpush1.xpose.msra.mxu0 0.0
      %1563 = vmatprep.subr.mxu0 0.0
      %1564 = vmatpush1.xpose.msra.mxu0 %v1533
      %1565 = vmatprep.subr.mxu0 0.0
      %1566 = vmatpush1.xpose.msra.mxu0 %v1530
      %1567 = vmatprep.subr.mxu0 0.0
      %1568 = vmatpush2.xpose.msra.mxu0 0.0
      %1569 = vmatprep.subr.mxu0 0.0
      %1570 = vmatpush2.xpose.msra.mxu0 0.0
      %1571 = vmatprep.subr.mxu0 0.0
      %1572 = vmatpush2.xpose.msra.mxu0 0.0
      %1573 = vmatprep.subr.mxu0 0.0
      %1574 = vmatpush2.xpose.msra.mxu0 0.0
      %1575 = vmatprep.subr.mxu0 0.0
      %1576 = vmatpush2.xpose.msra.mxu0 0.0
      %1577 = vmatprep.subr.mxu0 0.0
      %1578 = vmatpush2.xpose.msra.mxu0 0.0
      %1579 = vmatprep.subr.mxu0 0.0
      %1580 = vmatpush2.xpose.msra.mxu0 0.0
      %1581 = vmatprep.subr.mxu0 0.0
      %1582 = vmatpush2.xpose.msra.mxu0 0.0
      %1583 = vmatprep.subr.mxu0 0.0
      %1584 = vmatpush2.xpose.msra.mxu0 0.0
      %1585 = vmatprep.subr.mxu0 0.0
      %1586 = vmatpush2.xpose.msra.mxu0 0.0
      %1587 = vmatprep.subr.mxu0 0.0
      %1588 = vmatpush2.xpose.msra.mxu0 0.0
      %1589 = vmatprep.subr.mxu0 0.0
      %1590 = vmatpush2.xpose.msra.mxu0 0.0
      %1591 = vmatprep.subr.mxu0 0.0
      %1592 = vmatpush2.xpose.msra.mxu0 0.0
      %1593 = vmatprep.subr.mxu0 0.0
      %1594 = vmatpush2.xpose.msra.mxu0 0.0
      %1595 = vmatprep.subr.mxu0 0.0
      %1596 = vmatpush2.xpose.msra.mxu0 0.0
      %1597 = vmatprep.subr.mxu0 0.0
      %1598 = vmatpush2.xpose.msra.mxu0 0.0
      %1599 = vmatprep.mubr.f32.mxu0 0.0
      %1600 = vmatmul.mubr.f32.gmra.mxu0 %v1527
      %v1601 = vpop.f32.mrf.mxu0
      %v1602 = vadd.f32 0.0, %v1601
      %v1603 = vpop.f32.mrf.mxu0
      %1604 = vdwg.mxu0
      %1605 = vmatprep.subr.mxu0 0.0
      %1606 = vmatpush1.msra.mxu0 0.0
      %1607 = vmatprep.subr.mxu0 0.0
      %1608 = vmatpush1.msra.mxu0 0.0
      %1609 = vmatprep.subr.mxu0 0.0
      %1610 = vmatpush1.msra.mxu0 0.0
      %1611 = vmatprep.subr.mxu0 0.0
      %1612 = vmatpush1.msra.mxu0 0.0
      %1613 = vmatprep.subr.mxu0 0.0
      %1614 = vmatpush1.msra.mxu0 0.0
      %1615 = vmatprep.subr.mxu0 0.0
      %1616 = vmatpush1.msra.mxu0 0.0
      %1617 = vmatprep.subr.mxu0 0.0
      %1618 = vmatpush1.msra.mxu0 0.0
      %1619 = vmatprep.subr.mxu0 0.0
      %1620 = vmatpush1.msra.mxu0 0.0
      %1621 = vmatprep.subr.mxu0 0.0
      %1622 = vmatpush1.msra.mxu0 0.0
      %1623 = vmatprep.subr.mxu0 0.0
      %1624 = vmatpush1.msra.mxu0 0.0
      %1625 = vmatprep.subr.mxu0 0.0
      %1626 = vmatpush1.msra.mxu0 0.0
      %1627 = vmatprep.subr.mxu0 0.0
      %1628 = vmatpush1.msra.mxu0 0.0
      %1629 = vmatprep.subr.mxu0 0.0
      %1630 = vmatpush1.msra.mxu0 0.0
      %1631 = vmatprep.subr.mxu0 0.0
      %1632 = vmatpush1.msra.mxu0 %v1443
      %1633 = vmatprep.subr.mxu0 0.0
      %1634 = vmatpush1.msra.mxu0 %v1442
      %1635 = vmatprep.subr.mxu0 0.0
      %1636 = vmatpush1.msra.mxu0 %v1441
      %1637 = vmatprep.subr.mxu0 0.0
      %1638 = vmatpush2.msra.mxu0 0.0
      %1639 = vmatprep.subr.mxu0 0.0
      %1640 = vmatpush2.msra.mxu0 0.0
      %1641 = vmatprep.subr.mxu0 0.0
      %1642 = vmatpush2.msra.mxu0 0.0
      %1643 = vmatprep.subr.mxu0 0.0
      %1644 = vmatpush2.msra.mxu0 0.0
      %1645 = vmatprep.subr.mxu0 0.0
      %1646 = vmatpush2.msra.mxu0 0.0
      %1647 = vmatprep.subr.mxu0 0.0
      %1648 = vmatpush2.msra.mxu0 0.0
      %1649 = vmatprep.subr.mxu0 0.0
      %1650 = vmatpush2.msra.mxu0 0.0
      %1651 = vmatprep.subr.mxu0 0.0
      %1652 = vmatpush2.msra.mxu0 0.0
      %1653 = vmatprep.subr.mxu0 0.0
      %1654 = vmatpush2.msra.mxu0 0.0
      %1655 = vmatprep.subr.mxu0 0.0
      %1656 = vmatpush2.msra.mxu0 0.0
      %1657 = vmatprep.subr.mxu0 0.0
      %1658 = vmatpush2.msra.mxu0 0.0
      %1659 = vmatprep.subr.mxu0 0.0
      %1660 = vmatpush2.msra.mxu0 0.0
      %1661 = vmatprep.subr.mxu0 0.0
      %1662 = vmatpush2.msra.mxu0 0.0
      %1663 = vmatprep.subr.mxu0 0.0
      %1664 = vmatpush2.msra.mxu0 0.0
      %1665 = vmatprep.subr.mxu0 0.0
      %1666 = vmatpush2.msra.mxu0 0.0
      %1667 = vmatprep.subr.mxu0 0.0
      %1668 = vmatpush2.msra.mxu0 0.0
      %1669 = vmatprep.mubr.f32.mxu0 0.0
      %1670 = vmatmul.mubr.f32.gmra.mxu0 %v1530
      %v1671 = vpop.f32.mrf.mxu0
      %v1672 = vadd.f32 0.0, %v1671
      %v1673 = vpop.f32.mrf.mxu0
      %1674 = vmatprep.mubr.f32.mxu0 0.0
      %1675 = vmatmul.mubr.f32.gmra.mxu0 %v1533
      %v1676 = vpop.f32.mrf.mxu0
      %v1677 = vadd.f32 0.0, %v1676
      %v1678 = vpop.f32.mrf.mxu0
      %1679 = vdwg.mxu0
      %1681 = vset.pattern.permute.xlu0 0
      %1682 = vperm.xlu0 %1681, %v1672
      %v1683 = vpop.permute.xlu0 %1682
      %1686 = vset.pattern.permute.xlu0 0
      %1687 = vperm.xlu0 %1686, %v1677
      %v1688 = vpop.permute.xlu0 %1687
      %v1690 = vlaneseq
      %v1691 = vshrl.u32 %v1690, 7
      %v1692 = vsub.s32 0, %v1691
      %v1693 = vrot.slane %v1602, %v1692
      %v1694 = vadd.f32 %v1683, %v1693
      %v1695 = vadd.f32 %v1688, %v1693
      %vm1696 = vcmp.ge.f32.partialorder %v1694, 0.0
      %vm1697 = vcmp.ge.f32.partialorder %v1695, 0.0
      %v1698 = vmul.f32 %v1694, 0.2
      %v1699 = vmul.f32 %v1695, 0.2
      %v1700 = vsel %vm1696, %v1694, %v1698
      %v1701 = vsel %vm1697, %v1695, %v1699
      %v1702 = vsel %vm1014, %v1700, -1e+30
      %v1703 = vsel %vm1015, %v1701, -1e+30
      %v1704 = vsel %vm1018, %v1702, -inf
      %1705 = vmax.xlane.f32.xlu0 %v1704
      %v1706 = vpop.xlane.xlu0 %1705
      %v1707 = vsel %vm1018, %v1703, -inf
      %1708 = vmax.xlane.f32.xlu0 %v1707
      %v1709 = vpop.xlane.xlu0 %1708
      %v1710 = vsub.f32 %v1702, %v1706
      %v1711 = vsub.f32 %v1703, %v1709
      %v1712 = vmul.f32 %v1710, 1.442695
      %v1713 = vpow.pop %v1712
      %v1714 = vmul.f32 %v1711, 1.442695
      %v1715 = vpow.pop %v1714
      %v1716 = vmul.f32 %v1713, %v741
      %v1717 = vmul.f32 %v1715, %v742
      %v1718 = vsel %vm1018, %v1716, 0.0
      %1719 = vadd.xlane.f32.xlu0 %v1718
      %v1720 = vpop.xlane.xlu0 %1719
      %v1721 = vsel %vm1018, %v1717, 0.0
      %1722 = vadd.xlane.f32.xlu0 %v1721
      %v1723 = vpop.xlane.xlu0 %1722
      %vm1724 = vcmp.gt.f32.partialorder %v1720, 0.0
      %vm1725 = vcmp.gt.f32.partialorder %v1723, 0.0
      %v1726 = vrcp.pop %v1720
      %v1727 = vrcp.pop %v1723
      %v1728 = vsel %vm1724, %v1726, 0.0
      %v1729 = vsel %vm1725, %v1727, 0.0
      %v1730 = vmul.f32 %v1716, %v1728
      %v1731 = vmul.f32 %v1717, %v1729
      %v1733 = vsel %vm1018, %v1730, 0
      %v1736 = vsel %vm1018, %v1731, 0
      %1738 = vmatprep.subr.mxu0 0.0
      %1739 = vmatpush1.msra.mxu0 0.0
      %1740 = vmatprep.subr.mxu0 0.0
      %1741 = vmatpush1.msra.mxu0 0.0
      %1742 = vmatprep.subr.mxu0 0.0
      %1743 = vmatpush1.msra.mxu0 0.0
      %1744 = vmatprep.subr.mxu0 0.0
      %1745 = vmatpush1.msra.mxu0 0.0
      %1746 = vmatprep.subr.mxu0 0.0
      %1747 = vmatpush1.msra.mxu0 0.0
      %1748 = vmatprep.subr.mxu0 0.0
      %1749 = vmatpush1.msra.mxu0 0.0
      %1750 = vmatprep.subr.mxu0 0.0
      %1751 = vmatpush1.msra.mxu0 0.0
      %1752 = vmatprep.subr.mxu0 0.0
      %1753 = vmatpush1.msra.mxu0 0.0
      %1754 = vmatprep.subr.mxu0 0.0
      %1755 = vmatpush1.msra.mxu0 0.0
      %1756 = vmatprep.subr.mxu0 0.0
      %1757 = vmatpush1.msra.mxu0 0.0
      %1758 = vmatprep.subr.mxu0 0.0
      %1759 = vmatpush1.msra.mxu0 0.0
      %1760 = vmatprep.subr.mxu0 0.0
      %1761 = vmatpush1.msra.mxu0 0.0
      %1762 = vmatprep.subr.mxu0 0.0
      %1763 = vmatpush1.msra.mxu0 0.0
      %1764 = vmatprep.subr.mxu0 0.0
      %1765 = vmatpush1.msra.mxu0 0.0
      %1766 = vmatprep.subr.mxu0 0.0
      %1767 = vmatpush1.msra.mxu0 %v1523
      %1768 = vmatprep.subr.mxu0 0.0
      %1769 = vmatpush1.msra.mxu0 %v1518
      %1770 = vmatprep.subr.mxu0 0.0
      %1771 = vmatpush2.msra.mxu0 0.0
      %1772 = vmatprep.subr.mxu0 0.0
      %1773 = vmatpush2.msra.mxu0 0.0
      %1774 = vmatprep.subr.mxu0 0.0
      %1775 = vmatpush2.msra.mxu0 0.0
      %1776 = vmatprep.subr.mxu0 0.0
      %1777 = vmatpush2.msra.mxu0 0.0
      %1778 = vmatprep.subr.mxu0 0.0
      %1779 = vmatpush2.msra.mxu0 0.0
      %1780 = vmatprep.subr.mxu0 0.0
      %1781 = vmatpush2.msra.mxu0 0.0
      %1782 = vmatprep.subr.mxu0 0.0
      %1783 = vmatpush2.msra.mxu0 0.0
      %1784 = vmatprep.subr.mxu0 0.0
      %1785 = vmatpush2.msra.mxu0 0.0
      %1786 = vmatprep.subr.mxu0 0.0
      %1787 = vmatpush2.msra.mxu0 0.0
      %1788 = vmatprep.subr.mxu0 0.0
      %1789 = vmatpush2.msra.mxu0 0.0
      %1790 = vmatprep.subr.mxu0 0.0
      %1791 = vmatpush2.msra.mxu0 0.0
      %1792 = vmatprep.subr.mxu0 0.0
      %1793 = vmatpush2.msra.mxu0 0.0
      %1794 = vmatprep.subr.mxu0 0.0
      %1795 = vmatpush2.msra.mxu0 0.0
      %1796 = vmatprep.subr.mxu0 0.0
      %1797 = vmatpush2.msra.mxu0 0.0
      %1798 = vmatprep.subr.mxu0 0.0
      %1799 = vmatpush2.msra.mxu0 0.0
      %1800 = vmatprep.subr.mxu0 0.0
      %1801 = vmatpush2.msra.mxu0 0.0
      %1802 = vmatprep.mubr.f32.mxu0 0.0
      %1803 = vmatmul.mubr.f32.gmra.mxu0 %v1733
      %v1804 = vpop.f32.mrf.mxu0
      %v1805 = vadd.f32 0.0, %v1804
      %v1806 = vpop.f32.mrf.mxu0
      %1807 = vmatprep.mubr.f32.mxu0 0.0
      %1808 = vmatmul.mubr.f32.gmra.mxu0 %v1736
      %v1809 = vpop.f32.mrf.mxu0
      %v1810 = vadd.f32 0.0, %v1809
      %v1811 = vpop.f32.mrf.mxu0
      %1812 = vdwg.mxu0
      %1813 = vset.pattern.permute.xlu0 1
      %1814 = vperm.xlu0 %1813, %v1672
      %v1815 = vpop.permute.xlu0 %1814
      %1817 = vset.pattern.permute.xlu0 1
      %1818 = vperm.xlu0 %1817, %v1677
      %v1819 = vpop.permute.xlu0 %1818
      %v1821 = vlaneseq
      %v1822 = vshrl.u32 %v1821, 7
      %v1823 = vsub.s32 1, %v1822
      %v1824 = vrot.slane %v1602, %v1823
      %v1825 = vadd.f32 %v1815, %v1824
      %v1826 = vadd.f32 %v1819, %v1824
      %vm1827 = vcmp.ge.f32.partialorder %v1825, 0.0
      %vm1828 = vcmp.ge.f32.partialorder %v1826, 0.0
      %v1829 = vmul.f32 %v1825, 0.2
      %v1830 = vmul.f32 %v1826, 0.2
      %v1831 = vsel %vm1827, %v1825, %v1829
      %v1832 = vsel %vm1828, %v1826, %v1830
      %v1833 = vsel %vm1014, %v1831, -1e+30
      %v1834 = vsel %vm1015, %v1832, -1e+30
      %v1835 = vsel %vm1018, %v1833, -inf
      %1836 = vmax.xlane.f32.xlu0 %v1835
      %v1837 = vpop.xlane.xlu0 %1836
      %v1838 = vsel %vm1018, %v1834, -inf
      %1839 = vmax.xlane.f32.xlu0 %v1838
      %v1840 = vpop.xlane.xlu0 %1839
      %v1841 = vsub.f32 %v1833, %v1837
      %v1842 = vsub.f32 %v1834, %v1840
      %v1843 = vmul.f32 %v1841, 1.442695
      %v1844 = vpow.pop %v1843
      %v1845 = vmul.f32 %v1842, 1.442695
      %v1846 = vpow.pop %v1845
      %v1847 = vmul.f32 %v1844, %v741
      %v1848 = vmul.f32 %v1846, %v742
      %v1849 = vsel %vm1018, %v1847, 0.0
      %1850 = vadd.xlane.f32.xlu0 %v1849
      %v1851 = vpop.xlane.xlu0 %1850
      %v1852 = vsel %vm1018, %v1848, 0.0
      %1853 = vadd.xlane.f32.xlu0 %v1852
      %v1854 = vpop.xlane.xlu0 %1853
      %vm1855 = vcmp.gt.f32.partialorder %v1851, 0.0
      %vm1856 = vcmp.gt.f32.partialorder %v1854, 0.0
      %v1857 = vrcp.pop %v1851
      %v1858 = vrcp.pop %v1854
      %v1859 = vsel %vm1855, %v1857, 0.0
      %v1860 = vsel %vm1856, %v1858, 0.0
      %v1861 = vmul.f32 %v1847, %v1859
      %v1862 = vmul.f32 %v1848, %v1860
      %1863 = vrot.lane.b32.xlu0 %v1518, 120
      %v1864 = vpop.permute.xlu0 %1863
      %1865 = vrot.lane.b32.xlu0 %v1523, 120
      %v1866 = vpop.permute.xlu0 %1865
      %v1870 = vsel %vm1018, %v1861, 0
      %v1873 = vsel %vm1018, %v1862, 0
      %1875 = vmatprep.subr.mxu0 0.0
      %1876 = vmatpush1.msra.mxu0 0.0
      %1877 = vmatprep.subr.mxu0 0.0
      %1878 = vmatpush1.msra.mxu0 0.0
      %1879 = vmatprep.subr.mxu0 0.0
      %1880 = vmatpush1.msra.mxu0 0.0
      %1881 = vmatprep.subr.mxu0 0.0
      %1882 = vmatpush1.msra.mxu0 0.0
      %1883 = vmatprep.subr.mxu0 0.0
      %1884 = vmatpush1.msra.mxu0 0.0
      %1885 = vmatprep.subr.mxu0 0.0
      %1886 = vmatpush1.msra.mxu0 0.0
      %1887 = vmatprep.subr.mxu0 0.0
      %1888 = vmatpush1.msra.mxu0 0.0
      %1889 = vmatprep.subr.mxu0 0.0
      %1890 = vmatpush1.msra.mxu0 0.0
      %1891 = vmatprep.subr.mxu0 0.0
      %1892 = vmatpush1.msra.mxu0 0.0
      %1893 = vmatprep.subr.mxu0 0.0
      %1894 = vmatpush1.msra.mxu0 0.0
      %1895 = vmatprep.subr.mxu0 0.0
      %1896 = vmatpush1.msra.mxu0 0.0
      %1897 = vmatprep.subr.mxu0 0.0
      %1898 = vmatpush1.msra.mxu0 0.0
      %1899 = vmatprep.subr.mxu0 0.0
      %1900 = vmatpush1.msra.mxu0 0.0
      %1901 = vmatprep.subr.mxu0 0.0
      %1902 = vmatpush1.msra.mxu0 0.0
      %1903 = vmatprep.subr.mxu0 0.0
      %1904 = vmatpush1.msra.mxu0 %v1866
      %1905 = vmatprep.subr.mxu0 0.0
      %1906 = vmatpush1.msra.mxu0 %v1864
      %1907 = vmatprep.subr.mxu0 0.0
      %1908 = vmatpush2.msra.mxu0 0.0
      %1909 = vmatprep.subr.mxu0 0.0
      %1910 = vmatpush2.msra.mxu0 0.0
      %1911 = vmatprep.subr.mxu0 0.0
      %1912 = vmatpush2.msra.mxu0 0.0
      %1913 = vmatprep.subr.mxu0 0.0
      %1914 = vmatpush2.msra.mxu0 0.0
      %1915 = vmatprep.subr.mxu0 0.0
      %1916 = vmatpush2.msra.mxu0 0.0
      %1917 = vmatprep.subr.mxu0 0.0
      %1918 = vmatpush2.msra.mxu0 0.0
      %1919 = vmatprep.subr.mxu0 0.0
      %1920 = vmatpush2.msra.mxu0 0.0
      %1921 = vmatprep.subr.mxu0 0.0
      %1922 = vmatpush2.msra.mxu0 0.0
      %1923 = vmatprep.subr.mxu0 0.0
      %1924 = vmatpush2.msra.mxu0 0.0
      %1925 = vmatprep.subr.mxu0 0.0
      %1926 = vmatpush2.msra.mxu0 0.0
      %1927 = vmatprep.subr.mxu0 0.0
      %1928 = vmatpush2.msra.mxu0 0.0
      %1929 = vmatprep.subr.mxu0 0.0
      %1930 = vmatpush2.msra.mxu0 0.0
      %1931 = vmatprep.subr.mxu0 0.0
      %1932 = vmatpush2.msra.mxu0 0.0
      %1933 = vmatprep.subr.mxu0 0.0
      %1934 = vmatpush2.msra.mxu0 0.0
      %1935 = vmatprep.subr.mxu0 0.0
      %1936 = vmatpush2.msra.mxu0 0.0
      %1937 = vmatprep.subr.mxu0 0.0
      %1938 = vmatpush2.msra.mxu0 0.0
      %1939 = vmatprep.mubr.f32.mxu0 0.0
      %1940 = vmatmul.mubr.f32.gmra.mxu0 %v1870
      %v1941 = vpop.f32.mrf.mxu0
      %v1942 = vadd.f32 0.0, %v1941
      %v1943 = vpop.f32.mrf.mxu0
      %1944 = vmatprep.mubr.f32.mxu0 0.0
      %1945 = vmatmul.mubr.f32.gmra.mxu0 %v1873
      %v1946 = vpop.f32.mrf.mxu0
      %v1947 = vadd.f32 0.0, %v1946
      %v1948 = vpop.f32.mrf.mxu0
      %1949 = vdwg.mxu0
      %1950 = vset.pattern.permute.xlu0 2
      %1951 = vperm.xlu0 %1950, %v1672
      %v1952 = vpop.permute.xlu0 %1951
      %1954 = vset.pattern.permute.xlu0 2
      %1955 = vperm.xlu0 %1954, %v1677
      %v1956 = vpop.permute.xlu0 %1955
      %v1958 = vlaneseq
      %v1959 = vshrl.u32 %v1958, 7
      %v1960 = vsub.s32 2, %v1959
      %v1961 = vrot.slane %v1602, %v1960
      %v1962 = vadd.f32 %v1952, %v1961
      %v1963 = vadd.f32 %v1956, %v1961
      %vm1964 = vcmp.ge.f32.partialorder %v1962, 0.0
      %vm1965 = vcmp.ge.f32.partialorder %v1963, 0.0
      %v1966 = vmul.f32 %v1962, 0.2
      %v1967 = vmul.f32 %v1963, 0.2
      %v1968 = vsel %vm1964, %v1962, %v1966
      %v1969 = vsel %vm1965, %v1963, %v1967
      %v1970 = vsel %vm1014, %v1968, -1e+30
      %v1971 = vsel %vm1015, %v1969, -1e+30
      %v1972 = vsel %vm1018, %v1970, -inf
      %1973 = vmax.xlane.f32.xlu0 %v1972
      %v1974 = vpop.xlane.xlu0 %1973
      %v1975 = vsel %vm1018, %v1971, -inf
      %1976 = vmax.xlane.f32.xlu0 %v1975
      %v1977 = vpop.xlane.xlu0 %1976
      %v1978 = vsub.f32 %v1970, %v1974
      %v1979 = vsub.f32 %v1971, %v1977
      %v1980 = vmul.f32 %v1978, 1.442695
      %v1981 = vpow.pop %v1980
      %v1982 = vmul.f32 %v1979, 1.442695
      %v1983 = vpow.pop %v1982
      %v1984 = vmul.f32 %v1981, %v741
      %v1985 = vmul.f32 %v1983, %v742
      %v1986 = vsel %vm1018, %v1984, 0.0
      %1987 = vadd.xlane.f32.xlu0 %v1986
      %v1988 = vpop.xlane.xlu0 %1987
      %v1989 = vsel %vm1018, %v1985, 0.0
      %1990 = vadd.xlane.f32.xlu0 %v1989
      %v1991 = vpop.xlane.xlu0 %1990
      %vm1992 = vcmp.gt.f32.partialorder %v1988, 0.0
      %vm1993 = vcmp.gt.f32.partialorder %v1991, 0.0
      %v1994 = vrcp.pop %v1988
      %v1995 = vrcp.pop %v1991
      %v1996 = vsel %vm1992, %v1994, 0.0
      %v1997 = vsel %vm1993, %v1995, 0.0
      %v1998 = vmul.f32 %v1984, %v1996
      %v1999 = vmul.f32 %v1985, %v1997
      %2000 = vrot.lane.b32.xlu0 %v1518, 112
      %v2001 = vpop.permute.xlu0 %2000
      %2002 = vrot.lane.b32.xlu0 %v1523, 112
      %v2003 = vpop.permute.xlu0 %2002
      %v2007 = vsel %vm1018, %v1998, 0
      %v2010 = vsel %vm1018, %v1999, 0
      %2012 = vmatprep.subr.mxu0 0.0
      %2013 = vmatpush1.msra.mxu0 0.0
      %2014 = vmatprep.subr.mxu0 0.0
      %2015 = vmatpush1.msra.mxu0 0.0
      %2016 = vmatprep.subr.mxu0 0.0
      %2017 = vmatpush1.msra.mxu0 0.0
      %2018 = vmatprep.subr.mxu0 0.0
      %2019 = vmatpush1.msra.mxu0 0.0
      %2020 = vmatprep.subr.mxu0 0.0
      %2021 = vmatpush1.msra.mxu0 0.0
      %2022 = vmatprep.subr.mxu0 0.0
      %2023 = vmatpush1.msra.mxu0 0.0
      %2024 = vmatprep.subr.mxu0 0.0
      %2025 = vmatpush1.msra.mxu0 0.0
      %2026 = vmatprep.subr.mxu0 0.0
      %2027 = vmatpush1.msra.mxu0 0.0
      %2028 = vmatprep.subr.mxu0 0.0
      %2029 = vmatpush1.msra.mxu0 0.0
      %2030 = vmatprep.subr.mxu0 0.0
      %2031 = vmatpush1.msra.mxu0 0.0
      %2032 = vmatprep.subr.mxu0 0.0
      %2033 = vmatpush1.msra.mxu0 0.0
      %2034 = vmatprep.subr.mxu0 0.0
      %2035 = vmatpush1.msra.mxu0 0.0
      %2036 = vmatprep.subr.mxu0 0.0
      %2037 = vmatpush1.msra.mxu0 0.0
      %2038 = vmatprep.subr.mxu0 0.0
      %2039 = vmatpush1.msra.mxu0 0.0
      %2040 = vmatprep.subr.mxu0 0.0
      %2041 = vmatpush1.msra.mxu0 %v2003
      %2042 = vmatprep.subr.mxu0 0.0
      %2043 = vmatpush1.msra.mxu0 %v2001
      %2044 = vmatprep.subr.mxu0 0.0
      %2045 = vmatpush2.msra.mxu0 0.0
      %2046 = vmatprep.subr.mxu0 0.0
      %2047 = vmatpush2.msra.mxu0 0.0
      %2048 = vmatprep.subr.mxu0 0.0
      %2049 = vmatpush2.msra.mxu0 0.0
      %2050 = vmatprep.subr.mxu0 0.0
      %2051 = vmatpush2.msra.mxu0 0.0
      %2052 = vmatprep.subr.mxu0 0.0
      %2053 = vmatpush2.msra.mxu0 0.0
      %2054 = vmatprep.subr.mxu0 0.0
      %2055 = vmatpush2.msra.mxu0 0.0
      %2056 = vmatprep.subr.mxu0 0.0
      %2057 = vmatpush2.msra.mxu0 0.0
      %2058 = vmatprep.subr.mxu0 0.0
      %2059 = vmatpush2.msra.mxu0 0.0
      %2060 = vmatprep.subr.mxu0 0.0
      %2061 = vmatpush2.msra.mxu0 0.0
      %2062 = vmatprep.subr.mxu0 0.0
      %2063 = vmatpush2.msra.mxu0 0.0
      %2064 = vmatprep.subr.mxu0 0.0
      %2065 = vmatpush2.msra.mxu0 0.0
      %2066 = vmatprep.subr.mxu0 0.0
      %2067 = vmatpush2.msra.mxu0 0.0
      %2068 = vmatprep.subr.mxu0 0.0
      %2069 = vmatpush2.msra.mxu0 0.0
      %2070 = vmatprep.subr.mxu0 0.0
      %2071 = vmatpush2.msra.mxu0 0.0
      %2072 = vmatprep.subr.mxu0 0.0
      %2073 = vmatpush2.msra.mxu0 0.0
      %2074 = vmatprep.subr.mxu0 0.0
      %2075 = vmatpush2.msra.mxu0 0.0
      %2076 = vmatprep.mubr.f32.mxu0 0.0
      %2077 = vmatmul.mubr.f32.gmra.mxu0 %v2007
      %v2078 = vpop.f32.mrf.mxu0
      %v2079 = vadd.f32 0.0, %v2078
      %v2080 = vpop.f32.mrf.mxu0
      %2081 = vmatprep.mubr.f32.mxu0 0.0
      %2082 = vmatmul.mubr.f32.gmra.mxu0 %v2010
      %v2083 = vpop.f32.mrf.mxu0
      %v2084 = vadd.f32 0.0, %v2083
      %v2085 = vpop.f32.mrf.mxu0
      %2086 = vdwg.mxu0
      %2089 = vrot.lane.b32.xlu0 %v1942, 8
      %v2090 = vpop.permute.xlu0 %2089
      %2091 = vrot.lane.b32.xlu0 %v1947, 8
      %v2092 = vpop.permute.xlu0 %2091
      %2097 = vrot.lane.b32.xlu0 %v2079, 16
      %v2098 = vpop.permute.xlu0 %2097
      %2099 = vrot.lane.b32.xlu0 %v2084, 16
      %v2100 = vpop.permute.xlu0 %2099
      %v2103 = vsel %vm1418, %v1805, %v2090
      %v2104 = vsel %vm1418, %v1810, %v2092
      %v2105 = vsel %vm1018, %v2103, %v2098
      %v2106 = vsel %vm1018, %v2104, %v2100
      %v2108 = vlaneseq
      %v2109 = vshrl.u32 %v2108, 7
      %v2110 = vsub.s32 0, %v2109
      %v2111 = vrot.slane %v1444, %v2110
      %v2113 = vadd.f32 %v2105, %v2111
      %v2114 = vadd.f32 %v2106, %v2111
      %vm2115 = vcmp.ge.f32.partialorder %v2113, 0.0
      %vm2116 = vcmp.ge.f32.partialorder %v2114, 0.0
      %v2117 = vmul.f32 %v2113, 0.01
      %v2118 = vmul.f32 %v2114, 0.01
      %v2119 = vsel %vm2115, %v2113, %v2117
      %v2120 = vsel %vm2116, %v2114, %v2118
      %v2121 = vld [vmem:[%s719] sm:$0xff]
      %v2122 = vld [vmem:[%s719 + $0x8] sm:$0xff]
      %v2123 = vld [vmem:[%s719 + $0x10] sm:$0xff]
      %v2124 = vld [vmem:[%s722] sm:$0x1]
      %v2125 = vld [vmem:[%s726] sm:$0x3f]
      %v2126 = vld [vmem:[%s729] sm:$0x1]
      %v2128 = vsel %vm837, %v2119, 0
      %v2131 = vsel %vm837, %v2120, 0
      %2133 = vmatprep.subr.mxu0 0.0
      %2134 = vmatpush1.msra.mxu0 0.0
      %2135 = vmatprep.subr.mxu0 0.0
      %2136 = vmatpush1.msra.mxu0 0.0
      %2137 = vmatprep.subr.mxu0 0.0
      %2138 = vmatpush1.msra.mxu0 0.0
      %2139 = vmatprep.subr.mxu0 0.0
      %2140 = vmatpush1.msra.mxu0 0.0
      %2141 = vmatprep.subr.mxu0 0.0
      %2142 = vmatpush1.msra.mxu0 0.0
      %2143 = vmatprep.subr.mxu0 0.0
      %2144 = vmatpush1.msra.mxu0 0.0
      %2145 = vmatprep.subr.mxu0 0.0
      %2146 = vmatpush1.msra.mxu0 0.0
      %2147 = vmatprep.subr.mxu0 0.0
      %2148 = vmatpush1.msra.mxu0 0.0
      %2149 = vmatprep.subr.mxu0 0.0
      %2150 = vmatpush1.msra.mxu0 0.0
      %2151 = vmatprep.subr.mxu0 0.0
      %2152 = vmatpush1.msra.mxu0 0.0
      %2153 = vmatprep.subr.mxu0 0.0
      %2154 = vmatpush1.msra.mxu0 0.0
      %2155 = vmatprep.subr.mxu0 0.0
      %2156 = vmatpush1.msra.mxu0 0.0
      %2157 = vmatprep.subr.mxu0 0.0
      %2158 = vmatpush1.msra.mxu0 0.0
      %2159 = vmatprep.subr.mxu0 0.0
      %2160 = vmatpush1.msra.mxu0 %v2123
      %2161 = vmatprep.subr.mxu0 0.0
      %2162 = vmatpush1.msra.mxu0 %v2122
      %2163 = vmatprep.subr.mxu0 0.0
      %2164 = vmatpush1.msra.mxu0 %v2121
      %2165 = vmatprep.subr.mxu0 0.0
      %2166 = vmatpush2.msra.mxu0 0.0
      %2167 = vmatprep.subr.mxu0 0.0
      %2168 = vmatpush2.msra.mxu0 0.0
      %2169 = vmatprep.subr.mxu0 0.0
      %2170 = vmatpush2.msra.mxu0 0.0
      %2171 = vmatprep.subr.mxu0 0.0
      %2172 = vmatpush2.msra.mxu0 0.0
      %2173 = vmatprep.subr.mxu0 0.0
      %2174 = vmatpush2.msra.mxu0 0.0
      %2175 = vmatprep.subr.mxu0 0.0
      %2176 = vmatpush2.msra.mxu0 0.0
      %2177 = vmatprep.subr.mxu0 0.0
      %2178 = vmatpush2.msra.mxu0 0.0
      %2179 = vmatprep.subr.mxu0 0.0
      %2180 = vmatpush2.msra.mxu0 0.0
      %2181 = vmatprep.subr.mxu0 0.0
      %2182 = vmatpush2.msra.mxu0 0.0
      %2183 = vmatprep.subr.mxu0 0.0
      %2184 = vmatpush2.msra.mxu0 0.0
      %2185 = vmatprep.subr.mxu0 0.0
      %2186 = vmatpush2.msra.mxu0 0.0
      %2187 = vmatprep.subr.mxu0 0.0
      %2188 = vmatpush2.msra.mxu0 0.0
      %2189 = vmatprep.subr.mxu0 0.0
      %2190 = vmatpush2.msra.mxu0 0.0
      %2191 = vmatprep.subr.mxu0 0.0
      %2192 = vmatpush2.msra.mxu0 0.0
      %2193 = vmatprep.subr.mxu0 0.0
      %2194 = vmatpush2.msra.mxu0 0.0
      %2195 = vmatprep.subr.mxu0 0.0
      %2196 = vmatpush2.msra.mxu0 0.0
      %2197 = vmatprep.mubr.f32.mxu0 0.0
      %2198 = vmatmul.mubr.f32.gmra.mxu0 %v2128
      %v2199 = vpop.f32.mrf.mxu0
      %v2200 = vadd.f32 0.0, %v2199
      %v2201 = vpop.f32.mrf.mxu0
      %2202 = vmatprep.mubr.f32.mxu0 0.0
      %2203 = vmatmul.mubr.f32.gmra.mxu0 %v2131
      %v2204 = vpop.f32.mrf.mxu0
      %v2205 = vadd.f32 0.0, %v2204
      %v2206 = vpop.f32.mrf.mxu0
      %2207 = vdwg.mxu0
      %vm2208 = vcmask 48128
      %v2210 = vsel %vm2208, %v2124, 0
      %v2213 = vsel %vm2208, %v2200, 0
      %v2216 = vsel %vm2208, %v2205, 0
      %2218 = vmatprep.subr.mxu0 0.0
      %2219 = vmatpush1.xpose.msra.mxu0 0.0
      %2220 = vmatprep.subr.mxu0 0.0
      %2221 = vmatpush1.xpose.msra.mxu0 0.0
      %2222 = vmatprep.subr.mxu0 0.0
      %2223 = vmatpush1.xpose.msra.mxu0 0.0
      %2224 = vmatprep.subr.mxu0 0.0
      %2225 = vmatpush1.xpose.msra.mxu0 0.0
      %2226 = vmatprep.subr.mxu0 0.0
      %2227 = vmatpush1.xpose.msra.mxu0 0.0
      %2228 = vmatprep.subr.mxu0 0.0
      %2229 = vmatpush1.xpose.msra.mxu0 0.0
      %2230 = vmatprep.subr.mxu0 0.0
      %2231 = vmatpush1.xpose.msra.mxu0 0.0
      %2232 = vmatprep.subr.mxu0 0.0
      %2233 = vmatpush1.xpose.msra.mxu0 0.0
      %2234 = vmatprep.subr.mxu0 0.0
      %2235 = vmatpush1.xpose.msra.mxu0 0.0
      %2236 = vmatprep.subr.mxu0 0.0
      %2237 = vmatpush1.xpose.msra.mxu0 0.0
      %2238 = vmatprep.subr.mxu0 0.0
      %2239 = vmatpush1.xpose.msra.mxu0 0.0
      %2240 = vmatprep.subr.mxu0 0.0
      %2241 = vmatpush1.xpose.msra.mxu0 0.0
      %2242 = vmatprep.subr.mxu0 0.0
      %2243 = vmatpush1.xpose.msra.mxu0 0.0
      %2244 = vmatprep.subr.mxu0 0.0
      %2245 = vmatpush1.xpose.msra.mxu0 0.0
      %2246 = vmatprep.subr.mxu0 0.0
      %2247 = vmatpush1.xpose.msra.mxu0 %v2216
      %2248 = vmatprep.subr.mxu0 0.0
      %2249 = vmatpush1.xpose.msra.mxu0 %v2213
      %2250 = vmatprep.subr.mxu0 0.0
      %2251 = vmatpush2.xpose.msra.mxu0 0.0
      %2252 = vmatprep.subr.mxu0 0.0
      %2253 = vmatpush2.xpose.msra.mxu0 0.0
      %2254 = vmatprep.subr.mxu0 0.0
      %2255 = vmatpush2.xpose.msra.mxu0 0.0
      %2256 = vmatprep.subr.mxu0 0.0
      %2257 = vmatpush2.xpose.msra.mxu0 0.0
      %2258 = vmatprep.subr.mxu0 0.0
      %2259 = vmatpush2.xpose.msra.mxu0 0.0
      %2260 = vmatprep.subr.mxu0 0.0
      %2261 = vmatpush2.xpose.msra.mxu0 0.0
      %2262 = vmatprep.subr.mxu0 0.0
      %2263 = vmatpush2.xpose.msra.mxu0 0.0
      %2264 = vmatprep.subr.mxu0 0.0
      %2265 = vmatpush2.xpose.msra.mxu0 0.0
      %2266 = vmatprep.subr.mxu0 0.0
      %2267 = vmatpush2.xpose.msra.mxu0 0.0
      %2268 = vmatprep.subr.mxu0 0.0
      %2269 = vmatpush2.xpose.msra.mxu0 0.0
      %2270 = vmatprep.subr.mxu0 0.0
      %2271 = vmatpush2.xpose.msra.mxu0 0.0
      %2272 = vmatprep.subr.mxu0 0.0
      %2273 = vmatpush2.xpose.msra.mxu0 0.0
      %2274 = vmatprep.subr.mxu0 0.0
      %2275 = vmatpush2.xpose.msra.mxu0 0.0
      %2276 = vmatprep.subr.mxu0 0.0
      %2277 = vmatpush2.xpose.msra.mxu0 0.0
      %2278 = vmatprep.subr.mxu0 0.0
      %2279 = vmatpush2.xpose.msra.mxu0 0.0
      %2280 = vmatprep.subr.mxu0 0.0
      %2281 = vmatpush2.xpose.msra.mxu0 0.0
      %2282 = vmatprep.mubr.f32.mxu0 0.0
      %2283 = vmatmul.mubr.f32.gmra.mxu0 %v2210
      %v2284 = vpop.f32.mrf.mxu0
      %v2285 = vadd.f32 0.0, %v2284
      %v2286 = vpop.f32.mrf.mxu0
      %2287 = vdwg.mxu0
      %vm2288 = vcmask 1045504
      %v2290 = vsel %vm2288, %v2125, 0
      %2292 = vmatprep.subr.mxu0 0.0
      %2293 = vmatpush1.msra.mxu0 0.0
      %2294 = vmatprep.subr.mxu0 0.0
      %2295 = vmatpush1.msra.mxu0 0.0
      %2296 = vmatprep.subr.mxu0 0.0
      %2297 = vmatpush1.msra.mxu0 0.0
      %2298 = vmatprep.subr.mxu0 0.0
      %2299 = vmatpush1.msra.mxu0 0.0
      %2300 = vmatprep.subr.mxu0 0.0
      %2301 = vmatpush1.msra.mxu0 0.0
      %2302 = vmatprep.subr.mxu0 0.0
      %2303 = vmatpush1.msra.mxu0 0.0
      %2304 = vmatprep.subr.mxu0 0.0
      %2305 = vmatpush1.msra.mxu0 0.0
      %2306 = vmatprep.subr.mxu0 0.0
      %2307 = vmatpush1.msra.mxu0 0.0
      %2308 = vmatprep.subr.mxu0 0.0
      %2309 = vmatpush1.msra.mxu0 0.0
      %2310 = vmatprep.subr.mxu0 0.0
      %2311 = vmatpush1.msra.mxu0 0.0
      %2312 = vmatprep.subr.mxu0 0.0
      %2313 = vmatpush1.msra.mxu0 0.0
      %2314 = vmatprep.subr.mxu0 0.0
      %2315 = vmatpush1.msra.mxu0 0.0
      %2316 = vmatprep.subr.mxu0 0.0
      %2317 = vmatpush1.msra.mxu0 0.0
      %2318 = vmatprep.subr.mxu0 0.0
      %2319 = vmatpush1.msra.mxu0 0.0
      %2320 = vmatprep.subr.mxu0 0.0
      %2321 = vmatpush1.msra.mxu0 0.0
      %2322 = vmatprep.subr.mxu0 0.0
      %2323 = vmatpush1.msra.mxu0 %v2290
      %2324 = vmatprep.subr.mxu0 0.0
      %2325 = vmatpush2.msra.mxu0 0.0
      %2326 = vmatprep.subr.mxu0 0.0
      %2327 = vmatpush2.msra.mxu0 0.0
      %2328 = vmatprep.subr.mxu0 0.0
      %2329 = vmatpush2.msra.mxu0 0.0
      %2330 = vmatprep.subr.mxu0 0.0
      %2331 = vmatpush2.msra.mxu0 0.0
      %2332 = vmatprep.subr.mxu0 0.0
      %2333 = vmatpush2.msra.mxu0 0.0
      %2334 = vmatprep.subr.mxu0 0.0
      %2335 = vmatpush2.msra.mxu0 0.0
      %2336 = vmatprep.subr.mxu0 0.0
      %2337 = vmatpush2.msra.mxu0 0.0
      %2338 = vmatprep.subr.mxu0 0.0
      %2339 = vmatpush2.msra.mxu0 0.0
      %2340 = vmatprep.subr.mxu0 0.0
      %2341 = vmatpush2.msra.mxu0 0.0
      %2342 = vmatprep.subr.mxu0 0.0
      %2343 = vmatpush2.msra.mxu0 0.0
      %2344 = vmatprep.subr.mxu0 0.0
      %2345 = vmatpush2.msra.mxu0 0.0
      %2346 = vmatprep.subr.mxu0 0.0
      %2347 = vmatpush2.msra.mxu0 0.0
      %2348 = vmatprep.subr.mxu0 0.0
      %2349 = vmatpush2.msra.mxu0 0.0
      %2350 = vmatprep.subr.mxu0 0.0
      %2351 = vmatpush2.msra.mxu0 0.0
      %2352 = vmatprep.subr.mxu0 0.0
      %2353 = vmatpush2.msra.mxu0 0.0
      %2354 = vmatprep.subr.mxu0 0.0
      %2355 = vmatpush2.msra.mxu0 0.0
      %2356 = vmatprep.mubr.f32.mxu0 0.0
      %2357 = vmatmul.mubr.f32.gmra.mxu0 %v2213
      %v2358 = vpop.f32.mrf.mxu0
      %v2359 = vadd.f32 0.0, %v2358
      %v2360 = vpop.f32.mrf.mxu0
      %2361 = vmatprep.mubr.f32.mxu0 0.0
      %2362 = vmatmul.mubr.f32.gmra.mxu0 %v2216
      %v2363 = vpop.f32.mrf.mxu0
      %v2364 = vadd.f32 0.0, %v2363
      %v2365 = vpop.f32.mrf.mxu0
      %2366 = vdwg.mxu0
      %2368 = vset.pattern.permute.xlu0 0
      %2369 = vperm.xlu0 %2368, %v2359
      %v2370 = vpop.permute.xlu0 %2369
      %2373 = vset.pattern.permute.xlu0 0
      %2374 = vperm.xlu0 %2373, %v2364
      %v2375 = vpop.permute.xlu0 %2374
      %v2377 = vlaneseq
      %v2378 = vshrl.u32 %v2377, 7
      %v2379 = vsub.s32 0, %v2378
      %v2380 = vrot.slane %v2285, %v2379
      %v2381 = vadd.f32 %v2370, %v2380
      %v2382 = vadd.f32 %v2375, %v2380
      %vm2383 = vcmp.ge.f32.partialorder %v2381, 0.0
      %vm2384 = vcmp.ge.f32.partialorder %v2382, 0.0
      %v2385 = vmul.f32 %v2381, 0.2
      %v2386 = vmul.f32 %v2382, 0.2
      %v2387 = vsel %vm2383, %v2381, %v2385
      %v2388 = vsel %vm2384, %v2382, %v2386
      %v2389 = vsel %vm1014, %v2387, -1e+30
      %v2390 = vsel %vm1015, %v2388, -1e+30
      %v2391 = vsel %vm1018, %v2389, -inf
      %2392 = vmax.xlane.f32.xlu0 %v2391
      %v2393 = vpop.xlane.xlu0 %2392
      %v2394 = vsel %vm1018, %v2390, -inf
      %2395 = vmax.xlane.f32.xlu0 %v2394
      %v2396 = vpop.xlane.xlu0 %2395
      %v2397 = vsub.f32 %v2389, %v2393
      %v2398 = vsub.f32 %v2390, %v2396
      %v2399 = vmul.f32 %v2397, 1.442695
      %v2400 = vpow.pop %v2399
      %v2401 = vmul.f32 %v2398, 1.442695
      %v2402 = vpow.pop %v2401
      %v2403 = vmul.f32 %v2400, %v741
      %v2404 = vmul.f32 %v2402, %v742
      %v2405 = vsel %vm1018, %v2403, 0.0
      %2406 = vadd.xlane.f32.xlu0 %v2405
      %v2407 = vpop.xlane.xlu0 %2406
      %v2408 = vsel %vm1018, %v2404, 0.0
      %2409 = vadd.xlane.f32.xlu0 %v2408
      %v2410 = vpop.xlane.xlu0 %2409
      %vm2411 = vcmp.gt.f32.partialorder %v2407, 0.0
      %vm2412 = vcmp.gt.f32.partialorder %v2410, 0.0
      %v2413 = vrcp.pop %v2407
      %v2414 = vrcp.pop %v2410
      %v2415 = vsel %vm2411, %v2413, 0.0
      %v2416 = vsel %vm2412, %v2414, 0.0
      %v2417 = vmul.f32 %v2403, %v2415
      %v2418 = vmul.f32 %v2404, %v2416
      %v2420 = vlaneseq
      %v2421 = vshrl.u32 %v2420, 7
      %v2422 = vsub.s32 0, %v2421
      %v2423 = vrot.slane %v2126, %v2422
      %v2426 = vsel %vm1018, %v2417, 0
      %v2429 = vsel %vm1018, %v2418, 0
      %2431 = vmatprep.subr.mxu0 0.0
      %2432 = vmatpush1.msra.mxu0 0.0
      %2433 = vmatprep.subr.mxu0 0.0
      %2434 = vmatpush1.msra.mxu0 0.0
      %2435 = vmatprep.subr.mxu0 0.0
      %2436 = vmatpush1.msra.mxu0 0.0
      %2437 = vmatprep.subr.mxu0 0.0
      %2438 = vmatpush1.msra.mxu0 0.0
      %2439 = vmatprep.subr.mxu0 0.0
      %2440 = vmatpush1.msra.mxu0 0.0
      %2441 = vmatprep.subr.mxu0 0.0
      %2442 = vmatpush1.msra.mxu0 0.0
      %2443 = vmatprep.subr.mxu0 0.0
      %2444 = vmatpush1.msra.mxu0 0.0
      %2445 = vmatprep.subr.mxu0 0.0
      %2446 = vmatpush1.msra.mxu0 0.0
      %2447 = vmatprep.subr.mxu0 0.0
      %2448 = vmatpush1.msra.mxu0 0.0
      %2449 = vmatprep.subr.mxu0 0.0
      %2450 = vmatpush1.msra.mxu0 0.0
      %2451 = vmatprep.subr.mxu0 0.0
      %2452 = vmatpush1.msra.mxu0 0.0
      %2453 = vmatprep.subr.mxu0 0.0
      %2454 = vmatpush1.msra.mxu0 0.0
      %2455 = vmatprep.subr.mxu0 0.0
      %2456 = vmatpush1.msra.mxu0 0.0
      %2457 = vmatprep.subr.mxu0 0.0
      %2458 = vmatpush1.msra.mxu0 0.0
      %2459 = vmatprep.subr.mxu0 0.0
      %2460 = vmatpush1.msra.mxu0 %v2205
      %2461 = vmatprep.subr.mxu0 0.0
      %2462 = vmatpush1.msra.mxu0 %v2200
      %2463 = vmatprep.subr.mxu0 0.0
      %2464 = vmatpush2.msra.mxu0 0.0
      %2465 = vmatprep.subr.mxu0 0.0
      %2466 = vmatpush2.msra.mxu0 0.0
      %2467 = vmatprep.subr.mxu0 0.0
      %2468 = vmatpush2.msra.mxu0 0.0
      %2469 = vmatprep.subr.mxu0 0.0
      %2470 = vmatpush2.msra.mxu0 0.0
      %2471 = vmatprep.subr.mxu0 0.0
      %2472 = vmatpush2.msra.mxu0 0.0
      %2473 = vmatprep.subr.mxu0 0.0
      %2474 = vmatpush2.msra.mxu0 0.0
      %2475 = vmatprep.subr.mxu0 0.0
      %2476 = vmatpush2.msra.mxu0 0.0
      %2477 = vmatprep.subr.mxu0 0.0
      %2478 = vmatpush2.msra.mxu0 0.0
      %2479 = vmatprep.subr.mxu0 0.0
      %2480 = vmatpush2.msra.mxu0 0.0
      %2481 = vmatprep.subr.mxu0 0.0
      %2482 = vmatpush2.msra.mxu0 0.0
      %2483 = vmatprep.subr.mxu0 0.0
      %2484 = vmatpush2.msra.mxu0 0.0
      %2485 = vmatprep.subr.mxu0 0.0
      %2486 = vmatpush2.msra.mxu0 0.0
      %2487 = vmatprep.subr.mxu0 0.0
      %2488 = vmatpush2.msra.mxu0 0.0
      %2489 = vmatprep.subr.mxu0 0.0
      %2490 = vmatpush2.msra.mxu0 0.0
      %2491 = vmatprep.subr.mxu0 0.0
      %2492 = vmatpush2.msra.mxu0 0.0
      %2493 = vmatprep.subr.mxu0 0.0
      %2494 = vmatpush2.msra.mxu0 0.0
      %2495 = vmatprep.mubr.f32.mxu0 0.0
      %2496 = vmatmul.mubr.f32.gmra.mxu0 %v2426
      %v2497 = vpop.f32.mrf.mxu0
      %v2498 = vadd.f32 %v2423, %v2497
      %v2499 = vpop.f32.mrf.mxu0
      %2500 = vmatprep.mubr.f32.mxu0 0.0
      %2501 = vmatmul.mubr.f32.gmra.mxu0 %v2429
      %v2502 = vpop.f32.mrf.mxu0
      %v2503 = vadd.f32 %v2423, %v2502
      %v2504 = vpop.f32.mrf.mxu0
      %2505 = vdwg.mxu0
      %v2506 = vld [vmem:[%s733] sm:$0x3f]
      %v2508 = vsel %vm2208, %v2498, 0
      %v2511 = vsel %vm2208, %v2503, 0
      %v2514 = vsel %vm2288, %v2506, 0
      %2516 = vmatprep.subr.mxu0 0.0
      %2517 = vmatpush1.msra.mxu0 0.0
      %2518 = vmatprep.subr.mxu0 0.0
      %2519 = vmatpush1.msra.mxu0 0.0
      %2520 = vmatprep.subr.mxu0 0.0
      %2521 = vmatpush1.msra.mxu0 0.0
      %2522 = vmatprep.subr.mxu0 0.0
      %2523 = vmatpush1.msra.mxu0 0.0
      %2524 = vmatprep.subr.mxu0 0.0
      %2525 = vmatpush1.msra.mxu0 0.0
      %2526 = vmatprep.subr.mxu0 0.0
      %2527 = vmatpush1.msra.mxu0 0.0
      %2528 = vmatprep.subr.mxu0 0.0
      %2529 = vmatpush1.msra.mxu0 0.0
      %2530 = vmatprep.subr.mxu0 0.0
      %2531 = vmatpush1.msra.mxu0 0.0
      %2532 = vmatprep.subr.mxu0 0.0
      %2533 = vmatpush1.msra.mxu0 0.0
      %2534 = vmatprep.subr.mxu0 0.0
      %2535 = vmatpush1.msra.mxu0 0.0
      %2536 = vmatprep.subr.mxu0 0.0
      %2537 = vmatpush1.msra.mxu0 0.0
      %2538 = vmatprep.subr.mxu0 0.0
      %2539 = vmatpush1.msra.mxu0 0.0
      %2540 = vmatprep.subr.mxu0 0.0
      %2541 = vmatpush1.msra.mxu0 0.0
      %2542 = vmatprep.subr.mxu0 0.0
      %2543 = vmatpush1.msra.mxu0 0.0
      %2544 = vmatprep.subr.mxu0 0.0
      %2545 = vmatpush1.msra.mxu0 0.0
      %2546 = vmatprep.subr.mxu0 0.0
      %2547 = vmatpush1.msra.mxu0 %v2514
      %2548 = vmatprep.subr.mxu0 0.0
      %2549 = vmatpush2.msra.mxu0 0.0
      %2550 = vmatprep.subr.mxu0 0.0
      %2551 = vmatpush2.msra.mxu0 0.0
      %2552 = vmatprep.subr.mxu0 0.0
      %2553 = vmatpush2.msra.mxu0 0.0
      %2554 = vmatprep.subr.mxu0 0.0
      %2555 = vmatpush2.msra.mxu0 0.0
      %2556 = vmatprep.subr.mxu0 0.0
      %2557 = vmatpush2.msra.mxu0 0.0
      %2558 = vmatprep.subr.mxu0 0.0
      %2559 = vmatpush2.msra.mxu0 0.0
      %2560 = vmatprep.subr.mxu0 0.0
      %2561 = vmatpush2.msra.mxu0 0.0
      %2562 = vmatprep.subr.mxu0 0.0
      %2563 = vmatpush2.msra.mxu0 0.0
      %2564 = vmatprep.subr.mxu0 0.0
      %2565 = vmatpush2.msra.mxu0 0.0
      %2566 = vmatprep.subr.mxu0 0.0
      %2567 = vmatpush2.msra.mxu0 0.0
      %2568 = vmatprep.subr.mxu0 0.0
      %2569 = vmatpush2.msra.mxu0 0.0
      %2570 = vmatprep.subr.mxu0 0.0
      %2571 = vmatpush2.msra.mxu0 0.0
      %2572 = vmatprep.subr.mxu0 0.0
      %2573 = vmatpush2.msra.mxu0 0.0
      %2574 = vmatprep.subr.mxu0 0.0
      %2575 = vmatpush2.msra.mxu0 0.0
      %2576 = vmatprep.subr.mxu0 0.0
      %2577 = vmatpush2.msra.mxu0 0.0
      %2578 = vmatprep.subr.mxu0 0.0
      %2579 = vmatpush2.msra.mxu0 0.0
      %2580 = vmatprep.mubr.f32.mxu0 0.0
      %2581 = vmatmul.mubr.f32.gmra.mxu0 %v2508
      %v2582 = vpop.f32.mrf.mxu0
      %v2583 = vadd.f32 0.0, %v2582
      %v2584 = vpop.f32.mrf.mxu0
      %2585 = vmatprep.mubr.f32.mxu0 0.0
      %2586 = vmatmul.mubr.f32.gmra.mxu0 %v2511
      %v2587 = vpop.f32.mrf.mxu0
      %v2588 = vadd.f32 0.0, %v2587
      %v2589 = vpop.f32.mrf.mxu0
      %2590 = vdwg.mxu0
      %2591 = vst.msk [vmem:[%s738] sm:$0xff] %vm2208, %v2583
      %2592 = vst.msk [vmem:[%s738 + $0x8] sm:$0xff] %vm2208, %v2588
      %p2593 = scmp.lt.s32.totalorder %s26, 1
      %s2594 = scalar_select %p2593, %s26, 1
      %s2595 = smul.addr %s2594, 2
      %s2596 = smul.addr %s2595, 8
      %s2597 = scalar_lea.vmem %s15, %s2596
      // Predicated region
      $region81: #{tpu_custom_call.1} parent=79 // pred_check
        %p2598 = pneg %p434
      $region82: #{tpu_custom_call.1} parent=79 // pred_check_branch
        %2600 = sbr.rel (%p2598) target = $region84
      $region83: #{tpu_custom_call.1} parent=79 // pred_region
        _
      $region84: #{tpu_custom_call.1} parent=79 // pred_fallthru
        _
    $region80: #{tpu_custom_call.1} parent=5 // pred_fallthru
      _
    %p2601 = scmp.le.s32.totalorder 2, %s21
    // Predicated region
    $region85: #{tpu_custom_call.1} parent=5 // pred_check
      %p2602 = pneg %p2601
    $region86: #{tpu_custom_call.1} parent=5 // pred_check_branch
      %2604 = sbr.rel (%p2602) target = $region88
    $region87: #{tpu_custom_call.1} parent=5 // pred_region
      %s2605 = ssub.s32 %s21, 2
      // Predicated region
      $region89: #{tpu_custom_call.1} parent=87 // pred_check
        %p2606 = pneg %p440
      $region90: #{tpu_custom_call.1} parent=87 // pred_check_branch
        %2608 = sbr.rel (%p2606) target = $region92
      $region91: #{tpu_custom_call.1} parent=87 // pred_region
        %p2609 = scmp.lt.s32.totalorder %s27, 1
        %s2610 = scalar_select %p2609, %s27, 1
        %s2611 = smul.addr %s2610, 2
        %s2612 = smul.addr %s2611, 8
        %s2613 = scalar_lea.vmem %s15, %s2612
      $region92: #{tpu_custom_call.1} parent=87 // pred_fallthru
        _
    $region88: #{tpu_custom_call.1} parent=5 // pred_fallthru
      _
  $region6: #{tpu_custom_call.1} parent=0 // loop_footer
    %s25 = sadd.s32 1, %s21
  $region7: #{tpu_custom_call.1} parent=0 // loop_footer_branch
    %20 = sbr.rel target = $region3
  $region8: #{tpu_custom_call.1} parent=0 // loop_exit
    _

</llo_original>
